<compile_context>
chip_gen: v6e
topology: v6e:2x2x1
jax: 0.10.0
libtpu: 0.0.40
codegen_flags: <defaults>
</compile_context>

<pallas_src>
import functools
import math

import jax
import jax.numpy as jnp
from jax.experimental import pallas as pl
from jax.experimental.pallas import tpu as pltpu

LEAKY_SLOPE = 0.01  # TODO(synk): confirm against stKeep's nn.LeakyReLU() default.


def _round_up(x, m):
    return (x + m - 1) // m * m


def _choose_tiles(n):
    """Returns (TI, TJ, NC, Npad): spot row-tile, similarity j-tile,
    receptor row-chunk.  All divide Npad (powers-of-two multiples of 128)."""
    if n <= 128:
        return 128, 128, 128, 128
    if n <= 1024:
        ti, tj, nc = 128, 256, 256
    elif n <= 8192:
        ti, tj, nc = 256, 1024, 1024
    else:
        ti, tj, nc = 256, 2048, 1024
    base = max(ti, tj, nc)
    return ti, tj, nc, _round_up(n, base)


def _pick_vmem_limit():
    # ~96 MiB on 128 MiB chips (v5e/v6e), ~48 MiB on 64 MiB/TC chips (v7x).
    try:
        cap = int(pltpu.get_tpu_info().vmem_capacity_bytes)
        return max(32 << 20, min(96 << 20, (cap * 3) // 4))
    except Exception:
        return 48 << 20


# ----------------------------------------------------------------------------
# Kernel 1: chunked LRP attention gather + softmax + enco_latent + projection
#           MLP + rsqrt row-normalisation (1/sqrt(tau) folded in).
# Grid: (i = spot row tile ["parallel"], c = receptor row chunk ["arbitrary"]).
# ----------------------------------------------------------------------------
def lrp_encode_project_kernel(nei_ref, lig_ref, rec_ref, att_ref,
                              wenc_ref, w1_ref, b1_ref, w2_ref, b2_ref,
                              zn_ref, racc_ref, *, n_neigh, inv_sqrt_tau):
    # nei_ref : [TI, K]     int32 global neighbour indices
    # lig_ref : [TI, Ppad]  ligand expression tile (f32)
    # rec_ref : [NC, Ppad]  receptor row chunk (bf16, streamed over c)
    # att_ref : [2, Ppad]   per-pair attention (row0 ligand, row1 receptor)
    # racc_ref: [K*TI,Ppad] f32 scratch — accumulated gathered receptor rows
    # zn_ref  : [TI, Hpad]  output (bf16): z / |z| / sqrt(tau)
    c = pl.program_id(1)
    n_chunks = pl.num_programs(1)
    TI = lig_ref.shape[0]
    NC = rec_ref.shape[0]

    # ---- stacked one-hot gather for this receptor chunk (bf16 MXU) --------
    col_ids = jax.lax.broadcasted_iota(jnp.int32, (TI, NC), 1) + c * NC
    onehots = []
    for k in range(n_neigh):
        idx_k = nei_ref[:, k:k + 1]                               # [TI, 1]
        onehots.append((col_ids == idx_k).astype(jnp.bfloat16))   # exact 0/1
    onehot = jnp.concatenate(onehots, axis=0)                     # [K*TI, NC]
    partial = jnp.dot(onehot, rec_ref[...],
                      preferred_element_type=jnp.float32)         # [K*TI, Ppad]

    @pl.when(c == 0)
    def _():
        racc_ref[...] = partial

    @pl.when(c > 0)
    def _():
        racc_ref[...] += partial

    # ---- last chunk: attention softmax + MLP + row normalisation ----------
    @pl.when(c == n_chunks - 1)
    def _():
        lig = lig_ref[...]
        att_l = att_ref[0:1, :]
        att_r = att_ref[1:2, :]
        lig_scaled = att_l * lig                    # hoisted loop-invariant

        def leaky(x):
            return jnp.where(x > 0, x, LEAKY_SLOPE * x)

        # Online (flash-style) softmax over the K neighbours.
        r0 = racc_ref[0:TI, :]
        logit = leaky(lig_scaled + att_r * r0)
        m = logit
        denom = jnp.ones_like(logit)                # exp(logit0 - m) = 1
        acc = r0
        for k in range(1, n_neigh):
            r_k = racc_ref[k * TI:(k + 1) * TI, :]
            logit = leaky(lig_scaled + att_r * r_k)
            m_new = jnp.maximum(m, logit)
            alpha = jnp.exp(m - m_new)
            p_k = jnp.exp(logit - m_new)
            denom = alpha * denom + p_k
            acc = alpha * acc + p_k * r_k
            m = m_new
        emb = lig * acc * pl.reciprocal(denom, approx=True)       # [TI, Ppad]

        # enco_latent (bias-free) + projection MLP (Linear - ELU - Linear).
        latent = jnp.dot(emb, wenc_ref[...], preferred_element_type=jnp.float32)
        h1 = jnp.dot(latent, w1_ref[...],
                     preferred_element_type=jnp.float32) + b1_ref[...]
        h1 = jnp.where(h1 > 0, h1, jnp.exp(jnp.minimum(h1, 0.0)) - 1.0)  # ELU
        z = jnp.dot(h1, w2_ref[...],
                    preferred_element_type=jnp.float32) + b2_ref[...]

        # zn_i . zn_j == cos(z_i, z_j) / tau
        sq = jnp.sum(z * z, axis=1, keepdims=True)
        zn = z * (jax.lax.rsqrt(sq + 1e-12) * inv_sqrt_tau)
        zn_ref[...] = zn.astype(zn_ref.dtype)


# ----------------------------------------------------------------------------
# Kernel 2: streaming contrastive similarity (num / den accumulated over j).
# Grid: (i = query row tile ["parallel"], j = key tile ["arbitrary"]).
# ----------------------------------------------------------------------------
def contrast_stream_kernel(zni_ref, znj_ref, pos_ref, p_ref,
                           num_acc, den_acc, *, n_valid, n_padded, tile_j):
    # zni_ref : [TI, Hpad] bf16 normalised query rows
    # znj_ref : [TJ, Hpad] bf16 normalised key rows (streamed over j)
    # pos_ref : [TI, TJ]   int8 positive-pair mask tile
    # p_ref   : [TI, 1]    output: sum_j sim_norm * pos (written at last j)
    j = pl.program_id(1)
    nj = pl.num_programs(1)

    @pl.when(j == 0)
    def _():
        num_acc[...] = jnp.zeros_like(num_acc)
        den_acc[...] = jnp.zeros_like(den_acc)

    s = jax.lax.dot_general(zni_ref[...], znj_ref[...],
                            (((1,), (1,)), ((), ())),
                            preferred_element_type=jnp.float32)   # [TI, TJ]
    sim = jnp.exp(s)                                              # exp(cos/tau)
    posf = pos_ref[...].astype(jnp.float32)

    def accumulate(sim_t):
        den_acc[...] += jnp.sum(sim_t, axis=1, keepdims=True)
        num_acc[...] += jnp.sum(sim_t * posf, axis=1, keepdims=True)

    if n_padded == n_valid:
        accumulate(sim)
    else:
        # Only the last j tile can contain padded (invalid) columns.
        @pl.when(j < nj - 1)
        def _():
            accumulate(sim)

        @pl.when(j == nj - 1)
        def _():
            col = jax.lax.broadcasted_iota(jnp.int32, sim.shape, 1) + j * tile_j
            accumulate(sim * (col < n_valid).astype(jnp.float32))

    @pl.when(j == nj - 1)
    def _():
        # Exact divide: this tiny [TI, 1] ratio feeds log() in the loss.
        p_ref[...] = num_acc[...] / (den_acc[...] + 1e-8)


# ----------------------------------------------------------------------------
# Wrapper
# ----------------------------------------------------------------------------
def cci_model_forward(nei_adj, ligand_exp, receptor_exp, pos, params, tau):
    N, K = nei_adj.shape
    P = ligand_exp.shape[1]
    H = params["w_enc"].shape[1]

    # Lane- / MXU-friendly padding (exact: all padded entries stay zero).
    Ppad = _round_up(max(P, 128), 128)
    Hpad = _round_up(max(H, 128), 128)
    TI, TJ, NC, Npad = _choose_tiles(N)

    f32 = jnp.float32
    bf16 = jnp.bfloat16

    def pad2(x, r, c, dtype=f32):
        x = x.astype(f32)
        return jnp.pad(x, ((0, r - x.shape[0]), (0, c - x.shape[1]))).astype(dtype)

    lig = pad2(ligand_exp, Npad, Ppad)                  # f32 (VPU only)
    rec = pad2(receptor_exp, Npad, Ppad, bf16)          # bf16 MXU operand
    nei = jnp.pad(nei_adj.astype(jnp.int32), ((0, Npad - N), (0, 0)))
    att = pad2(params["att"], 2, Ppad)
    w_enc = pad2(params["w_enc"], Ppad, Hpad)
    w1 = pad2(params["w1"], Hpad, Hpad)
    b1 = pad2(params["b1"], 1, Hpad)
    w2 = pad2(params["w2"], Hpad, Hpad)
    b2 = pad2(params["b2"], 1, Hpad)
    pos_i8 = pad2(pos, Npad, Npad, jnp.int8)            # 0/1 mask, int8 stream

    const2 = lambda i, c: (0, 0)
    vmem_limit = _pick_vmem_limit()

    # ---- Kernel 1: zn [Npad, Hpad] (bf16) ----------------------------------
    zn = pl.pallas_call(
        functools.partial(lrp_encode_project_kernel, n_neigh=K,
                          inv_sqrt_tau=float(1.0 / math.sqrt(tau))),
        out_shape=jax.ShapeDtypeStruct((Npad, Hpad), bf16),
        grid_spec=pltpu.PrefetchScalarGridSpec(
            num_scalar_prefetch=0,
            grid=(Npad // TI, Npad // NC),
            in_specs=[
                pl.BlockSpec((TI, K), lambda i, c: (i, 0)),      # nei_adj tile
                pl.BlockSpec((TI, Ppad), lambda i, c: (i, 0)),   # ligand tile
                pl.BlockSpec((NC, Ppad), lambda i, c: (c, 0)),   # receptor chunk
                pl.BlockSpec((2, Ppad), const2),                 # attention vec
                pl.BlockSpec((Ppad, Hpad), const2),              # w_enc
                pl.BlockSpec((Hpad, Hpad), const2),              # w1
                pl.BlockSpec((1, Hpad), const2),                 # b1
                pl.BlockSpec((Hpad, Hpad), const2),              # w2
                pl.BlockSpec((1, Hpad), const2),                 # b2
            ],
            out_specs=pl.BlockSpec((TI, Hpad), lambda i, c: (i, 0)),
            scratch_shapes=[pltpu.VMEM((K * TI, Ppad), f32)],    # gather accum
        ),
        compiler_params=pltpu.CompilerParams(
            dimension_semantics=("parallel", "arbitrary"),
            vmem_limit_bytes=vmem_limit),
        cost_estimate=pl.CostEstimate(
            flops=int(2 * K * Npad * Npad * Ppad
                      + 2 * Npad * (Ppad * Hpad + 2 * Hpad * Hpad)),
            transcendentals=int(K * Npad * Ppad + Npad * Hpad + Npad),
            bytes_accessed=int(2 * Npad * Ppad * (Npad // TI)    # rec re-reads (bf16)
                               + 4 * Npad * Ppad + 4 * Npad * K
                               + 2 * Npad * Hpad
                               + 4 * (Ppad * Hpad + 2 * Hpad * Hpad + 2 * Hpad))),
    )(nei, lig, rec, att, w_enc, w1, b1, w2, b2)

    # ---- Kernel 2: per-row positive mass p [Npad, 1] ------------------------
    p = pl.pallas_call(
        functools.partial(contrast_stream_kernel,
                          n_valid=N, n_padded=Npad, tile_j=TJ),
        out_shape=jax.ShapeDtypeStruct((Npad, 1), f32),
        grid_spec=pltpu.PrefetchScalarGridSpec(
            num_scalar_prefetch=0,
            grid=(Npad // TI, Npad // TJ),
            in_specs=[
                pl.BlockSpec((TI, Hpad), lambda i, j: (i, 0)),   # zn_i (bf16)
                pl.BlockSpec((TJ, Hpad), lambda i, j: (j, 0)),   # zn_j (streamed)
                pl.BlockSpec((TI, TJ), lambda i, j: (i, j)),     # pos tile (int8)
            ],
            out_specs=pl.BlockSpec((TI, 1), lambda i, j: (i, 0)),
            scratch_shapes=[pltpu.VMEM((TI, 1), f32),            # num accumulator
                            pltpu.VMEM((TI, 1), f32)],           # den accumulator
        ),
        compiler_params=pltpu.CompilerParams(
            dimension_semantics=("parallel", "arbitrary"),
            vmem_limit_bytes=vmem_limit),
        cost_estimate=pl.CostEstimate(
            flops=int(2 * Npad * Npad * Hpad + 4 * Npad * Npad),
            transcendentals=int(Npad * Npad),
            bytes_accessed=int(Npad * Npad                       # int8 pos
                               + 2 * Npad * Hpad * (1 + Npad // TI)  # bf16 zn
                               + 4 * Npad)),
    )(zn, zn, pos_i8)

    # Final InfoNCE reduction over the valid spots (O(N) glue outside Pallas).
    per_row = p[:N, 0]
    return -jnp.mean(jnp.log(per_row + 1e-12))


# ----------------------------------------------------------------------------
# Deterministic parameter / input construction
# ----------------------------------------------------------------------------
def make_params(key, cci_pairs, layers):
    P, H = layers
    k_att, k_enc, k_w1, k_b1, k_w2, k_b2 = jax.random.split(key, 6)
    return {
        "att":   jax.random.normal(k_att, (2, cci_pairs), jnp.float32) * 0.8,
        "w_enc": jax.random.normal(k_enc, (P, H), jnp.float32) * (1.0 / math.sqrt(P)),
        "w1":    jax.random.normal(k_w1, (H, H), jnp.float32) * (1.0 / math.sqrt(H)),
        "b1":    jax.random.normal(k_b1, (1, H), jnp.float32) * 0.01,
        "w2":    jax.random.normal(k_w2, (H, H), jnp.float32) * (1.0 / math.sqrt(H)),
        "b2":    jax.random.normal(k_b2, (1, H), jnp.float32) * 0.01,
    }


if __name__ == "__main__":
    N = 16          # spots
    K = 4           # neighbours per spot
    cci_pairs = 8   # LR pairs (layers[0])
    hidden = 32     # latent dim (layers[1] == hidden_dim)
    layers = [cci_pairs, hidden]
    tau = 0.5

    key = jax.random.PRNGKey(0)
    k_p, k_nei, k_lig, k_rec = jax.random.split(key, 4)

    params = make_params(k_p, cci_pairs, layers)

    nei_adj = jax.random.randint(k_nei, (N, K), 0, N, dtype=jnp.int32)
    ligand_exp = jax.random.uniform(k_lig, (N, cci_pairs), jnp.float32)
    receptor_exp = jax.random.uniform(k_rec, (N, cci_pairs), jnp.float32)

    # positive-pair matrix: self + immediate index neighbours
    ii = jnp.arange(N)
    pos = (jnp.abs(ii[:, None] - ii[None, :]) <= 1).astype(jnp.float32)

    fwd = jax.jit(lambda a, b, c, d: cci_model_forward(a, b, c, d, params, tau))
    lori = fwd(nei_adj, ligand_exp, receptor_exp, pos)
    jax.block_until_ready(lori)
    assert jnp.isfinite(lori)
    print("KERNEL_OK")
</pallas_src>

<mosaic_0001>
module attributes {stable_mosaic.version = 11 : i64} {
  func.func @contrast_stream_kernel(%arg0: i32, %arg1: i32, %arg2: memref<128x128xbf16, #tpu.memory_space<vmem>>, %arg3: memref<128x128xbf16, #tpu.memory_space<vmem>>, %arg4: memref<128x128xi8, #tpu.memory_space<vmem>>, %arg5: memref<128x1xf32, #tpu.memory_space<vmem>>, %arg6: memref<128x1xf32, #tpu.memory_space<vmem>>, %arg7: memref<128x1xf32, #tpu.memory_space<vmem>>) attributes {dimension_semantics = [#tpu.dimension_semantics<parallel>, #tpu.dimension_semantics<arbitrary>], iteration_bounds = array<i64: 1, 1>, scalar_prefetch = 0 : i64, scratch_operands = 2 : i64, tpu.core_type = #tpu.core_type<tc>, window_params = [{transform_indices = @transform_0, window_bounds = array<i64: 128, 128>}, {transform_indices = @transform_1, window_bounds = array<i64: 128, 128>}, {transform_indices = @transform_2, window_bounds = array<i64: 128, 128>}, {transform_indices = @transform_3, window_bounds = array<i64: 128, 1>}]} {
    %c0_i32 = arith.constant 0 : i32
    %0 = arith.cmpi eq, %arg1, %c0_i32 : i32
    %1 = arith.extui %0 : i1 to i32
    %c0_i32_0 = arith.constant 0 : i32
    %2 = arith.cmpi ne, %1, %c0_i32_0 : i32
    scf.if %2 {
      %cst_12 = arith.constant 0.000000e+00 : f32
      %18 = vector.broadcast %cst_12 : f32 to vector<128x1xf32>
      %c0_13 = arith.constant 0 : index
      %c0_14 = arith.constant 0 : index
      %19 = vector.load %arg6[%c0_13, %c0_14] : memref<128x1xf32, #tpu.memory_space<vmem>>, vector<128x1xf32>
      tpu.vector_store %arg6[%c0_13, %c0_14], %18 {strides = array<i32>} : memref<128x1xf32, #tpu.memory_space<vmem>>, vector<128x1xf32>,
      %cst_15 = arith.constant 0.000000e+00 : f32
      %20 = vector.broadcast %cst_15 : f32 to vector<128x1xf32>
      %c0_16 = arith.constant 0 : index
      %c0_17 = arith.constant 0 : index
      %21 = vector.load %arg7[%c0_16, %c0_17] : memref<128x1xf32, #tpu.memory_space<vmem>>, vector<128x1xf32>
      tpu.vector_store %arg7[%c0_16, %c0_17], %20 {strides = array<i32>} : memref<128x1xf32, #tpu.memory_space<vmem>>, vector<128x1xf32>,
    } else {
    }
    %c0 = arith.constant 0 : index
    %c0_1 = arith.constant 0 : index
    %3 = vector.load %arg2[%c0, %c0_1] : memref<128x128xbf16, #tpu.memory_space<vmem>>, vector<128x128xbf16>
    %c0_2 = arith.constant 0 : index
    %c0_3 = arith.constant 0 : index
    %4 = vector.load %arg3[%c0_2, %c0_3] : memref<128x128xbf16, #tpu.memory_space<vmem>>, vector<128x128xbf16>
    %cst = arith.constant dense<0.000000e+00> : vector<128x128xf32>
    %5 = tpu.matmul %3, %4, %cst {dimension_numbers = #tpu.dot_dimension_numbers<[1], [1], [0], [0], [0, 0, 1, 0], [], []>} : vector<128x128xbf16>, vector<128x128xbf16>, vector<128x128xf32> -> vector<128x128xf32>
    %6 = math.exp %5 : vector<128x128xf32>
    %c0_4 = arith.constant 0 : index
    %c0_5 = arith.constant 0 : index
    %7 = vector.load %arg4[%c0_4, %c0_5] : memref<128x128xi8, #tpu.memory_space<vmem>>, vector<128x128xi8>
    %8 = arith.sitofp %7 : vector<128x128xi8> to vector<128x128xf32>
    %c0_i32_6 = arith.constant 0 : i32
    %9 = arith.cmpi slt, %arg1, %c0_i32_6 : i32
    %10 = arith.extui %9 : i1 to i32
    %c0_i32_7 = arith.constant 0 : i32
    %11 = arith.cmpi ne, %10, %c0_i32_7 : i32
    scf.if %11 {
      %c0_12 = arith.constant 0 : index
      %c0_13 = arith.constant 0 : index
      %18 = vector.load %arg7[%c0_12, %c0_13] : memref<128x1xf32, #tpu.memory_space<vmem>>, vector<128x1xf32>
      %cst_14 = arith.constant dense<0.000000e+00> : vector<128xf32>
      %19 = vector.multi_reduction <add>, %6, %cst_14 [1] : vector<128x128xf32> to vector<128xf32>
      %20 = vector.shape_cast %19 : vector<128xf32> to vector<128x1xf32>
      %21 = arith.addf %18, %20 : vector<128x1xf32>
      %c0_15 = arith.constant 0 : index
      %c0_16 = arith.constant 0 : index
      %22 = vector.load %arg7[%c0_15, %c0_16] : memref<128x1xf32, #tpu.memory_space<vmem>>, vector<128x1xf32>
      tpu.vector_store %arg7[%c0_15, %c0_16], %21 {strides = array<i32>} : memref<128x1xf32, #tpu.memory_space<vmem>>, vector<128x1xf32>,
      %c0_17 = arith.constant 0 : index
      %c0_18 = arith.constant 0 : index
      %23 = vector.load %arg6[%c0_17, %c0_18] : memref<128x1xf32, #tpu.memory_space<vmem>>, vector<128x1xf32>
      %24 = arith.mulf %6, %8 : vector<128x128xf32>
      %cst_19 = arith.constant dense<0.000000e+00> : vector<128xf32>
      %25 = vector.multi_reduction <add>, %24, %cst_19 [1] : vector<128x128xf32> to vector<128xf32>
      %26 = vector.shape_cast %25 : vector<128xf32> to vector<128x1xf32>
      %27 = arith.addf %23, %26 : vector<128x1xf32>
      %c0_20 = arith.constant 0 : index
      %c0_21 = arith.constant 0 : index
      %28 = vector.load %arg6[%c0_20, %c0_21] : memref<128x1xf32, #tpu.memory_space<vmem>>, vector<128x1xf32>
      tpu.vector_store %arg6[%c0_20, %c0_21], %27 {strides = array<i32>} : memref<128x1xf32, #tpu.memory_space<vmem>>, vector<128x1xf32>,
    } else {
    }
    %c0_i32_8 = arith.constant 0 : i32
    %12 = arith.cmpi eq, %arg1, %c0_i32_8 : i32
    %13 = arith.extui %12 : i1 to i32
    %c0_i32_9 = arith.constant 0 : i32
    %14 = arith.cmpi ne, %13, %c0_i32_9 : i32
    scf.if %14 {
      %18 = tpu.iota {dimensions = array<i32: 1>} : vector<128x128xi32>
      %c128_i32 = arith.constant 128 : i32
      %19 = arith.muli %arg1, %c128_i32 : i32
      %20 = vector.broadcast %19 : i32 to vector<128x128xi32>
      %21 = arith.addi %18, %20 : vector<128x128xi32>
      %c16_i32 = arith.constant 16 : i32
      %22 = vector.broadcast %c16_i32 : i32 to vector<128x128xi32>
      %23 = arith.cmpi slt, %21, %22 : vector<128x128xi32>
      %24 = arith.extui %23 : vector<128x128xi1> to vector<128x128xi32>
      %25 = arith.sitofp %24 : vector<128x128xi32> to vector<128x128xf32>
      %26 = arith.mulf %6, %25 : vector<128x128xf32>
      %c0_12 = arith.constant 0 : index
      %c0_13 = arith.constant 0 : index
      %27 = vector.load %arg7[%c0_12, %c0_13] : memref<128x1xf32, #tpu.memory_space<vmem>>, vector<128x1xf32>
      %cst_14 = arith.constant dense<0.000000e+00> : vector<128xf32>
      %28 = vector.multi_reduction <add>, %26, %cst_14 [1] : vector<128x128xf32> to vector<128xf32>
      %29 = vector.shape_cast %28 : vector<128xf32> to vector<128x1xf32>
      %30 = arith.addf %27, %29 : vector<128x1xf32>
      %c0_15 = arith.constant 0 : index
      %c0_16 = arith.constant 0 : index
      %31 = vector.load %arg7[%c0_15, %c0_16] : memref<128x1xf32, #tpu.memory_space<vmem>>, vector<128x1xf32>
      tpu.vector_store %arg7[%c0_15, %c0_16], %30 {strides = array<i32>} : memref<128x1xf32, #tpu.memory_space<vmem>>, vector<128x1xf32>,
      %c0_17 = arith.constant 0 : index
      %c0_18 = arith.constant 0 : index
      %32 = vector.load %arg6[%c0_17, %c0_18] : memref<128x1xf32, #tpu.memory_space<vmem>>, vector<128x1xf32>
      %33 = arith.mulf %26, %8 : vector<128x128xf32>
      %cst_19 = arith.constant dense<0.000000e+00> : vector<128xf32>
      %34 = vector.multi_reduction <add>, %33, %cst_19 [1] : vector<128x128xf32> to vector<128xf32>
      %35 = vector.shape_cast %34 : vector<128xf32> to vector<128x1xf32>
      %36 = arith.addf %32, %35 : vector<128x1xf32>
      %c0_20 = arith.constant 0 : index
      %c0_21 = arith.constant 0 : index
      %37 = vector.load %arg6[%c0_20, %c0_21] : memref<128x1xf32, #tpu.memory_space<vmem>>, vector<128x1xf32>
      tpu.vector_store %arg6[%c0_20, %c0_21], %36 {strides = array<i32>} : memref<128x1xf32, #tpu.memory_space<vmem>>, vector<128x1xf32>,
    } else {
    }
    %c0_i32_10 = arith.constant 0 : i32
    %15 = arith.cmpi eq, %arg1, %c0_i32_10 : i32
    %16 = arith.extui %15 : i1 to i32
    %c0_i32_11 = arith.constant 0 : i32
    %17 = arith.cmpi ne, %16, %c0_i32_11 : i32
    scf.if %17 {
      %c0_12 = arith.constant 0 : index
      %c0_13 = arith.constant 0 : index
      %18 = vector.load %arg6[%c0_12, %c0_13] : memref<128x1xf32, #tpu.memory_space<vmem>>, vector<128x1xf32>
      %c0_14 = arith.constant 0 : index
      %c0_15 = arith.constant 0 : index
      %19 = vector.load %arg7[%c0_14, %c0_15] : memref<128x1xf32, #tpu.memory_space<vmem>>, vector<128x1xf32>
      %cst_16 = arith.constant 9.99999993E-9 : f32
      %20 = vector.broadcast %cst_16 : f32 to vector<128x1xf32>
      %21 = arith.addf %19, %20 : vector<128x1xf32>
      %22 = arith.divf %18, %21 : vector<128x1xf32>
      %c0_17 = arith.constant 0 : index
      %c0_18 = arith.constant 0 : index
      %23 = vector.load %arg5[%c0_17, %c0_18] : memref<128x1xf32, #tpu.memory_space<vmem>>, vector<128x1xf32>
      tpu.vector_store %arg5[%c0_17, %c0_18], %22 {strides = array<i32>} : memref<128x1xf32, #tpu.memory_space<vmem>>, vector<128x1xf32>,
    } else {
    }
    return
  }
  func.func @transform_0(%arg0: i32, %arg1: i32) -> (i32, i32) {
    %c0_i32 = arith.constant 0 : i32
    %c0_i32_0 = arith.constant 0 : i32
    return %arg0, %c0_i32 : i32, i32
  }
  func.func @transform_1(%arg0: i32, %arg1: i32) -> (i32, i32) {
    %c0_i32 = arith.constant 0 : i32
    %c0_i32_0 = arith.constant 0 : i32
    return %arg1, %c0_i32 : i32, i32
  }
  func.func @transform_2(%arg0: i32, %arg1: i32) -> (i32, i32) {
    %c0_i32 = arith.constant 0 : i32
    return %arg0, %arg1 : i32, i32
  }
  func.func @transform_3(%arg0: i32, %arg1: i32) -> (i32, i32) {
    %c0_i32 = arith.constant 0 : i32
    %c0_i32_0 = arith.constant 0 : i32
    return %arg0, %c0_i32 : i32, i32
  }
}

module attributes {stable_mosaic.version = 11 : i64} {
  func.func @lrp_encode_project_kernel(%arg0: i32, %arg1: i32, %arg2: memref<128x4xi32, #tpu.memory_space<vmem>>, %arg3: memref<128x128xf32, #tpu.memory_space<vmem>>, %arg4: memref<128x128xbf16, #tpu.memory_space<vmem>>, %arg5: memref<2x128xf32, #tpu.memory_space<vmem>>, %arg6: memref<128x128xf32, #tpu.memory_space<vmem>>, %arg7: memref<128x128xf32, #tpu.memory_space<vmem>>, %arg8: memref<1x128xf32, #tpu.memory_space<vmem>>, %arg9: memref<128x128xf32, #tpu.memory_space<vmem>>, %arg10: memref<1x128xf32, #tpu.memory_space<vmem>>, %arg11: memref<128x128xbf16, #tpu.memory_space<vmem>>, %arg12: memref<512x128xf32, #tpu.memory_space<vmem>>) attributes {dimension_semantics = [#tpu.dimension_semantics<parallel>, #tpu.dimension_semantics<arbitrary>], iteration_bounds = array<i64: 1, 1>, scalar_prefetch = 0 : i64, scratch_operands = 1 : i64, tpu.core_type = #tpu.core_type<tc>, window_params = [{transform_indices = @transform_0, window_bounds = array<i64: 128, 4>}, {transform_indices = @transform_1, window_bounds = array<i64: 128, 128>}, {transform_indices = @transform_2, window_bounds = array<i64: 128, 128>}, {pipeline_mode = #tpu.pipeline_mode<synchronous>, transform_indices = @transform_3, window_bounds = array<i64: 2, 128>}, {pipeline_mode = #tpu.pipeline_mode<synchronous>, transform_indices = @transform_4, window_bounds = array<i64: 128, 128>}, {pipeline_mode = #tpu.pipeline_mode<synchronous>, transform_indices = @transform_5, window_bounds = array<i64: 128, 128>}, {pipeline_mode = #tpu.pipeline_mode<synchronous>, transform_indices = @transform_6, window_bounds = array<i64: 1, 128>}, {pipeline_mode = #tpu.pipeline_mode<synchronous>, transform_indices = @transform_7, window_bounds = array<i64: 128, 128>}, {pipeline_mode = #tpu.pipeline_mode<synchronous>, transform_indices = @transform_8, window_bounds = array<i64: 1, 128>}, {transform_indices = @transform_9, window_bounds = array<i64: 128, 128>}]} {
    %0 = tpu.iota {dimensions = array<i32: 1>} : vector<128x128xi32>
    %c128_i32 = arith.constant 128 : i32
    %1 = arith.muli %arg1, %c128_i32 : i32
    %2 = vector.broadcast %1 : i32 to vector<128x128xi32>
    %3 = arith.addi %0, %2 : vector<128x128xi32>
    %c0 = arith.constant 0 : index
    %c0_0 = arith.constant 0 : index
    %4 = vector.load %arg2[%c0, %c0_0] : memref<128x4xi32, #tpu.memory_space<vmem>>, vector<128x1xi32>
    %5 = vector.broadcast %4 : vector<128x1xi32> to vector<128x128xi32>
    %6 = arith.cmpi eq, %3, %5 : vector<128x128xi32>
    %7 = arith.extui %6 : vector<128x128xi1> to vector<128x128xi32>
    %8 = arith.sitofp %7 : vector<128x128xi32> to vector<128x128xf32>
    %9 = arith.truncf %8 : vector<128x128xf32> to vector<128x128xbf16>
    %c0_1 = arith.constant 0 : index
    %c1 = arith.constant 1 : index
    %10 = vector.load %arg2[%c0_1, %c1] : memref<128x4xi32, #tpu.memory_space<vmem>>, vector<128x1xi32>
    %11 = vector.broadcast %10 : vector<128x1xi32> to vector<128x128xi32>
    %12 = arith.cmpi eq, %3, %11 : vector<128x128xi32>
    %13 = arith.extui %12 : vector<128x128xi1> to vector<128x128xi32>
    %14 = arith.sitofp %13 : vector<128x128xi32> to vector<128x128xf32>
    %15 = arith.truncf %14 : vector<128x128xf32> to vector<128x128xbf16>
    %c0_2 = arith.constant 0 : index
    %c2 = arith.constant 2 : index
    %16 = vector.load %arg2[%c0_2, %c2] : memref<128x4xi32, #tpu.memory_space<vmem>>, vector<128x1xi32>
    %17 = vector.broadcast %16 : vector<128x1xi32> to vector<128x128xi32>
    %18 = arith.cmpi eq, %3, %17 : vector<128x128xi32>
    %19 = arith.extui %18 : vector<128x128xi1> to vector<128x128xi32>
    %20 = arith.sitofp %19 : vector<128x128xi32> to vector<128x128xf32>
    %21 = arith.truncf %20 : vector<128x128xf32> to vector<128x128xbf16>
    %c0_3 = arith.constant 0 : index
    %c3 = arith.constant 3 : index
    %22 = vector.load %arg2[%c0_3, %c3] : memref<128x4xi32, #tpu.memory_space<vmem>>, vector<128x1xi32>
    %23 = vector.broadcast %22 : vector<128x1xi32> to vector<128x128xi32>
    %24 = arith.cmpi eq, %3, %23 : vector<128x128xi32>
    %25 = arith.extui %24 : vector<128x128xi1> to vector<128x128xi32>
    %26 = arith.sitofp %25 : vector<128x128xi32> to vector<128x128xf32>
    %27 = arith.truncf %26 : vector<128x128xf32> to vector<128x128xbf16>
    %28 = tpu.concatenate %9, %15, %21, %27 in 0 : vector<128x128xbf16>, vector<128x128xbf16>, vector<128x128xbf16>, vector<128x128xbf16> -> vector<512x128xbf16>
    %c0_4 = arith.constant 0 : index
    %c0_5 = arith.constant 0 : index
    %29 = vector.load %arg4[%c0_4, %c0_5] : memref<128x128xbf16, #tpu.memory_space<vmem>>, vector<128x128xbf16>
    %cst = arith.constant dense<0.000000e+00> : vector<512x128xf32>
    %30 = tpu.matmul %28, %29, %cst {dimension_numbers = #tpu.dot_dimension_numbers<[1], [0], [0], [1], [0, 0, 1, 1], [], []>} : vector<512x128xbf16>, vector<128x128xbf16>, vector<512x128xf32> -> vector<512x128xf32>
    %c0_i32 = arith.constant 0 : i32
    %31 = arith.cmpi eq, %arg1, %c0_i32 : i32
    %32 = arith.extui %31 : i1 to i32
    %c0_i32_6 = arith.constant 0 : i32
    %33 = arith.cmpi ne, %32, %c0_i32_6 : i32
    scf.if %33 {
      %c0_11 = arith.constant 0 : index
      %c0_12 = arith.constant 0 : index
      %40 = vector.load %arg12[%c0_11, %c0_12] : memref<512x128xf32, #tpu.memory_space<vmem>>, vector<512x128xf32>
      tpu.vector_store %arg12[%c0_11, %c0_12], %30 {strides = array<i32>} : memref<512x128xf32, #tpu.memory_space<vmem>>, vector<512x128xf32>,
    } else {
    }
    %c0_i32_7 = arith.constant 0 : i32
    %34 = arith.cmpi sgt, %arg1, %c0_i32_7 : i32
    %35 = arith.extui %34 : i1 to i32
    %c0_i32_8 = arith.constant 0 : i32
    %36 = arith.cmpi ne, %35, %c0_i32_8 : i32
    scf.if %36 {
      %c0_11 = arith.constant 0 : index
      %c0_12 = arith.constant 0 : index
      %40 = vector.load %arg12[%c0_11, %c0_12] : memref<512x128xf32, #tpu.memory_space<vmem>>, vector<512x128xf32>
      %41 = arith.addf %40, %30 : vector<512x128xf32>
      %c0_13 = arith.constant 0 : index
      %c0_14 = arith.constant 0 : index
      %42 = vector.load %arg12[%c0_13, %c0_14] : memref<512x128xf32, #tpu.memory_space<vmem>>, vector<512x128xf32>
      tpu.vector_store %arg12[%c0_13, %c0_14], %41 {strides = array<i32>} : memref<512x128xf32, #tpu.memory_space<vmem>>, vector<512x128xf32>,
    } else {
    }
    %c0_i32_9 = arith.constant 0 : i32
    %37 = arith.cmpi eq, %arg1, %c0_i32_9 : i32
    %38 = arith.extui %37 : i1 to i32
    %c0_i32_10 = arith.constant 0 : i32
    %39 = arith.cmpi ne, %38, %c0_i32_10 : i32
    scf.if %39 {
      %c0_11 = arith.constant 0 : index
      %c0_12 = arith.constant 0 : index
      %40 = vector.load %arg3[%c0_11, %c0_12] : memref<128x128xf32, #tpu.memory_space<vmem>>, vector<128x128xf32>
      %c0_13 = arith.constant 0 : index
      %c0_14 = arith.constant 0 : index
      %41 = vector.load %arg5[%c0_13, %c0_14] : memref<2x128xf32, #tpu.memory_space<vmem>>, vector<1x128xf32>
      %c1_15 = arith.constant 1 : index
      %c0_16 = arith.constant 0 : index
      %42 = vector.load %arg5[%c1_15, %c0_16] : memref<2x128xf32, #tpu.memory_space<vmem>>, vector<1x128xf32>
      %43 = vector.broadcast %41 : vector<1x128xf32> to vector<128x128xf32>
      %44 = arith.mulf %43, %40 : vector<128x128xf32>
      %c0_17 = arith.constant 0 : index
      %c0_18 = arith.constant 0 : index
      %45 = vector.load %arg12[%c0_17, %c0_18] : memref<512x128xf32, #tpu.memory_space<vmem>>, vector<128x128xf32>
      %46 = vector.broadcast %42 : vector<1x128xf32> to vector<128x128xf32>
      %47 = arith.mulf %46, %45 : vector<128x128xf32>
      %48 = arith.addf %44, %47 : vector<128x128xf32>
      %cst_19 = arith.constant 0.000000e+00 : f32
      %49 = vector.broadcast %cst_19 : f32 to vector<128x128xf32>
      %50 = arith.cmpf ogt, %48, %49 : vector<128x128xf32>
      %cst_20 = arith.constant 0.00999999977 : f32
      %51 = vector.broadcast %cst_20 : f32 to vector<128x128xf32>
      %52 = arith.mulf %51, %48 : vector<128x128xf32>
      %53 = arith.select %50, %48, %52 : vector<128x128xi1>, vector<128x128xf32>
      %cst_21 = arith.constant 1.000000e+00 : f32
      %54 = vector.broadcast %cst_21 : f32 to vector<128x128xf32>
      %c128 = arith.constant 128 : index
      %c0_22 = arith.constant 0 : index
      %55 = vector.load %arg12[%c128, %c0_22] : memref<512x128xf32, #tpu.memory_space<vmem>>, vector<128x128xf32>
      %56 = vector.broadcast %42 : vector<1x128xf32> to vector<128x128xf32>
      %57 = arith.mulf %56, %55 : vector<128x128xf32>
      %58 = arith.addf %44, %57 : vector<128x128xf32>
      %cst_23 = arith.constant 0.000000e+00 : f32
      %59 = vector.broadcast %cst_23 : f32 to vector<128x128xf32>
      %60 = arith.cmpf ogt, %58, %59 : vector<128x128xf32>
      %cst_24 = arith.constant 0.00999999977 : f32
      %61 = vector.broadcast %cst_24 : f32 to vector<128x128xf32>
      %62 = arith.mulf %61, %58 : vector<128x128xf32>
      %63 = arith.select %60, %58, %62 : vector<128x128xi1>, vector<128x128xf32>
      %64 = arith.maximumf %53, %63 : vector<128x128xf32>
      %65 = arith.subf %53, %64 : vector<128x128xf32>
      %66 = math.exp %65 : vector<128x128xf32>
      %67 = arith.subf %63, %64 : vector<128x128xf32>
      %68 = math.exp %67 : vector<128x128xf32>
      %69 = arith.mulf %66, %54 : vector<128x128xf32>
      %70 = arith.addf %69, %68 : vector<128x128xf32>
      %71 = arith.mulf %66, %45 : vector<128x128xf32>
      %72 = arith.mulf %68, %55 : vector<128x128xf32>
      %73 = arith.addf %71, %72 : vector<128x128xf32>
      %c256 = arith.constant 256 : index
      %c0_25 = arith.constant 0 : index
      %74 = vector.load %arg12[%c256, %c0_25] : memref<512x128xf32, #tpu.memory_space<vmem>>, vector<128x128xf32>
      %75 = vector.broadcast %42 : vector<1x128xf32> to vector<128x128xf32>
      %76 = arith.mulf %75, %74 : vector<128x128xf32>
      %77 = arith.addf %44, %76 : vector<128x128xf32>
      %cst_26 = arith.constant 0.000000e+00 : f32
      %78 = vector.broadcast %cst_26 : f32 to vector<128x128xf32>
      %79 = arith.cmpf ogt, %77, %78 : vector<128x128xf32>
      %cst_27 = arith.constant 0.00999999977 : f32
      %80 = vector.broadcast %cst_27 : f32 to vector<128x128xf32>
      %81 = arith.mulf %80, %77 : vector<128x128xf32>
      %82 = arith.select %79, %77, %81 : vector<128x128xi1>, vector<128x128xf32>
      %83 = arith.maximumf %64, %82 : vector<128x128xf32>
      %84 = arith.subf %64, %83 : vector<128x128xf32>
      %85 = math.exp %84 : vector<128x128xf32>
      %86 = arith.subf %82, %83 : vector<128x128xf32>
      %87 = math.exp %86 : vector<128x128xf32>
      %88 = arith.mulf %85, %70 : vector<128x128xf32>
      %89 = arith.addf %88, %87 : vector<128x128xf32>
      %90 = arith.mulf %85, %73 : vector<128x128xf32>
      %91 = arith.mulf %87, %74 : vector<128x128xf32>
      %92 = arith.addf %90, %91 : vector<128x128xf32>
      %c384 = arith.constant 384 : index
      %c0_28 = arith.constant 0 : index
      %93 = vector.load %arg12[%c384, %c0_28] : memref<512x128xf32, #tpu.memory_space<vmem>>, vector<128x128xf32>
      %94 = vector.broadcast %42 : vector<1x128xf32> to vector<128x128xf32>
      %95 = arith.mulf %94, %93 : vector<128x128xf32>
      %96 = arith.addf %44, %95 : vector<128x128xf32>
      %cst_29 = arith.constant 0.000000e+00 : f32
      %97 = vector.broadcast %cst_29 : f32 to vector<128x128xf32>
      %98 = arith.cmpf ogt, %96, %97 : vector<128x128xf32>
      %cst_30 = arith.constant 0.00999999977 : f32
      %99 = vector.broadcast %cst_30 : f32 to vector<128x128xf32>
      %100 = arith.mulf %99, %96 : vector<128x128xf32>
      %101 = arith.select %98, %96, %100 : vector<128x128xi1>, vector<128x128xf32>
      %102 = arith.maximumf %83, %101 : vector<128x128xf32>
      %103 = arith.subf %83, %102 : vector<128x128xf32>
      %104 = math.exp %103 : vector<128x128xf32>
      %105 = arith.subf %101, %102 : vector<128x128xf32>
      %106 = math.exp %105 : vector<128x128xf32>
      %107 = arith.mulf %104, %89 : vector<128x128xf32>
      %108 = arith.addf %107, %106 : vector<128x128xf32>
      %109 = arith.mulf %104, %92 : vector<128x128xf32>
      %110 = arith.mulf %106, %93 : vector<128x128xf32>
      %111 = arith.addf %109, %110 : vector<128x128xf32>
      %112 = arith.mulf %40, %111 : vector<128x128xf32>
      %113 = tpu.reciprocal %108 {approx = true} : vector<128x128xf32> -> vector<128x128xf32>
      %114 = arith.mulf %112, %113 : vector<128x128xf32>
      %c0_31 = arith.constant 0 : index
      %c0_32 = arith.constant 0 : index
      %115 = vector.load %arg6[%c0_31, %c0_32] : memref<128x128xf32, #tpu.memory_space<vmem>>, vector<128x128xf32>
      %cst_33 = arith.constant dense<0.000000e+00> : vector<128x128xf32>
      %116 = tpu.matmul %114, %115, %cst_33 {dimension_numbers = #tpu.dot_dimension_numbers<[1], [0], [0], [1], [0, 0, 1, 1], [], []>} : vector<128x128xf32>, vector<128x128xf32>, vector<128x128xf32> -> vector<128x128xf32>
      %c0_34 = arith.constant 0 : index
      %c0_35 = arith.constant 0 : index
      %117 = vector.load %arg7[%c0_34, %c0_35] : memref<128x128xf32, #tpu.memory_space<vmem>>, vector<128x128xf32>
      %cst_36 = arith.constant dense<0.000000e+00> : vector<128x128xf32>
      %118 = tpu.matmul %116, %117, %cst_36 {dimension_numbers = #tpu.dot_dimension_numbers<[1], [0], [0], [1], [0, 0, 1, 1], [], []>} : vector<128x128xf32>, vector<128x128xf32>, vector<128x128xf32> -> vector<128x128xf32>
      %c0_37 = arith.constant 0 : index
      %c0_38 = arith.constant 0 : index
      %119 = vector.load %arg8[%c0_37, %c0_38] : memref<1x128xf32, #tpu.memory_space<vmem>>, vector<1x128xf32>
      %120 = vector.broadcast %119 : vector<1x128xf32> to vector<128x128xf32>
      %121 = arith.addf %118, %120 : vector<128x128xf32>
      %cst_39 = arith.constant 0.000000e+00 : f32
      %122 = vector.broadcast %cst_39 : f32 to vector<128x128xf32>
      %123 = arith.cmpf ogt, %121, %122 : vector<128x128xf32>
      %cst_40 = arith.constant 0.000000e+00 : f32
      %124 = vector.broadcast %cst_40 : f32 to vector<128x128xf32>
      %125 = arith.minimumf %121, %124 : vector<128x128xf32>
      %126 = math.exp %125 : vector<128x128xf32>
      %cst_41 = arith.constant 1.000000e+00 : f32
      %127 = vector.broadcast %cst_41 : f32 to vector<128x128xf32>
      %128 = arith.subf %126, %127 : vector<128x128xf32>
      %129 = arith.select %123, %121, %128 : vector<128x128xi1>, vector<128x128xf32>
      %c0_42 = arith.constant 0 : index
      %c0_43 = arith.constant 0 : index
      %130 = vector.load %arg9[%c0_42, %c0_43] : memref<128x128xf32, #tpu.memory_space<vmem>>, vector<128x128xf32>
      %cst_44 = arith.constant dense<0.000000e+00> : vector<128x128xf32>
      %131 = tpu.matmul %129, %130, %cst_44 {dimension_numbers = #tpu.dot_dimension_numbers<[1], [0], [0], [1], [0, 0, 1, 1], [], []>} : vector<128x128xf32>, vector<128x128xf32>, vector<128x128xf32> -> vector<128x128xf32>
      %c0_45 = arith.constant 0 : index
      %c0_46 = arith.constant 0 : index
      %132 = vector.load %arg10[%c0_45, %c0_46] : memref<1x128xf32, #tpu.memory_space<vmem>>, vector<1x128xf32>
      %133 = vector.broadcast %132 : vector<1x128xf32> to vector<128x128xf32>
      %134 = arith.addf %131, %133 : vector<128x128xf32>
      %135 = arith.mulf %134, %134 : vector<128x128xf32>
      %cst_47 = arith.constant dense<0.000000e+00> : vector<128xf32>
      %136 = vector.multi_reduction <add>, %135, %cst_47 [1] : vector<128x128xf32> to vector<128xf32>
      %137 = vector.shape_cast %136 : vector<128xf32> to vector<128x1xf32>
      %cst_48 = arith.constant 9.99999996E-13 : f32
      %138 = vector.broadcast %cst_48 : f32 to vector<128x1xf32>
      %139 = arith.addf %137, %138 : vector<128x1xf32>
      %140 = math.rsqrt %139 : vector<128x1xf32>
      %cst_49 = arith.constant 1.41421354 : f32
      %141 = vector.broadcast %cst_49 : f32 to vector<128x1xf32>
      %142 = arith.mulf %140, %141 : vector<128x1xf32>
      %143 = vector.broadcast %142 : vector<128x1xf32> to vector<128x128xf32>
      %144 = arith.mulf %134, %143 : vector<128x128xf32>
      %145 = arith.truncf %144 : vector<128x128xf32> to vector<128x128xbf16>
      %c0_50 = arith.constant 0 : index
      %c0_51 = arith.constant 0 : index
      %146 = vector.load %arg11[%c0_50, %c0_51] : memref<128x128xbf16, #tpu.memory_space<vmem>>, vector<128x128xbf16>
      tpu.vector_store %arg11[%c0_50, %c0_51], %145 {strides = array<i32>} : memref<128x128xbf16, #tpu.memory_space<vmem>>, vector<128x128xbf16>,
    } else {
    }
    return
  }
  func.func @transform_0(%arg0: i32, %arg1: i32) -> (i32, i32) {
    %c0_i32 = arith.constant 0 : i32
    %c0_i32_0 = arith.constant 0 : i32
    return %arg0, %c0_i32 : i32, i32
  }
  func.func @transform_1(%arg0: i32, %arg1: i32) -> (i32, i32) {
    %c0_i32 = arith.constant 0 : i32
    %c0_i32_0 = arith.constant 0 : i32
    return %arg0, %c0_i32 : i32, i32
  }
  func.func @transform_2(%arg0: i32, %arg1: i32) -> (i32, i32) {
    %c0_i32 = arith.constant 0 : i32
    %c0_i32_0 = arith.constant 0 : i32
    return %arg1, %c0_i32 : i32, i32
  }
  func.func @transform_3(%arg0: i32, %arg1: i32) -> (i32, i32) {
    %c0_i32 = arith.constant 0 : i32
    %c0_i32_0 = arith.constant 0 : i32
    %c0_i32_1 = arith.constant 0 : i32
    return %c0_i32, %c0_i32_0 : i32, i32
  }
  func.func @transform_4(%arg0: i32, %arg1: i32) -> (i32, i32) {
    %c0_i32 = arith.constant 0 : i32
    %c0_i32_0 = arith.constant 0 : i32
    %c0_i32_1 = arith.constant 0 : i32
    return %c0_i32, %c0_i32_0 : i32, i32
  }
  func.func @transform_5(%arg0: i32, %arg1: i32) -> (i32, i32) {
    %c0_i32 = arith.constant 0 : i32
    %c0_i32_0 = arith.constant 0 : i32
    %c0_i32_1 = arith.constant 0 : i32
    return %c0_i32, %c0_i32_0 : i32, i32
  }
  func.func @transform_6(%arg0: i32, %arg1: i32) -> (i32, i32) {
    %c0_i32 = arith.constant 0 : i32
    %c0_i32_0 = arith.constant 0 : i32
    %c0_i32_1 = arith.constant 0 : i32
    return %c0_i32, %c0_i32_0 : i32, i32
  }
  func.func @transform_7(%arg0: i32, %arg1: i32) -> (i32, i32) {
    %c0_i32 = arith.constant 0 : i32
    %c0_i32_0 = arith.constant 0 : i32
    %c0_i32_1 = arith.constant 0 : i32
    return %c0_i32, %c0_i32_0 : i32, i32
  }
  func.func @transform_8(%arg0: i32, %arg1: i32) -> (i32, i32) {
    %c0_i32 = arith.constant 0 : i32
    %c0_i32_0 = arith.constant 0 : i32
    %c0_i32_1 = arith.constant 0 : i32
    return %c0_i32, %c0_i32_0 : i32, i32
  }
  func.func @transform_9(%arg0: i32, %arg1: i32) -> (i32, i32) {
    %c0_i32 = arith.constant 0 : i32
    %c0_i32_0 = arith.constant 0 : i32
    return %arg0, %c0_i32 : i32, i32
  }
}

</mosaic_0001>

<llo_original>
// kernel: _lambda_.3
$region0: #{_lambda_.3}
  #allocation0 [shape = 'u32[]', space=smem, size = 0x4, offset = 0x4, fixed_abs, tag = 'smem constant byte address 0x4 - core index']
  #allocation1 [shape = 'u32[144,128]{1,0:T(1,128)}', space=vmem, size = 0x12000, scoped, tag = 'internal scratch']
  #allocation2 [shape = 'f32[128,1]{1,0:T(8,128)}', space=vmem, size = 0x10000, scoped, tag = 'scratch operand']
  #allocation3 [shape = 'f32[128,1]{1,0:T(8,128)}', space=vmem, size = 0x10000, scoped, tag = 'scratch operand']
  %s0 = inlined_call_operand.vmem [shape: bf16[128,128], index: 0, kind: input, shape index: {}, may-alias: {0,1}]
  %s1 = inlined_call_operand.vmem [shape: bf16[128,128], index: 1, kind: input, shape index: {}, may-alias: {0,1}]
  %s2 = inlined_call_operand.vmem [shape: s8[128,128], index: 2, kind: input, shape index: {}]
  %s3 = inlined_call_operand.vmem [shape: f32[128,1], index: 3, kind: output, shape index: {}]
  %s4 = sld [smem:[#allocation0]]
  $region34: #{_lambda_.3} parent=0
    _
  %s6 = ssub.s32 1, %s4
  %s7 = scalar_select 0, %s6, %s4
  // Predicated region
  $region2: #{_lambda_.3} parent=0 // pred_check
    _
  $region3: #{_lambda_.3} parent=0 // pred_check_branch
    %9 = sbr.rel (0) target = $region5
  $region4: #{_lambda_.3} parent=0 // pred_region
    _
  $region5: #{_lambda_.3} parent=0 // pred_fallthru
    _
  // Predicated region
  $region6: #{_lambda_.3} parent=0 // pred_check
    _
  $region7: #{_lambda_.3} parent=0 // pred_check_branch
    %11 = sbr.rel (0) target = $region9
  $region8: #{_lambda_.3} parent=0 // pred_region
    _
  $region9: #{_lambda_.3} parent=0 // pred_fallthru
    _
  // Predicated region
  $region10: #{_lambda_.3} parent=0 // pred_check
    _
  $region11: #{_lambda_.3} parent=0 // pred_check_branch
    %13 = sbr.rel (0) target = $region13
  $region12: #{_lambda_.3} parent=0 // pred_region
    _
  $region13: #{_lambda_.3} parent=0 // pred_fallthru
    _
  %p15 = scmp.eq.s32.totalorder 0, 0
  // Predicated region
  $region14: #{_lambda_.3} parent=0 // pred_check
    %p16 = pneg %p15
  $region15: #{_lambda_.3} parent=0 // pred_check_branch
    %18 = sbr.rel (%p16) target = $region17
  $region16: #{_lambda_.3} parent=0 // pred_region
    %vm19 = vcmask 7168
    %20 = vst.msk [vmem:[#allocation2] sm:$0xff] %vm19, 0.0
    %21 = vst.msk [vmem:[#allocation2 + $0x8] sm:$0xff] %vm19, 0.0
    %22 = vst.msk [vmem:[#allocation2 + $0x10] sm:$0xff] %vm19, 0.0
    %23 = vst.msk [vmem:[#allocation2 + $0x18] sm:$0xff] %vm19, 0.0
    %24 = vst.msk [vmem:[#allocation2 + $0x20] sm:$0xff] %vm19, 0.0
    %25 = vst.msk [vmem:[#allocation2 + $0x28] sm:$0xff] %vm19, 0.0
    %26 = vst.msk [vmem:[#allocation2 + $0x30] sm:$0xff] %vm19, 0.0
    %27 = vst.msk [vmem:[#allocation2 + $0x38] sm:$0xff] %vm19, 0.0
    %28 = vst.msk [vmem:[#allocation2 + $0x40] sm:$0xff] %vm19, 0.0
    %29 = vst.msk [vmem:[#allocation2 + $0x48] sm:$0xff] %vm19, 0.0
    %30 = vst.msk [vmem:[#allocation2 + $0x50] sm:$0xff] %vm19, 0.0
    %31 = vst.msk [vmem:[#allocation2 + $0x58] sm:$0xff] %vm19, 0.0
    %32 = vst.msk [vmem:[#allocation2 + $0x60] sm:$0xff] %vm19, 0.0
    %33 = vst.msk [vmem:[#allocation2 + $0x68] sm:$0xff] %vm19, 0.0
    %34 = vst.msk [vmem:[#allocation2 + $0x70] sm:$0xff] %vm19, 0.0
    %35 = vst.msk [vmem:[#allocation2 + $0x78] sm:$0xff] %vm19, 0.0
    %36 = vst.msk [vmem:[#allocation3] sm:$0xff] %vm19, 0.0
    %37 = vst.msk [vmem:[#allocation3 + $0x8] sm:$0xff] %vm19, 0.0
    %38 = vst.msk [vmem:[#allocation3 + $0x10] sm:$0xff] %vm19, 0.0
    %39 = vst.msk [vmem:[#allocation3 + $0x18] sm:$0xff] %vm19, 0.0
    %40 = vst.msk [vmem:[#allocation3 + $0x20] sm:$0xff] %vm19, 0.0
    %41 = vst.msk [vmem:[#allocation3 + $0x28] sm:$0xff] %vm19, 0.0
    %42 = vst.msk [vmem:[#allocation3 + $0x30] sm:$0xff] %vm19, 0.0
    %43 = vst.msk [vmem:[#allocation3 + $0x38] sm:$0xff] %vm19, 0.0
    %44 = vst.msk [vmem:[#allocation3 + $0x40] sm:$0xff] %vm19, 0.0
    %45 = vst.msk [vmem:[#allocation3 + $0x48] sm:$0xff] %vm19, 0.0
    %46 = vst.msk [vmem:[#allocation3 + $0x50] sm:$0xff] %vm19, 0.0
    %47 = vst.msk [vmem:[#allocation3 + $0x58] sm:$0xff] %vm19, 0.0
    %48 = vst.msk [vmem:[#allocation3 + $0x60] sm:$0xff] %vm19, 0.0
    %49 = vst.msk [vmem:[#allocation3 + $0x68] sm:$0xff] %vm19, 0.0
    %50 = vst.msk [vmem:[#allocation3 + $0x70] sm:$0xff] %vm19, 0.0
    %51 = vst.msk [vmem:[#allocation3 + $0x78] sm:$0xff] %vm19, 0.0
  $region17: #{_lambda_.3} parent=0 // pred_fallthru
    _
  %v52 = vld [vmem:[%s0] sm:$0xf]
  %v53 = vld [vmem:[%s0 + $0x4] sm:$0xf]
  %v54 = vld [vmem:[%s0 + $0x8] sm:$0xf]
  %v55 = vld [vmem:[%s0 + $0xc] sm:$0xf]
  %v56 = vld [vmem:[%s0 + $0x10] sm:$0xf]
  %v57 = vld [vmem:[%s0 + $0x14] sm:$0xf]
  %v58 = vld [vmem:[%s0 + $0x18] sm:$0xf]
  %v59 = vld [vmem:[%s0 + $0x1c] sm:$0xf]
  %v60 = vld [vmem:[%s0 + $0x20] sm:$0xf]
  %v61 = vld [vmem:[%s0 + $0x24] sm:$0xf]
  %v62 = vld [vmem:[%s0 + $0x28] sm:$0xf]
  %v63 = vld [vmem:[%s0 + $0x2c] sm:$0xf]
  %v64 = vld [vmem:[%s0 + $0x30] sm:$0xf]
  %v65 = vld [vmem:[%s0 + $0x34] sm:$0xf]
  %v66 = vld [vmem:[%s0 + $0x38] sm:$0xf]
  %v67 = vld [vmem:[%s0 + $0x3c] sm:$0xf]
  %v68 = vld [vmem:[%s1] sm:$0xf]
  %v69 = vld [vmem:[%s1 + $0x4] sm:$0xf]
  %v70 = vld [vmem:[%s1 + $0x8] sm:$0xf]
  %v71 = vld [vmem:[%s1 + $0xc] sm:$0xf]
  %v72 = vld [vmem:[%s1 + $0x10] sm:$0xf]
  %v73 = vld [vmem:[%s1 + $0x14] sm:$0xf]
  %v74 = vld [vmem:[%s1 + $0x18] sm:$0xf]
  %v75 = vld [vmem:[%s1 + $0x1c] sm:$0xf]
  %v76 = vld [vmem:[%s1 + $0x20] sm:$0xf]
  %v77 = vld [vmem:[%s1 + $0x24] sm:$0xf]
  %v78 = vld [vmem:[%s1 + $0x28] sm:$0xf]
  %v79 = vld [vmem:[%s1 + $0x2c] sm:$0xf]
  %v80 = vld [vmem:[%s1 + $0x30] sm:$0xf]
  %v81 = vld [vmem:[%s1 + $0x34] sm:$0xf]
  %v82 = vld [vmem:[%s1 + $0x38] sm:$0xf]
  %v83 = vld [vmem:[%s1 + $0x3c] sm:$0xf]
  %v100 = vunpack.c.l.b16 %v52
  %v101 = vunpack.c.l.b16 %v53
  %v102 = vunpack.c.l.b16 %v54
  %v103 = vunpack.c.l.b16 %v55
  %v104 = vunpack.c.l.b16 %v56
  %v105 = vunpack.c.l.b16 %v57
  %v106 = vunpack.c.l.b16 %v58
  %v107 = vunpack.c.l.b16 %v59
  %v108 = vunpack.c.l.b16 %v60
  %v109 = vunpack.c.l.b16 %v61
  %v110 = vunpack.c.l.b16 %v62
  %v111 = vunpack.c.l.b16 %v63
  %v112 = vunpack.c.l.b16 %v64
  %v113 = vunpack.c.l.b16 %v65
  %v114 = vunpack.c.l.b16 %v66
  %v115 = vunpack.c.l.b16 %v67
  %v116 = vpack.c.b16 %v101, %v100
  %v117 = vpack.c.b16 %v103, %v102
  %v118 = vpack.c.b16 %v105, %v104
  %v119 = vpack.c.b16 %v107, %v106
  %v120 = vpack.c.b16 %v109, %v108
  %v121 = vpack.c.b16 %v111, %v110
  %v122 = vpack.c.b16 %v113, %v112
  %v123 = vpack.c.b16 %v115, %v114
  %v148 = vunpack.c.l.b16 %v68
  %v149 = vunpack.c.l.b16 %v69
  %v150 = vunpack.c.l.b16 %v70
  %v151 = vunpack.c.l.b16 %v71
  %v152 = vunpack.c.l.b16 %v72
  %v153 = vunpack.c.l.b16 %v73
  %v154 = vunpack.c.l.b16 %v74
  %v155 = vunpack.c.l.b16 %v75
  %v156 = vunpack.c.l.b16 %v76
  %v157 = vunpack.c.l.b16 %v77
  %v158 = vunpack.c.l.b16 %v78
  %v159 = vunpack.c.l.b16 %v79
  %v160 = vunpack.c.l.b16 %v80
  %v161 = vunpack.c.l.b16 %v81
  %v162 = vunpack.c.l.b16 %v82
  %v163 = vunpack.c.l.b16 %v83
  %v164 = vpack.c.b16 %v149, %v148
  %v165 = vpack.c.b16 %v151, %v150
  %v166 = vpack.c.b16 %v153, %v152
  %v167 = vpack.c.b16 %v155, %v154
  %v168 = vpack.c.b16 %v157, %v156
  %v169 = vpack.c.b16 %v159, %v158
  %v170 = vpack.c.b16 %v161, %v160
  %v171 = vpack.c.b16 %v163, %v162
  %180 = vmatprep.subr.bf16.mxu0 0
  %181 = vmatpush1.bf16.xpose.msra.mxu0 %v171
  %182 = vmatprep.subr.bf16.mxu0 0
  %183 = vmatpush1.bf16.xpose.msra.mxu0 %v170
  %184 = vmatprep.subr.bf16.mxu0 0
  %185 = vmatpush1.bf16.xpose.msra.mxu0 %v169
  %186 = vmatprep.subr.bf16.mxu0 0
  %187 = vmatpush1.bf16.xpose.msra.mxu0 %v168
  %188 = vmatprep.subr.bf16.mxu0 0
  %189 = vmatpush1.bf16.xpose.msra.mxu0 %v167
  %190 = vmatprep.subr.bf16.mxu0 0
  %191 = vmatpush1.bf16.xpose.msra.mxu0 %v166
  %192 = vmatprep.subr.bf16.mxu0 0
  %193 = vmatpush1.bf16.xpose.msra.mxu0 %v165
  %194 = vmatprep.subr.bf16.mxu0 0
  %195 = vmatpush1.bf16.xpose.msra.mxu0 %v164
  %196 = vmatprep.subr.bf16.mxu0 0
  %197 = vmatpush2.bf16.xpose.msra.mxu0 0
  %198 = vmatprep.subr.bf16.mxu0 0
  %199 = vmatpush2.bf16.xpose.msra.mxu0 0
  %200 = vmatprep.subr.bf16.mxu0 0
  %201 = vmatpush2.bf16.xpose.msra.mxu0 0
  %202 = vmatprep.subr.bf16.mxu0 0
  %203 = vmatpush2.bf16.xpose.msra.mxu0 0
  %204 = vmatprep.subr.bf16.mxu0 0
  %205 = vmatpush2.bf16.xpose.msra.mxu0 0
  %206 = vmatprep.subr.bf16.mxu0 0
  %207 = vmatpush2.bf16.xpose.msra.mxu0 0
  %208 = vmatprep.subr.bf16.mxu0 0
  %209 = vmatpush2.bf16.xpose.msra.mxu0 0
  %210 = vmatprep.subr.bf16.mxu0 0
  %211 = vmatpush2.bf16.xpose.msra.mxu0 0
  %212 = vmatprep.mubr.bf16.mxu0 0
  %213 = vmatmul.mubr.bf16.gmra.mxu0 %v116
  %v214 = vpop.f32.mrf.mxu0
  %v215 = vadd.f32 0.0, %v214
  %v216 = vpop.f32.mrf.mxu0
  %v217 = vpop.f32.mrf.mxu0
  %v218 = vadd.f32 0.0, %v217
  %v219 = vpop.f32.mrf.mxu0
  %220 = vmatprep.mubr.bf16.mxu0 0
  %221 = vmatmul.mubr.bf16.gmra.mxu0 %v117
  %v222 = vpop.f32.mrf.mxu0
  %v223 = vadd.f32 0.0, %v222
  %v224 = vpop.f32.mrf.mxu0
  %v225 = vpop.f32.mrf.mxu0
  %v226 = vadd.f32 0.0, %v225
  %v227 = vpop.f32.mrf.mxu0
  %228 = vmatprep.mubr.bf16.mxu0 0
  %229 = vmatmul.mubr.bf16.gmra.mxu0 %v118
  %v230 = vpop.f32.mrf.mxu0
  %v231 = vadd.f32 0.0, %v230
  %v232 = vpop.f32.mrf.mxu0
  %v233 = vpop.f32.mrf.mxu0
  %v234 = vadd.f32 0.0, %v233
  %v235 = vpop.f32.mrf.mxu0
  %236 = vmatprep.mubr.bf16.mxu0 0
  %237 = vmatmul.mubr.bf16.gmra.mxu0 %v119
  %v238 = vpop.f32.mrf.mxu0
  %v239 = vadd.f32 0.0, %v238
  %v240 = vpop.f32.mrf.mxu0
  %v241 = vpop.f32.mrf.mxu0
  %v242 = vadd.f32 0.0, %v241
  %v243 = vpop.f32.mrf.mxu0
  %244 = vmatprep.mubr.bf16.mxu0 0
  %245 = vmatmul.mubr.bf16.gmra.mxu0 %v120
  %v246 = vpop.f32.mrf.mxu0
  %v247 = vadd.f32 0.0, %v246
  %v248 = vpop.f32.mrf.mxu0
  %v249 = vpop.f32.mrf.mxu0
  %v250 = vadd.f32 0.0, %v249
  %v251 = vpop.f32.mrf.mxu0
  %252 = vmatprep.mubr.bf16.mxu0 0
  %253 = vmatmul.mubr.bf16.gmra.mxu0 %v121
  %v254 = vpop.f32.mrf.mxu0
  %v255 = vadd.f32 0.0, %v254
  %v256 = vpop.f32.mrf.mxu0
  %v257 = vpop.f32.mrf.mxu0
  %v258 = vadd.f32 0.0, %v257
  %v259 = vpop.f32.mrf.mxu0
  %260 = vmatprep.mubr.bf16.mxu0 0
  %261 = vmatmul.mubr.bf16.gmra.mxu0 %v122
  %v262 = vpop.f32.mrf.mxu0
  %v263 = vadd.f32 0.0, %v262
  %v264 = vpop.f32.mrf.mxu0
  %v265 = vpop.f32.mrf.mxu0
  %v266 = vadd.f32 0.0, %v265
  %v267 = vpop.f32.mrf.mxu0
  %268 = vmatprep.mubr.bf16.mxu0 0
  %269 = vmatmul.mubr.bf16.gmra.mxu0 %v123
  %v270 = vpop.f32.mrf.mxu0
  %v271 = vadd.f32 0.0, %v270
  %v272 = vpop.f32.mrf.mxu0
  %v273 = vpop.f32.mrf.mxu0
  %v274 = vadd.f32 0.0, %v273
  %v275 = vpop.f32.mrf.mxu0
  %276 = vdwg.mxu0
  %v277 = vmul.f32 %v215, 1.442695
  %v278 = vpow.pop %v277
  %v279 = vmul.f32 %v218, 1.442695
  %v280 = vpow.pop %v279
  %v281 = vmul.f32 %v223, 1.442695
  %v282 = vpow.pop %v281
  %v283 = vmul.f32 %v226, 1.442695
  %v284 = vpow.pop %v283
  %v285 = vmul.f32 %v231, 1.442695
  %v286 = vpow.pop %v285
  %v287 = vmul.f32 %v234, 1.442695
  %v288 = vpow.pop %v287
  %v289 = vmul.f32 %v239, 1.442695
  %v290 = vpow.pop %v289
  %v291 = vmul.f32 %v242, 1.442695
  %v292 = vpow.pop %v291
  %v293 = vmul.f32 %v247, 1.442695
  %v294 = vpow.pop %v293
  %v295 = vmul.f32 %v250, 1.442695
  %v296 = vpow.pop %v295
  %v297 = vmul.f32 %v255, 1.442695
  %v298 = vpow.pop %v297
  %v299 = vmul.f32 %v258, 1.442695
  %v300 = vpow.pop %v299
  %v301 = vmul.f32 %v263, 1.442695
  %v302 = vpow.pop %v301
  %v303 = vmul.f32 %v266, 1.442695
  %v304 = vpow.pop %v303
  %v305 = vmul.f32 %v271, 1.442695
  %v306 = vpow.pop %v305
  %v307 = vmul.f32 %v274, 1.442695
  %v308 = vpow.pop %v307
  %v309 = vld [vmem:[%s2] sm:$0xff]
  %v310 = vld [vmem:[%s2 + $0x8] sm:$0xff]
  %v311 = vld [vmem:[%s2 + $0x10] sm:$0xff]
  %v312 = vld [vmem:[%s2 + $0x18] sm:$0xff]
  %v313 = vunpack.c.0.s8 %v309
  %v314 = vunpack.c.1.s8 %v309
  %v315 = vunpack.c.2.s8 %v309
  %v316 = vunpack.c.3.s8 %v309
  %v317 = vunpack.c.0.s8 %v310
  %v318 = vunpack.c.1.s8 %v310
  %v319 = vunpack.c.2.s8 %v310
  %v320 = vunpack.c.3.s8 %v310
  %v321 = vunpack.c.0.s8 %v311
  %v322 = vunpack.c.1.s8 %v311
  %v323 = vunpack.c.2.s8 %v311
  %v324 = vunpack.c.3.s8 %v311
  %v325 = vunpack.c.0.s8 %v312
  %v326 = vunpack.c.1.s8 %v312
  %v327 = vunpack.c.2.s8 %v312
  %v328 = vunpack.c.3.s8 %v312
  %v329 = vcvt.s32.f32 %v313
  %v330 = vcvt.s32.f32 %v314
  %v331 = vcvt.s32.f32 %v315
  %v332 = vcvt.s32.f32 %v316
  %v333 = vcvt.s32.f32 %v317
  %v334 = vcvt.s32.f32 %v318
  %v335 = vcvt.s32.f32 %v319
  %v336 = vcvt.s32.f32 %v320
  %v337 = vcvt.s32.f32 %v321
  %v338 = vcvt.s32.f32 %v322
  %v339 = vcvt.s32.f32 %v323
  %v340 = vcvt.s32.f32 %v324
  %v341 = vcvt.s32.f32 %v325
  %v342 = vcvt.s32.f32 %v326
  %v343 = vcvt.s32.f32 %v327
  %v344 = vcvt.s32.f32 %v328
  %p345 = scmp.lt.s32.totalorder 0, 0
  // Predicated region
  $region18: #{_lambda_.3} parent=0 // pred_check
    %p346 = pneg %p345
  $region19: #{_lambda_.3} parent=0 // pred_check_branch
    %348 = sbr.rel (%p346) target = $region21
  $region20: #{_lambda_.3} parent=0 // pred_region
    %v349 = vld [vmem:[#allocation3] sm:$0xff]
    %v350 = vld [vmem:[#allocation3 + $0x8] sm:$0xff]
    %v351 = vld [vmem:[#allocation3 + $0x10] sm:$0xff]
    %v352 = vld [vmem:[#allocation3 + $0x18] sm:$0xff]
    %v353 = vld [vmem:[#allocation3 + $0x20] sm:$0xff]
    %v354 = vld [vmem:[#allocation3 + $0x28] sm:$0xff]
    %v355 = vld [vmem:[#allocation3 + $0x30] sm:$0xff]
    %v356 = vld [vmem:[#allocation3 + $0x38] sm:$0xff]
    %v357 = vld [vmem:[#allocation3 + $0x40] sm:$0xff]
    %v358 = vld [vmem:[#allocation3 + $0x48] sm:$0xff]
    %v359 = vld [vmem:[#allocation3 + $0x50] sm:$0xff]
    %v360 = vld [vmem:[#allocation3 + $0x58] sm:$0xff]
    %v361 = vld [vmem:[#allocation3 + $0x60] sm:$0xff]
    %v362 = vld [vmem:[#allocation3 + $0x68] sm:$0xff]
    %v363 = vld [vmem:[#allocation3 + $0x70] sm:$0xff]
    %v364 = vld [vmem:[#allocation3 + $0x78] sm:$0xff]
    %365 = vadd.xlane.f32.xlu0 %v278
    %v366 = vpop.xlane.xlu0 %365
    %367 = vadd.xlane.f32.xlu0 %v280
    %v368 = vpop.xlane.xlu0 %367
    %369 = vadd.xlane.f32.xlu0 %v282
    %v370 = vpop.xlane.xlu0 %369
    %371 = vadd.xlane.f32.xlu0 %v284
    %v372 = vpop.xlane.xlu0 %371
    %373 = vadd.xlane.f32.xlu0 %v286
    %v374 = vpop.xlane.xlu0 %373
    %375 = vadd.xlane.f32.xlu0 %v288
    %v376 = vpop.xlane.xlu0 %375
    %377 = vadd.xlane.f32.xlu0 %v290
    %v378 = vpop.xlane.xlu0 %377
    %379 = vadd.xlane.f32.xlu0 %v292
    %v380 = vpop.xlane.xlu0 %379
    %381 = vadd.xlane.f32.xlu0 %v294
    %v382 = vpop.xlane.xlu0 %381
    %383 = vadd.xlane.f32.xlu0 %v296
    %v384 = vpop.xlane.xlu0 %383
    %385 = vadd.xlane.f32.xlu0 %v298
    %v386 = vpop.xlane.xlu0 %385
    %387 = vadd.xlane.f32.xlu0 %v300
    %v388 = vpop.xlane.xlu0 %387
    %389 = vadd.xlane.f32.xlu0 %v302
    %v390 = vpop.xlane.xlu0 %389
    %391 = vadd.xlane.f32.xlu0 %v304
    %v392 = vpop.xlane.xlu0 %391
    %393 = vadd.xlane.f32.xlu0 %v306
    %v394 = vpop.xlane.xlu0 %393
    %395 = vadd.xlane.f32.xlu0 %v308
    %v396 = vpop.xlane.xlu0 %395
    %v397 = vadd.f32 %v349, %v366
    %v398 = vadd.f32 %v350, %v368
    %v399 = vadd.f32 %v351, %v370
    %v400 = vadd.f32 %v352, %v372
    %v401 = vadd.f32 %v353, %v374
    %v402 = vadd.f32 %v354, %v376
    %v403 = vadd.f32 %v355, %v378
    %v404 = vadd.f32 %v356, %v380
    %v405 = vadd.f32 %v357, %v382
    %v406 = vadd.f32 %v358, %v384
    %v407 = vadd.f32 %v359, %v386
    %v408 = vadd.f32 %v360, %v388
    %v409 = vadd.f32 %v361, %v390
    %v410 = vadd.f32 %v362, %v392
    %v411 = vadd.f32 %v363, %v394
    %v412 = vadd.f32 %v364, %v396
    %vm413 = vcmask 7168
    %414 = vst.msk [vmem:[#allocation3] sm:$0xff] %vm413, %v397
    %415 = vst.msk [vmem:[#allocation3 + $0x8] sm:$0xff] %vm413, %v398
    %416 = vst.msk [vmem:[#allocation3 + $0x10] sm:$0xff] %vm413, %v399
    %417 = vst.msk [vmem:[#allocation3 + $0x18] sm:$0xff] %vm413, %v400
    %418 = vst.msk [vmem:[#allocation3 + $0x20] sm:$0xff] %vm413, %v401
    %419 = vst.msk [vmem:[#allocation3 + $0x28] sm:$0xff] %vm413, %v402
    %420 = vst.msk [vmem:[#allocation3 + $0x30] sm:$0xff] %vm413, %v403
    %421 = vst.msk [vmem:[#allocation3 + $0x38] sm:$0xff] %vm413, %v404
    %422 = vst.msk [vmem:[#allocation3 + $0x40] sm:$0xff] %vm413, %v405
    %423 = vst.msk [vmem:[#allocation3 + $0x48] sm:$0xff] %vm413, %v406
    %424 = vst.msk [vmem:[#allocation3 + $0x50] sm:$0xff] %vm413, %v407
    %425 = vst.msk [vmem:[#allocation3 + $0x58] sm:$0xff] %vm413, %v408
    %426 = vst.msk [vmem:[#allocation3 + $0x60] sm:$0xff] %vm413, %v409
    %427 = vst.msk [vmem:[#allocation3 + $0x68] sm:$0xff] %vm413, %v410
    %428 = vst.msk [vmem:[#allocation3 + $0x70] sm:$0xff] %vm413, %v411
    %429 = vst.msk [vmem:[#allocation3 + $0x78] sm:$0xff] %vm413, %v412
    %v430 = vld [vmem:[#allocation2] sm:$0xff]
    %v431 = vld [vmem:[#allocation2 + $0x8] sm:$0xff]
    %v432 = vld [vmem:[#allocation2 + $0x10] sm:$0xff]
    %v433 = vld [vmem:[#allocation2 + $0x18] sm:$0xff]
    %v434 = vld [vmem:[#allocation2 + $0x20] sm:$0xff]
    %v435 = vld [vmem:[#allocation2 + $0x28] sm:$0xff]
    %v436 = vld [vmem:[#allocation2 + $0x30] sm:$0xff]
    %v437 = vld [vmem:[#allocation2 + $0x38] sm:$0xff]
    %v438 = vld [vmem:[#allocation2 + $0x40] sm:$0xff]
    %v439 = vld [vmem:[#allocation2 + $0x48] sm:$0xff]
    %v440 = vld [vmem:[#allocation2 + $0x50] sm:$0xff]
    %v441 = vld [vmem:[#allocation2 + $0x58] sm:$0xff]
    %v442 = vld [vmem:[#allocation2 + $0x60] sm:$0xff]
    %v443 = vld [vmem:[#allocation2 + $0x68] sm:$0xff]
    %v444 = vld [vmem:[#allocation2 + $0x70] sm:$0xff]
    %v445 = vld [vmem:[#allocation2 + $0x78] sm:$0xff]
    %v446 = vmul.f32 %v278, %v329
    %v447 = vmul.f32 %v280, %v330
    %v448 = vmul.f32 %v282, %v331
    %v449 = vmul.f32 %v284, %v332
    %v450 = vmul.f32 %v286, %v333
    %v451 = vmul.f32 %v288, %v334
    %v452 = vmul.f32 %v290, %v335
    %v453 = vmul.f32 %v292, %v336
    %v454 = vmul.f32 %v294, %v337
    %v455 = vmul.f32 %v296, %v338
    %v456 = vmul.f32 %v298, %v339
    %v457 = vmul.f32 %v300, %v340
    %v458 = vmul.f32 %v302, %v341
    %v459 = vmul.f32 %v304, %v342
    %v460 = vmul.f32 %v306, %v343
    %v461 = vmul.f32 %v308, %v344
    %462 = vadd.xlane.f32.xlu0 %v446
    %v463 = vpop.xlane.xlu0 %462
    %464 = vadd.xlane.f32.xlu0 %v447
    %v465 = vpop.xlane.xlu0 %464
    %466 = vadd.xlane.f32.xlu0 %v448
    %v467 = vpop.xlane.xlu0 %466
    %468 = vadd.xlane.f32.xlu0 %v449
    %v469 = vpop.xlane.xlu0 %468
    %470 = vadd.xlane.f32.xlu0 %v450
    %v471 = vpop.xlane.xlu0 %470
    %472 = vadd.xlane.f32.xlu0 %v451
    %v473 = vpop.xlane.xlu0 %472
    %474 = vadd.xlane.f32.xlu0 %v452
    %v475 = vpop.xlane.xlu0 %474
    %476 = vadd.xlane.f32.xlu0 %v453
    %v477 = vpop.xlane.xlu0 %476
    %478 = vadd.xlane.f32.xlu0 %v454
    %v479 = vpop.xlane.xlu0 %478
    %480 = vadd.xlane.f32.xlu0 %v455
    %v481 = vpop.xlane.xlu0 %480
    %482 = vadd.xlane.f32.xlu0 %v456
    %v483 = vpop.xlane.xlu0 %482
    %484 = vadd.xlane.f32.xlu0 %v457
    %v485 = vpop.xlane.xlu0 %484
    %486 = vadd.xlane.f32.xlu0 %v458
    %v487 = vpop.xlane.xlu0 %486
    %488 = vadd.xlane.f32.xlu0 %v459
    %v489 = vpop.xlane.xlu0 %488
    %490 = vadd.xlane.f32.xlu0 %v460
    %v491 = vpop.xlane.xlu0 %490
    %492 = vadd.xlane.f32.xlu0 %v461
    %v493 = vpop.xlane.xlu0 %492
    %v494 = vadd.f32 %v430, %v463
    %v495 = vadd.f32 %v431, %v465
    %v496 = vadd.f32 %v432, %v467
    %v497 = vadd.f32 %v433, %v469
    %v498 = vadd.f32 %v434, %v471
    %v499 = vadd.f32 %v435, %v473
    %v500 = vadd.f32 %v436, %v475
    %v501 = vadd.f32 %v437, %v477
    %v502 = vadd.f32 %v438, %v479
    %v503 = vadd.f32 %v439, %v481
    %v504 = vadd.f32 %v440, %v483
    %v505 = vadd.f32 %v441, %v485
    %v506 = vadd.f32 %v442, %v487
    %v507 = vadd.f32 %v443, %v489
    %v508 = vadd.f32 %v444, %v491
    %v509 = vadd.f32 %v445, %v493
    %510 = vst.msk [vmem:[#allocation2] sm:$0xff] %vm413, %v494
    %511 = vst.msk [vmem:[#allocation2 + $0x8] sm:$0xff] %vm413, %v495
    %512 = vst.msk [vmem:[#allocation2 + $0x10] sm:$0xff] %vm413, %v496
    %513 = vst.msk [vmem:[#allocation2 + $0x18] sm:$0xff] %vm413, %v497
    %514 = vst.msk [vmem:[#allocation2 + $0x20] sm:$0xff] %vm413, %v498
    %515 = vst.msk [vmem:[#allocation2 + $0x28] sm:$0xff] %vm413, %v499
    %516 = vst.msk [vmem:[#allocation2 + $0x30] sm:$0xff] %vm413, %v500
    %517 = vst.msk [vmem:[#allocation2 + $0x38] sm:$0xff] %vm413, %v501
    %518 = vst.msk [vmem:[#allocation2 + $0x40] sm:$0xff] %vm413, %v502
    %519 = vst.msk [vmem:[#allocation2 + $0x48] sm:$0xff] %vm413, %v503
    %520 = vst.msk [vmem:[#allocation2 + $0x50] sm:$0xff] %vm413, %v504
    %521 = vst.msk [vmem:[#allocation2 + $0x58] sm:$0xff] %vm413, %v505
    %522 = vst.msk [vmem:[#allocation2 + $0x60] sm:$0xff] %vm413, %v506
    %523 = vst.msk [vmem:[#allocation2 + $0x68] sm:$0xff] %vm413, %v507
    %524 = vst.msk [vmem:[#allocation2 + $0x70] sm:$0xff] %vm413, %v508
    %525 = vst.msk [vmem:[#allocation2 + $0x78] sm:$0xff] %vm413, %v509
  $region21: #{_lambda_.3} parent=0 // pred_fallthru
    _
  // Predicated region
  $region22: #{_lambda_.3} parent=0 // pred_check
    %p526 = pneg %p15
  $region23: #{_lambda_.3} parent=0 // pred_check_branch
    %528 = sbr.rel (%p526) target = $region25
  $region24: #{_lambda_.3} parent=0 // pred_region
    %v529 = vlaneseq
    %v530 = vand.u32 %v529, 127
    %s531 = smul.u32 0, 128
    %v532 = vstv %s531
    %v533 = vadd.s32 %v530, %v532
    %vm534 = vcmp.lt.s32.totalorder %v533, 16
    %v535 = vsel %vm534, 1, 0
    %v536 = vcvt.s32.f32 %v535
    %v537 = vmul.f32 %v278, %v536
    %v538 = vmul.f32 %v280, %v536
    %v539 = vmul.f32 %v282, %v536
    %v540 = vmul.f32 %v284, %v536
    %v541 = vmul.f32 %v286, %v536
    %v542 = vmul.f32 %v288, %v536
    %v543 = vmul.f32 %v290, %v536
    %v544 = vmul.f32 %v292, %v536
    %v545 = vmul.f32 %v294, %v536
    %v546 = vmul.f32 %v296, %v536
    %v547 = vmul.f32 %v298, %v536
    %v548 = vmul.f32 %v300, %v536
    %v549 = vmul.f32 %v302, %v536
    %v550 = vmul.f32 %v304, %v536
    %v551 = vmul.f32 %v306, %v536
    %v552 = vmul.f32 %v308, %v536
    %v553 = vld [vmem:[#allocation3] sm:$0xff]
    %v554 = vld [vmem:[#allocation3 + $0x8] sm:$0xff]
    %v555 = vld [vmem:[#allocation3 + $0x10] sm:$0xff]
    %v556 = vld [vmem:[#allocation3 + $0x18] sm:$0xff]
    %v557 = vld [vmem:[#allocation3 + $0x20] sm:$0xff]
    %v558 = vld [vmem:[#allocation3 + $0x28] sm:$0xff]
    %v559 = vld [vmem:[#allocation3 + $0x30] sm:$0xff]
    %v560 = vld [vmem:[#allocation3 + $0x38] sm:$0xff]
    %v561 = vld [vmem:[#allocation3 + $0x40] sm:$0xff]
    %v562 = vld [vmem:[#allocation3 + $0x48] sm:$0xff]
    %v563 = vld [vmem:[#allocation3 + $0x50] sm:$0xff]
    %v564 = vld [vmem:[#allocation3 + $0x58] sm:$0xff]
    %v565 = vld [vmem:[#allocation3 + $0x60] sm:$0xff]
    %v566 = vld [vmem:[#allocation3 + $0x68] sm:$0xff]
    %v567 = vld [vmem:[#allocation3 + $0x70] sm:$0xff]
    %v568 = vld [vmem:[#allocation3 + $0x78] sm:$0xff]
    %569 = vadd.xlane.f32.xlu0 %v537
    %v570 = vpop.xlane.xlu0 %569
    %571 = vadd.xlane.f32.xlu0 %v538
    %v572 = vpop.xlane.xlu0 %571
    %573 = vadd.xlane.f32.xlu0 %v539
    %v574 = vpop.xlane.xlu0 %573
    %575 = vadd.xlane.f32.xlu0 %v540
    %v576 = vpop.xlane.xlu0 %575
    %577 = vadd.xlane.f32.xlu0 %v541
    %v578 = vpop.xlane.xlu0 %577
    %579 = vadd.xlane.f32.xlu0 %v542
    %v580 = vpop.xlane.xlu0 %579
    %581 = vadd.xlane.f32.xlu0 %v543
    %v582 = vpop.xlane.xlu0 %581
    %583 = vadd.xlane.f32.xlu0 %v544
    %v584 = vpop.xlane.xlu0 %583
    %585 = vadd.xlane.f32.xlu0 %v545
    %v586 = vpop.xlane.xlu0 %585
    %587 = vadd.xlane.f32.xlu0 %v546
    %v588 = vpop.xlane.xlu0 %587
    %589 = vadd.xlane.f32.xlu0 %v547
    %v590 = vpop.xlane.xlu0 %589
    %591 = vadd.xlane.f32.xlu0 %v548
    %v592 = vpop.xlane.xlu0 %591
    %593 = vadd.xlane.f32.xlu0 %v549
    %v594 = vpop.xlane.xlu0 %593
    %595 = vadd.xlane.f32.xlu0 %v550
    %v596 = vpop.xlane.xlu0 %595
    %597 = vadd.xlane.f32.xlu0 %v551
    %v598 = vpop.xlane.xlu0 %597
    %599 = vadd.xlane.f32.xlu0 %v552
    %v600 = vpop.xlane.xlu0 %599
    %v601 = vadd.f32 %v553, %v570
    %v602 = vadd.f32 %v554, %v572
    %v603 = vadd.f32 %v555, %v574
    %v604 = vadd.f32 %v556, %v576
    %v605 = vadd.f32 %v557, %v578
    %v606 = vadd.f32 %v558, %v580
    %v607 = vadd.f32 %v559, %v582
    %v608 = vadd.f32 %v560, %v584
    %v609 = vadd.f32 %v561, %v586
    %v610 = vadd.f32 %v562, %v588
    %v611 = vadd.f32 %v563, %v590
    %v612 = vadd.f32 %v564, %v592
    %v613 = vadd.f32 %v565, %v594
    %v614 = vadd.f32 %v566, %v596
    %v615 = vadd.f32 %v567, %v598
    %v616 = vadd.f32 %v568, %v600
    %vm617 = vcmask 7168
    %618 = vst.msk [vmem:[#allocation3] sm:$0xff] %vm617, %v601
    %619 = vst.msk [vmem:[#allocation3 + $0x8] sm:$0xff] %vm617, %v602
    %620 = vst.msk [vmem:[#allocation3 + $0x10] sm:$0xff] %vm617, %v603
    %621 = vst.msk [vmem:[#allocation3 + $0x18] sm:$0xff] %vm617, %v604
    %622 = vst.msk [vmem:[#allocation3 + $0x20] sm:$0xff] %vm617, %v605
    %623 = vst.msk [vmem:[#allocation3 + $0x28] sm:$0xff] %vm617, %v606
    %624 = vst.msk [vmem:[#allocation3 + $0x30] sm:$0xff] %vm617, %v607
    %625 = vst.msk [vmem:[#allocation3 + $0x38] sm:$0xff] %vm617, %v608
    %626 = vst.msk [vmem:[#allocation3 + $0x40] sm:$0xff] %vm617, %v609
    %627 = vst.msk [vmem:[#allocation3 + $0x48] sm:$0xff] %vm617, %v610
    %628 = vst.msk [vmem:[#allocation3 + $0x50] sm:$0xff] %vm617, %v611
    %629 = vst.msk [vmem:[#allocation3 + $0x58] sm:$0xff] %vm617, %v612
    %630 = vst.msk [vmem:[#allocation3 + $0x60] sm:$0xff] %vm617, %v613
    %631 = vst.msk [vmem:[#allocation3 + $0x68] sm:$0xff] %vm617, %v614
    %632 = vst.msk [vmem:[#allocation3 + $0x70] sm:$0xff] %vm617, %v615
    %633 = vst.msk [vmem:[#allocation3 + $0x78] sm:$0xff] %vm617, %v616
    %v634 = vld [vmem:[#allocation2] sm:$0xff]
    %v635 = vld [vmem:[#allocation2 + $0x8] sm:$0xff]
    %v636 = vld [vmem:[#allocation2 + $0x10] sm:$0xff]
    %v637 = vld [vmem:[#allocation2 + $0x18] sm:$0xff]
    %v638 = vld [vmem:[#allocation2 + $0x20] sm:$0xff]
    %v639 = vld [vmem:[#allocation2 + $0x28] sm:$0xff]
    %v640 = vld [vmem:[#allocation2 + $0x30] sm:$0xff]
    %v641 = vld [vmem:[#allocation2 + $0x38] sm:$0xff]
    %v642 = vld [vmem:[#allocation2 + $0x40] sm:$0xff]
    %v643 = vld [vmem:[#allocation2 + $0x48] sm:$0xff]
    %v644 = vld [vmem:[#allocation2 + $0x50] sm:$0xff]
    %v645 = vld [vmem:[#allocation2 + $0x58] sm:$0xff]
    %v646 = vld [vmem:[#allocation2 + $0x60] sm:$0xff]
    %v647 = vld [vmem:[#allocation2 + $0x68] sm:$0xff]
    %v648 = vld [vmem:[#allocation2 + $0x70] sm:$0xff]
    %v649 = vld [vmem:[#allocation2 + $0x78] sm:$0xff]
    %v650 = vmul.f32 %v537, %v329
    %v651 = vmul.f32 %v538, %v330
    %v652 = vmul.f32 %v539, %v331
    %v653 = vmul.f32 %v540, %v332
    %v654 = vmul.f32 %v541, %v333
    %v655 = vmul.f32 %v542, %v334
    %v656 = vmul.f32 %v543, %v335
    %v657 = vmul.f32 %v544, %v336
    %v658 = vmul.f32 %v545, %v337
    %v659 = vmul.f32 %v546, %v338
    %v660 = vmul.f32 %v547, %v339
    %v661 = vmul.f32 %v548, %v340
    %v662 = vmul.f32 %v549, %v341
    %v663 = vmul.f32 %v550, %v342
    %v664 = vmul.f32 %v551, %v343
    %v665 = vmul.f32 %v552, %v344
    %666 = vadd.xlane.f32.xlu0 %v650
    %v667 = vpop.xlane.xlu0 %666
    %668 = vadd.xlane.f32.xlu0 %v651
    %v669 = vpop.xlane.xlu0 %668
    %670 = vadd.xlane.f32.xlu0 %v652
    %v671 = vpop.xlane.xlu0 %670
    %672 = vadd.xlane.f32.xlu0 %v653
    %v673 = vpop.xlane.xlu0 %672
    %674 = vadd.xlane.f32.xlu0 %v654
    %v675 = vpop.xlane.xlu0 %674
    %676 = vadd.xlane.f32.xlu0 %v655
    %v677 = vpop.xlane.xlu0 %676
    %678 = vadd.xlane.f32.xlu0 %v656
    %v679 = vpop.xlane.xlu0 %678
    %680 = vadd.xlane.f32.xlu0 %v657
    %v681 = vpop.xlane.xlu0 %680
    %682 = vadd.xlane.f32.xlu0 %v658
    %v683 = vpop.xlane.xlu0 %682
    %684 = vadd.xlane.f32.xlu0 %v659
    %v685 = vpop.xlane.xlu0 %684
    %686 = vadd.xlane.f32.xlu0 %v660
    %v687 = vpop.xlane.xlu0 %686
    %688 = vadd.xlane.f32.xlu0 %v661
    %v689 = vpop.xlane.xlu0 %688
    %690 = vadd.xlane.f32.xlu0 %v662
    %v691 = vpop.xlane.xlu0 %690
    %692 = vadd.xlane.f32.xlu0 %v663
    %v693 = vpop.xlane.xlu0 %692
    %694 = vadd.xlane.f32.xlu0 %v664
    %v695 = vpop.xlane.xlu0 %694
    %696 = vadd.xlane.f32.xlu0 %v665
    %v697 = vpop.xlane.xlu0 %696
    %v698 = vadd.f32 %v634, %v667
    %v699 = vadd.f32 %v635, %v669
    %v700 = vadd.f32 %v636, %v671
    %v701 = vadd.f32 %v637, %v673
    %v702 = vadd.f32 %v638, %v675
    %v703 = vadd.f32 %v639, %v677
    %v704 = vadd.f32 %v640, %v679
    %v705 = vadd.f32 %v641, %v681
    %v706 = vadd.f32 %v642, %v683
    %v707 = vadd.f32 %v643, %v685
    %v708 = vadd.f32 %v644, %v687
    %v709 = vadd.f32 %v645, %v689
    %v710 = vadd.f32 %v646, %v691
    %v711 = vadd.f32 %v647, %v693
    %v712 = vadd.f32 %v648, %v695
    %v713 = vadd.f32 %v649, %v697
    %714 = vst.msk [vmem:[#allocation2] sm:$0xff] %vm617, %v698
    %715 = vst.msk [vmem:[#allocation2 + $0x8] sm:$0xff] %vm617, %v699
    %716 = vst.msk [vmem:[#allocation2 + $0x10] sm:$0xff] %vm617, %v700
    %717 = vst.msk [vmem:[#allocation2 + $0x18] sm:$0xff] %vm617, %v701
    %718 = vst.msk [vmem:[#allocation2 + $0x20] sm:$0xff] %vm617, %v702
    %719 = vst.msk [vmem:[#allocation2 + $0x28] sm:$0xff] %vm617, %v703
    %720 = vst.msk [vmem:[#allocation2 + $0x30] sm:$0xff] %vm617, %v704
    %721 = vst.msk [vmem:[#allocation2 + $0x38] sm:$0xff] %vm617, %v705
    %722 = vst.msk [vmem:[#allocation2 + $0x40] sm:$0xff] %vm617, %v706
    %723 = vst.msk [vmem:[#allocation2 + $0x48] sm:$0xff] %vm617, %v707
    %724 = vst.msk [vmem:[#allocation2 + $0x50] sm:$0xff] %vm617, %v708
    %725 = vst.msk [vmem:[#allocation2 + $0x58] sm:$0xff] %vm617, %v709
    %726 = vst.msk [vmem:[#allocation2 + $0x60] sm:$0xff] %vm617, %v710
    %727 = vst.msk [vmem:[#allocation2 + $0x68] sm:$0xff] %vm617, %v711
    %728 = vst.msk [vmem:[#allocation2 + $0x70] sm:$0xff] %vm617, %v712
    %729 = vst.msk [vmem:[#allocation2 + $0x78] sm:$0xff] %vm617, %v713
    %v730 = vld [vmem:[#allocation2] sm:$0xff]
    %v731 = vld [vmem:[#allocation2 + $0x8] sm:$0xff]
    %v732 = vld [vmem:[#allocation2 + $0x10] sm:$0xff]
    %v733 = vld [vmem:[#allocation2 + $0x18] sm:$0xff]
    %v734 = vld [vmem:[#allocation2 + $0x20] sm:$0xff]
    %v735 = vld [vmem:[#allocation2 + $0x28] sm:$0xff]
    %v736 = vld [vmem:[#allocation2 + $0x30] sm:$0xff]
    %v737 = vld [vmem:[#allocation2 + $0x38] sm:$0xff]
    %v738 = vld [vmem:[#allocation2 + $0x40] sm:$0xff]
    %v739 = vld [vmem:[#allocation2 + $0x48] sm:$0xff]
    %v740 = vld [vmem:[#allocation2 + $0x50] sm:$0xff]
    %v741 = vld [vmem:[#allocation2 + $0x58] sm:$0xff]
    %v742 = vld [vmem:[#allocation2 + $0x60] sm:$0xff]
    %v743 = vld [vmem:[#allocation2 + $0x68] sm:$0xff]
    %v744 = vld [vmem:[#allocation2 + $0x70] sm:$0xff]
    %v745 = vld [vmem:[#allocation2 + $0x78] sm:$0xff]
    %v746 = vld [vmem:[#allocation3] sm:$0xff]
    %v747 = vld [vmem:[#allocation3 + $0x8] sm:$0xff]
    %v748 = vld [vmem:[#allocation3 + $0x10] sm:$0xff]
    %v749 = vld [vmem:[#allocation3 + $0x18] sm:$0xff]
    %v750 = vld [vmem:[#allocation3 + $0x20] sm:$0xff]
    %v751 = vld [vmem:[#allocation3 + $0x28] sm:$0xff]
    %v752 = vld [vmem:[#allocation3 + $0x30] sm:$0xff]
    %v753 = vld [vmem:[#allocation3 + $0x38] sm:$0xff]
    %v754 = vld [vmem:[#allocation3 + $0x40] sm:$0xff]
    %v755 = vld [vmem:[#allocation3 + $0x48] sm:$0xff]
    %v756 = vld [vmem:[#allocation3 + $0x50] sm:$0xff]
    %v757 = vld [vmem:[#allocation3 + $0x58] sm:$0xff]
    %v758 = vld [vmem:[#allocation3 + $0x60] sm:$0xff]
    %v759 = vld [vmem:[#allocation3 + $0x68] sm:$0xff]
    %v760 = vld [vmem:[#allocation3 + $0x70] sm:$0xff]
    %v761 = vld [vmem:[#allocation3 + $0x78] sm:$0xff]
    %v762 = vadd.f32 %v746, 1e-08
    %v763 = vadd.f32 %v747, 1e-08
    %v764 = vadd.f32 %v748, 1e-08
    %v765 = vadd.f32 %v749, 1e-08
    %v766 = vadd.f32 %v750, 1e-08
    %v767 = vadd.f32 %v751, 1e-08
    %v768 = vadd.f32 %v752, 1e-08
    %v769 = vadd.f32 %v753, 1e-08
    %v770 = vadd.f32 %v754, 1e-08
    %v771 = vadd.f32 %v755, 1e-08
    %v772 = vadd.f32 %v756, 1e-08
    %v773 = vadd.f32 %v757, 1e-08
    %v774 = vadd.f32 %v758, 1e-08
    %v775 = vadd.f32 %v759, 1e-08
    %v776 = vadd.f32 %v760, 1e-08
    %v777 = vadd.f32 %v761, 1e-08
    %v778 = vrcp.pop %v762
    %v779 = vmul.f32 %v730, %v778
    %v780 = vrcp.pop %v763
    %v781 = vmul.f32 %v731, %v780
    %v782 = vrcp.pop %v764
    %v783 = vmul.f32 %v732, %v782
    %v784 = vrcp.pop %v765
    %v785 = vmul.f32 %v733, %v784
    %v786 = vrcp.pop %v766
    %v787 = vmul.f32 %v734, %v786
    %v788 = vrcp.pop %v767
    %v789 = vmul.f32 %v735, %v788
    %v790 = vrcp.pop %v768
    %v791 = vmul.f32 %v736, %v790
    %v792 = vrcp.pop %v769
    %v793 = vmul.f32 %v737, %v792
    %v794 = vrcp.pop %v770
    %v795 = vmul.f32 %v738, %v794
    %v796 = vrcp.pop %v771
    %v797 = vmul.f32 %v739, %v796
    %v798 = vrcp.pop %v772
    %v799 = vmul.f32 %v740, %v798
    %v800 = vrcp.pop %v773
    %v801 = vmul.f32 %v741, %v800
    %v802 = vrcp.pop %v774
    %v803 = vmul.f32 %v742, %v802
    %v804 = vrcp.pop %v775
    %v805 = vmul.f32 %v743, %v804
    %v806 = vrcp.pop %v776
    %v807 = vmul.f32 %v744, %v806
    %v808 = vrcp.pop %v777
    %v809 = vmul.f32 %v745, %v808
    %810 = vst.msk [vmem:[%s3] sm:$0xff] %vm617, %v779
    %811 = vst.msk [vmem:[%s3 + $0x8] sm:$0xff] %vm617, %v781
    %812 = vst.msk [vmem:[%s3 + $0x10] sm:$0xff] %vm617, %v783
    %813 = vst.msk [vmem:[%s3 + $0x18] sm:$0xff] %vm617, %v785
    %814 = vst.msk [vmem:[%s3 + $0x20] sm:$0xff] %vm617, %v787
    %815 = vst.msk [vmem:[%s3 + $0x28] sm:$0xff] %vm617, %v789
    %816 = vst.msk [vmem:[%s3 + $0x30] sm:$0xff] %vm617, %v791
    %817 = vst.msk [vmem:[%s3 + $0x38] sm:$0xff] %vm617, %v793
    %818 = vst.msk [vmem:[%s3 + $0x40] sm:$0xff] %vm617, %v795
    %819 = vst.msk [vmem:[%s3 + $0x48] sm:$0xff] %vm617, %v797
    %820 = vst.msk [vmem:[%s3 + $0x50] sm:$0xff] %vm617, %v799
    %821 = vst.msk [vmem:[%s3 + $0x58] sm:$0xff] %vm617, %v801
    %822 = vst.msk [vmem:[%s3 + $0x60] sm:$0xff] %vm617, %v803
    %823 = vst.msk [vmem:[%s3 + $0x68] sm:$0xff] %vm617, %v805
    %824 = vst.msk [vmem:[%s3 + $0x70] sm:$0xff] %vm617, %v807
    %825 = vst.msk [vmem:[%s3 + $0x78] sm:$0xff] %vm617, %v809
  $region25: #{_lambda_.3} parent=0 // pred_fallthru
    _
  // Predicated region
  $region26: #{_lambda_.3} parent=0 // pred_check
    _
  $region27: #{_lambda_.3} parent=0 // pred_check_branch
    %827 = sbr.rel (0) target = $region29
  $region28: #{_lambda_.3} parent=0 // pred_region
    _
  $region29: #{_lambda_.3} parent=0 // pred_fallthru
    _
  // Predicated region
  $region30: #{_lambda_.3} parent=0 // pred_check
    _
  $region31: #{_lambda_.3} parent=0 // pred_check_branch
    %829 = sbr.rel (0) target = $region33
  $region32: #{_lambda_.3} parent=0 // pred_region
    _
  $region33: #{_lambda_.3} parent=0 // pred_fallthru
    _

// kernel: _lambda_.2
$region0: #{_lambda_.2}
  #allocation0 [shape = 'u32[]', space=smem, size = 0x4, offset = 0x4, fixed_abs, tag = 'smem constant byte address 0x4 - core index']
  #allocation1 [shape = 'u32[144,128]{1,0:T(1,128)}', space=vmem, size = 0x12000, scoped, tag = 'internal scratch']
  #allocation2 [shape = 'f32[512,128]{1,0:T(8,128)}', space=vmem, size = 0x40000, scoped, tag = 'scratch operand']
  %s0 = inlined_call_operand.vmem [shape: s32[128,4], index: 0, kind: input, shape index: {}]
  %s1 = inlined_call_operand.vmem [shape: f32[128,128], index: 1, kind: input, shape index: {}]
  %s2 = inlined_call_operand.vmem [shape: bf16[128,128], index: 2, kind: input, shape index: {}]
  %s3 = inlined_call_operand.vmem [shape: f32[2,128], index: 3, kind: input, shape index: {}]
  %s4 = inlined_call_operand.vmem [shape: f32[128,128], index: 4, kind: input, shape index: {}]
  %s5 = inlined_call_operand.vmem [shape: f32[128,128], index: 5, kind: input, shape index: {}]
  %s6 = inlined_call_operand.vmem [shape: f32[1,128], index: 6, kind: input, shape index: {}]
  %s7 = inlined_call_operand.vmem [shape: f32[128,128], index: 7, kind: input, shape index: {}]
  %s8 = inlined_call_operand.vmem [shape: f32[1,128], index: 8, kind: input, shape index: {}]
  %s9 = inlined_call_operand.vmem [shape: bf16[128,128], index: 9, kind: output, shape index: {}]
  %s10 = sld [smem:[#allocation0]]
  $region58: #{_lambda_.2} parent=0
    _
  %s12 = ssub.s32 1, %s10
  %s13 = scalar_select 0, %s12, %s10
  // Predicated region
  $region2: #{_lambda_.2} parent=0 // pred_check
    _
  $region3: #{_lambda_.2} parent=0 // pred_check_branch
    %15 = sbr.rel (0) target = $region5
  $region4: #{_lambda_.2} parent=0 // pred_region
    _
  $region5: #{_lambda_.2} parent=0 // pred_fallthru
    _
  // Predicated region
  $region6: #{_lambda_.2} parent=0 // pred_check
    _
  $region7: #{_lambda_.2} parent=0 // pred_check_branch
    %17 = sbr.rel (0) target = $region9
  $region8: #{_lambda_.2} parent=0 // pred_region
    _
  $region9: #{_lambda_.2} parent=0 // pred_fallthru
    _
  // Predicated region
  $region10: #{_lambda_.2} parent=0 // pred_check
    _
  $region11: #{_lambda_.2} parent=0 // pred_check_branch
    %19 = sbr.rel (0) target = $region13
  $region12: #{_lambda_.2} parent=0 // pred_region
    _
  $region13: #{_lambda_.2} parent=0 // pred_fallthru
    _
  // Predicated region
  $region14: #{_lambda_.2} parent=0 // pred_check
    _
  $region15: #{_lambda_.2} parent=0 // pred_check_branch
    %21 = sbr.rel (0) target = $region17
  $region16: #{_lambda_.2} parent=0 // pred_region
    _
  $region17: #{_lambda_.2} parent=0 // pred_fallthru
    _
  // Predicated region
  $region18: #{_lambda_.2} parent=0 // pred_check
    _
  $region19: #{_lambda_.2} parent=0 // pred_check_branch
    %23 = sbr.rel (0) target = $region21
  $region20: #{_lambda_.2} parent=0 // pred_region
    _
  $region21: #{_lambda_.2} parent=0 // pred_fallthru
    _
  // Predicated region
  $region22: #{_lambda_.2} parent=0 // pred_check
    _
  $region23: #{_lambda_.2} parent=0 // pred_check_branch
    %25 = sbr.rel (0) target = $region25
  $region24: #{_lambda_.2} parent=0 // pred_region
    _
  $region25: #{_lambda_.2} parent=0 // pred_fallthru
    _
  // Predicated region
  $region26: #{_lambda_.2} parent=0 // pred_check
    _
  $region27: #{_lambda_.2} parent=0 // pred_check_branch
    %27 = sbr.rel (0) target = $region29
  $region28: #{_lambda_.2} parent=0 // pred_region
    _
  $region29: #{_lambda_.2} parent=0 // pred_fallthru
    _
  // Predicated region
  $region30: #{_lambda_.2} parent=0 // pred_check
    _
  $region31: #{_lambda_.2} parent=0 // pred_check_branch
    %29 = sbr.rel (0) target = $region33
  $region32: #{_lambda_.2} parent=0 // pred_region
    _
  $region33: #{_lambda_.2} parent=0 // pred_fallthru
    _
  // Predicated region
  $region34: #{_lambda_.2} parent=0 // pred_check
    _
  $region35: #{_lambda_.2} parent=0 // pred_check_branch
    %31 = sbr.rel (0) target = $region37
  $region36: #{_lambda_.2} parent=0 // pred_region
    _
  $region37: #{_lambda_.2} parent=0 // pred_fallthru
    _
  %v33 = vlaneseq
  %v34 = vand.u32 %v33, 127
  %s35 = smul.u32 0, 128
  %v36 = vstv %s35
  %v37 = vadd.s32 %v34, %v36
  %v38 = vld [vmem:[%s0] sm:$0xff]
  %v39 = vld [vmem:[%s0 + $0x8] sm:$0xff]
  %v40 = vld [vmem:[%s0 + $0x10] sm:$0xff]
  %v41 = vld [vmem:[%s0 + $0x18] sm:$0xff]
  %v42 = vld [vmem:[%s0 + $0x20] sm:$0xff]
  %v43 = vld [vmem:[%s0 + $0x28] sm:$0xff]
  %v44 = vld [vmem:[%s0 + $0x30] sm:$0xff]
  %v45 = vld [vmem:[%s0 + $0x38] sm:$0xff]
  %v46 = vld [vmem:[%s0 + $0x40] sm:$0xff]
  %v47 = vld [vmem:[%s0 + $0x48] sm:$0xff]
  %v48 = vld [vmem:[%s0 + $0x50] sm:$0xff]
  %v49 = vld [vmem:[%s0 + $0x58] sm:$0xff]
  %v50 = vld [vmem:[%s0 + $0x60] sm:$0xff]
  %v51 = vld [vmem:[%s0 + $0x68] sm:$0xff]
  %v52 = vld [vmem:[%s0 + $0x70] sm:$0xff]
  %v53 = vld [vmem:[%s0 + $0x78] sm:$0xff]
  %54 = vset.pattern.permute.xlu0 0
  %55 = vperm.xlu0 %54, %v38
  %v56 = vpop.permute.xlu0 %55
  %57 = vset.pattern.permute.xlu0 0
  %58 = vperm.xlu0 %57, %v39
  %v59 = vpop.permute.xlu0 %58
  %60 = vset.pattern.permute.xlu0 0
  %61 = vperm.xlu0 %60, %v40
  %v62 = vpop.permute.xlu0 %61
  %63 = vset.pattern.permute.xlu0 0
  %64 = vperm.xlu0 %63, %v41
  %v65 = vpop.permute.xlu0 %64
  %66 = vset.pattern.permute.xlu0 0
  %67 = vperm.xlu0 %66, %v42
  %v68 = vpop.permute.xlu0 %67
  %69 = vset.pattern.permute.xlu0 0
  %70 = vperm.xlu0 %69, %v43
  %v71 = vpop.permute.xlu0 %70
  %72 = vset.pattern.permute.xlu0 0
  %73 = vperm.xlu0 %72, %v44
  %v74 = vpop.permute.xlu0 %73
  %75 = vset.pattern.permute.xlu0 0
  %76 = vperm.xlu0 %75, %v45
  %v77 = vpop.permute.xlu0 %76
  %78 = vset.pattern.permute.xlu0 0
  %79 = vperm.xlu0 %78, %v46
  %v80 = vpop.permute.xlu0 %79
  %81 = vset.pattern.permute.xlu0 0
  %82 = vperm.xlu0 %81, %v47
  %v83 = vpop.permute.xlu0 %82
  %84 = vset.pattern.permute.xlu0 0
  %85 = vperm.xlu0 %84, %v48
  %v86 = vpop.permute.xlu0 %85
  %87 = vset.pattern.permute.xlu0 0
  %88 = vperm.xlu0 %87, %v49
  %v89 = vpop.permute.xlu0 %88
  %90 = vset.pattern.permute.xlu0 0
  %91 = vperm.xlu0 %90, %v50
  %v92 = vpop.permute.xlu0 %91
  %93 = vset.pattern.permute.xlu0 0
  %94 = vperm.xlu0 %93, %v51
  %v95 = vpop.permute.xlu0 %94
  %96 = vset.pattern.permute.xlu0 0
  %97 = vperm.xlu0 %96, %v52
  %v98 = vpop.permute.xlu0 %97
  %99 = vset.pattern.permute.xlu0 0
  %100 = vperm.xlu0 %99, %v53
  %v101 = vpop.permute.xlu0 %100
  %vm102 = vcmp.eq.s32.totalorder %v37, %v56
  %vm103 = vcmp.eq.s32.totalorder %v37, %v59
  %vm104 = vcmp.eq.s32.totalorder %v37, %v62
  %vm105 = vcmp.eq.s32.totalorder %v37, %v65
  %vm106 = vcmp.eq.s32.totalorder %v37, %v68
  %vm107 = vcmp.eq.s32.totalorder %v37, %v71
  %vm108 = vcmp.eq.s32.totalorder %v37, %v74
  %vm109 = vcmp.eq.s32.totalorder %v37, %v77
  %vm110 = vcmp.eq.s32.totalorder %v37, %v80
  %vm111 = vcmp.eq.s32.totalorder %v37, %v83
  %vm112 = vcmp.eq.s32.totalorder %v37, %v86
  %vm113 = vcmp.eq.s32.totalorder %v37, %v89
  %vm114 = vcmp.eq.s32.totalorder %v37, %v92
  %vm115 = vcmp.eq.s32.totalorder %v37, %v95
  %vm116 = vcmp.eq.s32.totalorder %v37, %v98
  %vm117 = vcmp.eq.s32.totalorder %v37, %v101
  %v118 = vsel %vm102, 1, 0
  %v119 = vsel %vm103, 1, 0
  %v120 = vsel %vm104, 1, 0
  %v121 = vsel %vm105, 1, 0
  %v122 = vsel %vm106, 1, 0
  %v123 = vsel %vm107, 1, 0
  %v124 = vsel %vm108, 1, 0
  %v125 = vsel %vm109, 1, 0
  %v126 = vsel %vm110, 1, 0
  %v127 = vsel %vm111, 1, 0
  %v128 = vsel %vm112, 1, 0
  %v129 = vsel %vm113, 1, 0
  %v130 = vsel %vm114, 1, 0
  %v131 = vsel %vm115, 1, 0
  %v132 = vsel %vm116, 1, 0
  %v133 = vsel %vm117, 1, 0
  %v134 = vcvt.s32.f32 %v118
  %v135 = vcvt.s32.f32 %v119
  %v136 = vcvt.s32.f32 %v120
  %v137 = vcvt.s32.f32 %v121
  %v138 = vcvt.s32.f32 %v122
  %v139 = vcvt.s32.f32 %v123
  %v140 = vcvt.s32.f32 %v124
  %v141 = vcvt.s32.f32 %v125
  %v142 = vcvt.s32.f32 %v126
  %v143 = vcvt.s32.f32 %v127
  %v144 = vcvt.s32.f32 %v128
  %v145 = vcvt.s32.f32 %v129
  %v146 = vcvt.s32.f32 %v130
  %v147 = vcvt.s32.f32 %v131
  %v148 = vcvt.s32.f32 %v132
  %v149 = vcvt.s32.f32 %v133
  %v150 = vpack.c.bf16 %v135, %v134
  %v151 = vpack.c.bf16 %v137, %v136
  %v152 = vpack.c.bf16 %v139, %v138
  %v153 = vpack.c.bf16 %v141, %v140
  %v154 = vpack.c.bf16 %v143, %v142
  %v155 = vpack.c.bf16 %v145, %v144
  %v156 = vpack.c.bf16 %v147, %v146
  %v157 = vpack.c.bf16 %v149, %v148
  %158 = vset.pattern.permute.xlu0 1
  %159 = vperm.xlu0 %158, %v38
  %v160 = vpop.permute.xlu0 %159
  %161 = vset.pattern.permute.xlu0 1
  %162 = vperm.xlu0 %161, %v39
  %v163 = vpop.permute.xlu0 %162
  %164 = vset.pattern.permute.xlu0 1
  %165 = vperm.xlu0 %164, %v40
  %v166 = vpop.permute.xlu0 %165
  %167 = vset.pattern.permute.xlu0 1
  %168 = vperm.xlu0 %167, %v41
  %v169 = vpop.permute.xlu0 %168
  %170 = vset.pattern.permute.xlu0 1
  %171 = vperm.xlu0 %170, %v42
  %v172 = vpop.permute.xlu0 %171
  %173 = vset.pattern.permute.xlu0 1
  %174 = vperm.xlu0 %173, %v43
  %v175 = vpop.permute.xlu0 %174
  %176 = vset.pattern.permute.xlu0 1
  %177 = vperm.xlu0 %176, %v44
  %v178 = vpop.permute.xlu0 %177
  %179 = vset.pattern.permute.xlu0 1
  %180 = vperm.xlu0 %179, %v45
  %v181 = vpop.permute.xlu0 %180
  %182 = vset.pattern.permute.xlu0 1
  %183 = vperm.xlu0 %182, %v46
  %v184 = vpop.permute.xlu0 %183
  %185 = vset.pattern.permute.xlu0 1
  %186 = vperm.xlu0 %185, %v47
  %v187 = vpop.permute.xlu0 %186
  %188 = vset.pattern.permute.xlu0 1
  %189 = vperm.xlu0 %188, %v48
  %v190 = vpop.permute.xlu0 %189
  %191 = vset.pattern.permute.xlu0 1
  %192 = vperm.xlu0 %191, %v49
  %v193 = vpop.permute.xlu0 %192
  %194 = vset.pattern.permute.xlu0 1
  %195 = vperm.xlu0 %194, %v50
  %v196 = vpop.permute.xlu0 %195
  %197 = vset.pattern.permute.xlu0 1
  %198 = vperm.xlu0 %197, %v51
  %v199 = vpop.permute.xlu0 %198
  %200 = vset.pattern.permute.xlu0 1
  %201 = vperm.xlu0 %200, %v52
  %v202 = vpop.permute.xlu0 %201
  %203 = vset.pattern.permute.xlu0 1
  %204 = vperm.xlu0 %203, %v53
  %v205 = vpop.permute.xlu0 %204
  %vm206 = vcmp.eq.s32.totalorder %v37, %v160
  %vm207 = vcmp.eq.s32.totalorder %v37, %v163
  %vm208 = vcmp.eq.s32.totalorder %v37, %v166
  %vm209 = vcmp.eq.s32.totalorder %v37, %v169
  %vm210 = vcmp.eq.s32.totalorder %v37, %v172
  %vm211 = vcmp.eq.s32.totalorder %v37, %v175
  %vm212 = vcmp.eq.s32.totalorder %v37, %v178
  %vm213 = vcmp.eq.s32.totalorder %v37, %v181
  %vm214 = vcmp.eq.s32.totalorder %v37, %v184
  %vm215 = vcmp.eq.s32.totalorder %v37, %v187
  %vm216 = vcmp.eq.s32.totalorder %v37, %v190
  %vm217 = vcmp.eq.s32.totalorder %v37, %v193
  %vm218 = vcmp.eq.s32.totalorder %v37, %v196
  %vm219 = vcmp.eq.s32.totalorder %v37, %v199
  %vm220 = vcmp.eq.s32.totalorder %v37, %v202
  %vm221 = vcmp.eq.s32.totalorder %v37, %v205
  %v222 = vsel %vm206, 1, 0
  %v223 = vsel %vm207, 1, 0
  %v224 = vsel %vm208, 1, 0
  %v225 = vsel %vm209, 1, 0
  %v226 = vsel %vm210, 1, 0
  %v227 = vsel %vm211, 1, 0
  %v228 = vsel %vm212, 1, 0
  %v229 = vsel %vm213, 1, 0
  %v230 = vsel %vm214, 1, 0
  %v231 = vsel %vm215, 1, 0
  %v232 = vsel %vm216, 1, 0
  %v233 = vsel %vm217, 1, 0
  %v234 = vsel %vm218, 1, 0
  %v235 = vsel %vm219, 1, 0
  %v236 = vsel %vm220, 1, 0
  %v237 = vsel %vm221, 1, 0
  %v238 = vcvt.s32.f32 %v222
  %v239 = vcvt.s32.f32 %v223
  %v240 = vcvt.s32.f32 %v224
  %v241 = vcvt.s32.f32 %v225
  %v242 = vcvt.s32.f32 %v226
  %v243 = vcvt.s32.f32 %v227
  %v244 = vcvt.s32.f32 %v228
  %v245 = vcvt.s32.f32 %v229
  %v246 = vcvt.s32.f32 %v230
  %v247 = vcvt.s32.f32 %v231
  %v248 = vcvt.s32.f32 %v232
  %v249 = vcvt.s32.f32 %v233
  %v250 = vcvt.s32.f32 %v234
  %v251 = vcvt.s32.f32 %v235
  %v252 = vcvt.s32.f32 %v236
  %v253 = vcvt.s32.f32 %v237
  %v254 = vpack.c.bf16 %v239, %v238
  %v255 = vpack.c.bf16 %v241, %v240
  %v256 = vpack.c.bf16 %v243, %v242
  %v257 = vpack.c.bf16 %v245, %v244
  %v258 = vpack.c.bf16 %v247, %v246
  %v259 = vpack.c.bf16 %v249, %v248
  %v260 = vpack.c.bf16 %v251, %v250
  %v261 = vpack.c.bf16 %v253, %v252
  %262 = vset.pattern.permute.xlu0 2
  %263 = vperm.xlu0 %262, %v38
  %v264 = vpop.permute.xlu0 %263
  %265 = vset.pattern.permute.xlu0 2
  %266 = vperm.xlu0 %265, %v39
  %v267 = vpop.permute.xlu0 %266
  %268 = vset.pattern.permute.xlu0 2
  %269 = vperm.xlu0 %268, %v40
  %v270 = vpop.permute.xlu0 %269
  %271 = vset.pattern.permute.xlu0 2
  %272 = vperm.xlu0 %271, %v41
  %v273 = vpop.permute.xlu0 %272
  %274 = vset.pattern.permute.xlu0 2
  %275 = vperm.xlu0 %274, %v42
  %v276 = vpop.permute.xlu0 %275
  %277 = vset.pattern.permute.xlu0 2
  %278 = vperm.xlu0 %277, %v43
  %v279 = vpop.permute.xlu0 %278
  %280 = vset.pattern.permute.xlu0 2
  %281 = vperm.xlu0 %280, %v44
  %v282 = vpop.permute.xlu0 %281
  %283 = vset.pattern.permute.xlu0 2
  %284 = vperm.xlu0 %283, %v45
  %v285 = vpop.permute.xlu0 %284
  %286 = vset.pattern.permute.xlu0 2
  %287 = vperm.xlu0 %286, %v46
  %v288 = vpop.permute.xlu0 %287
  %289 = vset.pattern.permute.xlu0 2
  %290 = vperm.xlu0 %289, %v47
  %v291 = vpop.permute.xlu0 %290
  %292 = vset.pattern.permute.xlu0 2
  %293 = vperm.xlu0 %292, %v48
  %v294 = vpop.permute.xlu0 %293
  %295 = vset.pattern.permute.xlu0 2
  %296 = vperm.xlu0 %295, %v49
  %v297 = vpop.permute.xlu0 %296
  %298 = vset.pattern.permute.xlu0 2
  %299 = vperm.xlu0 %298, %v50
  %v300 = vpop.permute.xlu0 %299
  %301 = vset.pattern.permute.xlu0 2
  %302 = vperm.xlu0 %301, %v51
  %v303 = vpop.permute.xlu0 %302
  %304 = vset.pattern.permute.xlu0 2
  %305 = vperm.xlu0 %304, %v52
  %v306 = vpop.permute.xlu0 %305
  %307 = vset.pattern.permute.xlu0 2
  %308 = vperm.xlu0 %307, %v53
  %v309 = vpop.permute.xlu0 %308
  %vm310 = vcmp.eq.s32.totalorder %v37, %v264
  %vm311 = vcmp.eq.s32.totalorder %v37, %v267
  %vm312 = vcmp.eq.s32.totalorder %v37, %v270
  %vm313 = vcmp.eq.s32.totalorder %v37, %v273
  %vm314 = vcmp.eq.s32.totalorder %v37, %v276
  %vm315 = vcmp.eq.s32.totalorder %v37, %v279
  %vm316 = vcmp.eq.s32.totalorder %v37, %v282
  %vm317 = vcmp.eq.s32.totalorder %v37, %v285
  %vm318 = vcmp.eq.s32.totalorder %v37, %v288
  %vm319 = vcmp.eq.s32.totalorder %v37, %v291
  %vm320 = vcmp.eq.s32.totalorder %v37, %v294
  %vm321 = vcmp.eq.s32.totalorder %v37, %v297
  %vm322 = vcmp.eq.s32.totalorder %v37, %v300
  %vm323 = vcmp.eq.s32.totalorder %v37, %v303
  %vm324 = vcmp.eq.s32.totalorder %v37, %v306
  %vm325 = vcmp.eq.s32.totalorder %v37, %v309
  %v326 = vsel %vm310, 1, 0
  %v327 = vsel %vm311, 1, 0
  %v328 = vsel %vm312, 1, 0
  %v329 = vsel %vm313, 1, 0
  %v330 = vsel %vm314, 1, 0
  %v331 = vsel %vm315, 1, 0
  %v332 = vsel %vm316, 1, 0
  %v333 = vsel %vm317, 1, 0
  %v334 = vsel %vm318, 1, 0
  %v335 = vsel %vm319, 1, 0
  %v336 = vsel %vm320, 1, 0
  %v337 = vsel %vm321, 1, 0
  %v338 = vsel %vm322, 1, 0
  %v339 = vsel %vm323, 1, 0
  %v340 = vsel %vm324, 1, 0
  %v341 = vsel %vm325, 1, 0
  %v342 = vcvt.s32.f32 %v326
  %v343 = vcvt.s32.f32 %v327
  %v344 = vcvt.s32.f32 %v328
  %v345 = vcvt.s32.f32 %v329
  %v346 = vcvt.s32.f32 %v330
  %v347 = vcvt.s32.f32 %v331
  %v348 = vcvt.s32.f32 %v332
  %v349 = vcvt.s32.f32 %v333
  %v350 = vcvt.s32.f32 %v334
  %v351 = vcvt.s32.f32 %v335
  %v352 = vcvt.s32.f32 %v336
  %v353 = vcvt.s32.f32 %v337
  %v354 = vcvt.s32.f32 %v338
  %v355 = vcvt.s32.f32 %v339
  %v356 = vcvt.s32.f32 %v340
  %v357 = vcvt.s32.f32 %v341
  %v358 = vpack.c.bf16 %v343, %v342
  %v359 = vpack.c.bf16 %v345, %v344
  %v360 = vpack.c.bf16 %v347, %v346
  %v361 = vpack.c.bf16 %v349, %v348
  %v362 = vpack.c.bf16 %v351, %v350
  %v363 = vpack.c.bf16 %v353, %v352
  %v364 = vpack.c.bf16 %v355, %v354
  %v365 = vpack.c.bf16 %v357, %v356
  %366 = vset.pattern.permute.xlu0 3
  %367 = vperm.xlu0 %366, %v38
  %v368 = vpop.permute.xlu0 %367
  %369 = vset.pattern.permute.xlu0 3
  %370 = vperm.xlu0 %369, %v39
  %v371 = vpop.permute.xlu0 %370
  %372 = vset.pattern.permute.xlu0 3
  %373 = vperm.xlu0 %372, %v40
  %v374 = vpop.permute.xlu0 %373
  %375 = vset.pattern.permute.xlu0 3
  %376 = vperm.xlu0 %375, %v41
  %v377 = vpop.permute.xlu0 %376
  %378 = vset.pattern.permute.xlu0 3
  %379 = vperm.xlu0 %378, %v42
  %v380 = vpop.permute.xlu0 %379
  %381 = vset.pattern.permute.xlu0 3
  %382 = vperm.xlu0 %381, %v43
  %v383 = vpop.permute.xlu0 %382
  %384 = vset.pattern.permute.xlu0 3
  %385 = vperm.xlu0 %384, %v44
  %v386 = vpop.permute.xlu0 %385
  %387 = vset.pattern.permute.xlu0 3
  %388 = vperm.xlu0 %387, %v45
  %v389 = vpop.permute.xlu0 %388
  %390 = vset.pattern.permute.xlu0 3
  %391 = vperm.xlu0 %390, %v46
  %v392 = vpop.permute.xlu0 %391
  %393 = vset.pattern.permute.xlu0 3
  %394 = vperm.xlu0 %393, %v47
  %v395 = vpop.permute.xlu0 %394
  %396 = vset.pattern.permute.xlu0 3
  %397 = vperm.xlu0 %396, %v48
  %v398 = vpop.permute.xlu0 %397
  %399 = vset.pattern.permute.xlu0 3
  %400 = vperm.xlu0 %399, %v49
  %v401 = vpop.permute.xlu0 %400
  %402 = vset.pattern.permute.xlu0 3
  %403 = vperm.xlu0 %402, %v50
  %v404 = vpop.permute.xlu0 %403
  %405 = vset.pattern.permute.xlu0 3
  %406 = vperm.xlu0 %405, %v51
  %v407 = vpop.permute.xlu0 %406
  %408 = vset.pattern.permute.xlu0 3
  %409 = vperm.xlu0 %408, %v52
  %v410 = vpop.permute.xlu0 %409
  %411 = vset.pattern.permute.xlu0 3
  %412 = vperm.xlu0 %411, %v53
  %v413 = vpop.permute.xlu0 %412
  %vm414 = vcmp.eq.s32.totalorder %v37, %v368
  %vm415 = vcmp.eq.s32.totalorder %v37, %v371
  %vm416 = vcmp.eq.s32.totalorder %v37, %v374
  %vm417 = vcmp.eq.s32.totalorder %v37, %v377
  %vm418 = vcmp.eq.s32.totalorder %v37, %v380
  %vm419 = vcmp.eq.s32.totalorder %v37, %v383
  %vm420 = vcmp.eq.s32.totalorder %v37, %v386
  %vm421 = vcmp.eq.s32.totalorder %v37, %v389
  %vm422 = vcmp.eq.s32.totalorder %v37, %v392
  %vm423 = vcmp.eq.s32.totalorder %v37, %v395
  %vm424 = vcmp.eq.s32.totalorder %v37, %v398
  %vm425 = vcmp.eq.s32.totalorder %v37, %v401
  %vm426 = vcmp.eq.s32.totalorder %v37, %v404
  %vm427 = vcmp.eq.s32.totalorder %v37, %v407
  %vm428 = vcmp.eq.s32.totalorder %v37, %v410
  %vm429 = vcmp.eq.s32.totalorder %v37, %v413
  %v430 = vsel %vm414, 1, 0
  %v431 = vsel %vm415, 1, 0
  %v432 = vsel %vm416, 1, 0
  %v433 = vsel %vm417, 1, 0
  %v434 = vsel %vm418, 1, 0
  %v435 = vsel %vm419, 1, 0
  %v436 = vsel %vm420, 1, 0
  %v437 = vsel %vm421, 1, 0
  %v438 = vsel %vm422, 1, 0
  %v439 = vsel %vm423, 1, 0
  %v440 = vsel %vm424, 1, 0
  %v441 = vsel %vm425, 1, 0
  %v442 = vsel %vm426, 1, 0
  %v443 = vsel %vm427, 1, 0
  %v444 = vsel %vm428, 1, 0
  %v445 = vsel %vm429, 1, 0
  %v446 = vcvt.s32.f32 %v430
  %v447 = vcvt.s32.f32 %v431
  %v448 = vcvt.s32.f32 %v432
  %v449 = vcvt.s32.f32 %v433
  %v450 = vcvt.s32.f32 %v434
  %v451 = vcvt.s32.f32 %v435
  %v452 = vcvt.s32.f32 %v436
  %v453 = vcvt.s32.f32 %v437
  %v454 = vcvt.s32.f32 %v438
  %v455 = vcvt.s32.f32 %v439
  %v456 = vcvt.s32.f32 %v440
  %v457 = vcvt.s32.f32 %v441
  %v458 = vcvt.s32.f32 %v442
  %v459 = vcvt.s32.f32 %v443
  %v460 = vcvt.s32.f32 %v444
  %v461 = vcvt.s32.f32 %v445
  %v462 = vpack.c.bf16 %v447, %v446
  %v463 = vpack.c.bf16 %v449, %v448
  %v464 = vpack.c.bf16 %v451, %v450
  %v465 = vpack.c.bf16 %v453, %v452
  %v466 = vpack.c.bf16 %v455, %v454
  %v467 = vpack.c.bf16 %v457, %v456
  %v468 = vpack.c.bf16 %v459, %v458
  %v469 = vpack.c.bf16 %v461, %v460
  %v470 = vld [vmem:[%s2] sm:$0xf]
  %v471 = vld [vmem:[%s2 + $0x4] sm:$0xf]
  %v472 = vld [vmem:[%s2 + $0x8] sm:$0xf]
  %v473 = vld [vmem:[%s2 + $0xc] sm:$0xf]
  %v474 = vld [vmem:[%s2 + $0x10] sm:$0xf]
  %v475 = vld [vmem:[%s2 + $0x14] sm:$0xf]
  %v476 = vld [vmem:[%s2 + $0x18] sm:$0xf]
  %v477 = vld [vmem:[%s2 + $0x1c] sm:$0xf]
  %v478 = vld [vmem:[%s2 + $0x20] sm:$0xf]
  %v479 = vld [vmem:[%s2 + $0x24] sm:$0xf]
  %v480 = vld [vmem:[%s2 + $0x28] sm:$0xf]
  %v481 = vld [vmem:[%s2 + $0x2c] sm:$0xf]
  %v482 = vld [vmem:[%s2 + $0x30] sm:$0xf]
  %v483 = vld [vmem:[%s2 + $0x34] sm:$0xf]
  %v484 = vld [vmem:[%s2 + $0x38] sm:$0xf]
  %v485 = vld [vmem:[%s2 + $0x3c] sm:$0xf]
  %v502 = vunpack.c.l.b16 %v470
  %v503 = vunpack.c.l.b16 %v471
  %v504 = vunpack.c.l.b16 %v472
  %v505 = vunpack.c.l.b16 %v473
  %v506 = vunpack.c.l.b16 %v474
  %v507 = vunpack.c.l.b16 %v475
  %v508 = vunpack.c.l.b16 %v476
  %v509 = vunpack.c.l.b16 %v477
  %v510 = vunpack.c.l.b16 %v478
  %v511 = vunpack.c.l.b16 %v479
  %v512 = vunpack.c.l.b16 %v480
  %v513 = vunpack.c.l.b16 %v481
  %v514 = vunpack.c.l.b16 %v482
  %v515 = vunpack.c.l.b16 %v483
  %v516 = vunpack.c.l.b16 %v484
  %v517 = vunpack.c.l.b16 %v485
  %v518 = vpack.c.b16 %v503, %v502
  %v519 = vpack.c.b16 %v505, %v504
  %v520 = vpack.c.b16 %v507, %v506
  %v521 = vpack.c.b16 %v509, %v508
  %v522 = vpack.c.b16 %v511, %v510
  %v523 = vpack.c.b16 %v513, %v512
  %v524 = vpack.c.b16 %v515, %v514
  %v525 = vpack.c.b16 %v517, %v516
  %534 = vmatprep.subr.bf16.mxu0 0
  %535 = vmatpush1.bf16.msra.mxu0 %v525
  %536 = vmatprep.subr.bf16.mxu0 0
  %537 = vmatpush1.bf16.msra.mxu0 %v524
  %538 = vmatprep.subr.bf16.mxu0 0
  %539 = vmatpush1.bf16.msra.mxu0 %v523
  %540 = vmatprep.subr.bf16.mxu0 0
  %541 = vmatpush1.bf16.msra.mxu0 %v522
  %542 = vmatprep.subr.bf16.mxu0 0
  %543 = vmatpush1.bf16.msra.mxu0 %v521
  %544 = vmatprep.subr.bf16.mxu0 0
  %545 = vmatpush1.bf16.msra.mxu0 %v520
  %546 = vmatprep.subr.bf16.mxu0 0
  %547 = vmatpush1.bf16.msra.mxu0 %v519
  %548 = vmatprep.subr.bf16.mxu0 0
  %549 = vmatpush1.bf16.msra.mxu0 %v518
  %550 = vmatprep.subr.bf16.mxu0 0
  %551 = vmatpush2.bf16.msra.mxu0 0
  %552 = vmatprep.subr.bf16.mxu0 0
  %553 = vmatpush2.bf16.msra.mxu0 0
  %554 = vmatprep.subr.bf16.mxu0 0
  %555 = vmatpush2.bf16.msra.mxu0 0
  %556 = vmatprep.subr.bf16.mxu0 0
  %557 = vmatpush2.bf16.msra.mxu0 0
  %558 = vmatprep.subr.bf16.mxu0 0
  %559 = vmatpush2.bf16.msra.mxu0 0
  %560 = vmatprep.subr.bf16.mxu0 0
  %561 = vmatpush2.bf16.msra.mxu0 0
  %562 = vmatprep.subr.bf16.mxu0 0
  %563 = vmatpush2.bf16.msra.mxu0 0
  %564 = vmatprep.subr.bf16.mxu0 0
  %565 = vmatpush2.bf16.msra.mxu0 0
  %566 = vmatprep.mubr.bf16.mxu0 0
  %567 = vmatmul.mubr.bf16.gmra.mxu0 %v150
  %v568 = vpop.f32.mrf.mxu0
  %v569 = vadd.f32 0.0, %v568
  %v570 = vpop.f32.mrf.mxu0
  %v571 = vpop.f32.mrf.mxu0
  %v572 = vadd.f32 0.0, %v571
  %v573 = vpop.f32.mrf.mxu0
  %574 = vmatprep.mubr.bf16.mxu0 0
  %575 = vmatmul.mubr.bf16.gmra.mxu0 %v151
  %v576 = vpop.f32.mrf.mxu0
  %v577 = vadd.f32 0.0, %v576
  %v578 = vpop.f32.mrf.mxu0
  %v579 = vpop.f32.mrf.mxu0
  %v580 = vadd.f32 0.0, %v579
  %v581 = vpop.f32.mrf.mxu0
  %582 = vmatprep.mubr.bf16.mxu0 0
  %583 = vmatmul.mubr.bf16.gmra.mxu0 %v152
  %v584 = vpop.f32.mrf.mxu0
  %v585 = vadd.f32 0.0, %v584
  %v586 = vpop.f32.mrf.mxu0
  %v587 = vpop.f32.mrf.mxu0
  %v588 = vadd.f32 0.0, %v587
  %v589 = vpop.f32.mrf.mxu0
  %590 = vmatprep.mubr.bf16.mxu0 0
  %591 = vmatmul.mubr.bf16.gmra.mxu0 %v153
  %v592 = vpop.f32.mrf.mxu0
  %v593 = vadd.f32 0.0, %v592
  %v594 = vpop.f32.mrf.mxu0
  %v595 = vpop.f32.mrf.mxu0
  %v596 = vadd.f32 0.0, %v595
  %v597 = vpop.f32.mrf.mxu0
  %598 = vmatprep.mubr.bf16.mxu0 0
  %599 = vmatmul.mubr.bf16.gmra.mxu0 %v154
  %v600 = vpop.f32.mrf.mxu0
  %v601 = vadd.f32 0.0, %v600
  %v602 = vpop.f32.mrf.mxu0
  %v603 = vpop.f32.mrf.mxu0
  %v604 = vadd.f32 0.0, %v603
  %v605 = vpop.f32.mrf.mxu0
  %606 = vmatprep.mubr.bf16.mxu0 0
  %607 = vmatmul.mubr.bf16.gmra.mxu0 %v155
  %v608 = vpop.f32.mrf.mxu0
  %v609 = vadd.f32 0.0, %v608
  %v610 = vpop.f32.mrf.mxu0
  %v611 = vpop.f32.mrf.mxu0
  %v612 = vadd.f32 0.0, %v611
  %v613 = vpop.f32.mrf.mxu0
  %614 = vmatprep.mubr.bf16.mxu0 0
  %615 = vmatmul.mubr.bf16.gmra.mxu0 %v156
  %v616 = vpop.f32.mrf.mxu0
  %v617 = vadd.f32 0.0, %v616
  %v618 = vpop.f32.mrf.mxu0
  %v619 = vpop.f32.mrf.mxu0
  %v620 = vadd.f32 0.0, %v619
  %v621 = vpop.f32.mrf.mxu0
  %622 = vmatprep.mubr.bf16.mxu0 0
  %623 = vmatmul.mubr.bf16.gmra.mxu0 %v157
  %v624 = vpop.f32.mrf.mxu0
  %v625 = vadd.f32 0.0, %v624
  %v626 = vpop.f32.mrf.mxu0
  %v627 = vpop.f32.mrf.mxu0
  %v628 = vadd.f32 0.0, %v627
  %v629 = vpop.f32.mrf.mxu0
  %630 = vmatprep.mubr.bf16.mxu0 0
  %631 = vmatmul.mubr.bf16.gmra.mxu0 %v254
  %v632 = vpop.f32.mrf.mxu0
  %v633 = vadd.f32 0.0, %v632
  %v634 = vpop.f32.mrf.mxu0
  %v635 = vpop.f32.mrf.mxu0
  %v636 = vadd.f32 0.0, %v635
  %v637 = vpop.f32.mrf.mxu0
  %638 = vmatprep.mubr.bf16.mxu0 0
  %639 = vmatmul.mubr.bf16.gmra.mxu0 %v255
  %v640 = vpop.f32.mrf.mxu0
  %v641 = vadd.f32 0.0, %v640
  %v642 = vpop.f32.mrf.mxu0
  %v643 = vpop.f32.mrf.mxu0
  %v644 = vadd.f32 0.0, %v643
  %v645 = vpop.f32.mrf.mxu0
  %646 = vmatprep.mubr.bf16.mxu0 0
  %647 = vmatmul.mubr.bf16.gmra.mxu0 %v256
  %v648 = vpop.f32.mrf.mxu0
  %v649 = vadd.f32 0.0, %v648
  %v650 = vpop.f32.mrf.mxu0
  %v651 = vpop.f32.mrf.mxu0
  %v652 = vadd.f32 0.0, %v651
  %v653 = vpop.f32.mrf.mxu0
  %654 = vmatprep.mubr.bf16.mxu0 0
  %655 = vmatmul.mubr.bf16.gmra.mxu0 %v257
  %v656 = vpop.f32.mrf.mxu0
  %v657 = vadd.f32 0.0, %v656
  %v658 = vpop.f32.mrf.mxu0
  %v659 = vpop.f32.mrf.mxu0
  %v660 = vadd.f32 0.0, %v659
  %v661 = vpop.f32.mrf.mxu0
  %662 = vmatprep.mubr.bf16.mxu0 0
  %663 = vmatmul.mubr.bf16.gmra.mxu0 %v258
  %v664 = vpop.f32.mrf.mxu0
  %v665 = vadd.f32 0.0, %v664
  %v666 = vpop.f32.mrf.mxu0
  %v667 = vpop.f32.mrf.mxu0
  %v668 = vadd.f32 0.0, %v667
  %v669 = vpop.f32.mrf.mxu0
  %670 = vmatprep.mubr.bf16.mxu0 0
  %671 = vmatmul.mubr.bf16.gmra.mxu0 %v259
  %v672 = vpop.f32.mrf.mxu0
  %v673 = vadd.f32 0.0, %v672
  %v674 = vpop.f32.mrf.mxu0
  %v675 = vpop.f32.mrf.mxu0
  %v676 = vadd.f32 0.0, %v675
  %v677 = vpop.f32.mrf.mxu0
  %678 = vmatprep.mubr.bf16.mxu0 0
  %679 = vmatmul.mubr.bf16.gmra.mxu0 %v260
  %v680 = vpop.f32.mrf.mxu0
  %v681 = vadd.f32 0.0, %v680
  %v682 = vpop.f32.mrf.mxu0
  %v683 = vpop.f32.mrf.mxu0
  %v684 = vadd.f32 0.0, %v683
  %v685 = vpop.f32.mrf.mxu0
  %686 = vmatprep.mubr.bf16.mxu0 0
  %687 = vmatmul.mubr.bf16.gmra.mxu0 %v261
  %v688 = vpop.f32.mrf.mxu0
  %v689 = vadd.f32 0.0, %v688
  %v690 = vpop.f32.mrf.mxu0
  %v691 = vpop.f32.mrf.mxu0
  %v692 = vadd.f32 0.0, %v691
  %v693 = vpop.f32.mrf.mxu0
  %694 = vmatprep.mubr.bf16.mxu0 0
  %695 = vmatmul.mubr.bf16.gmra.mxu0 %v358
  %v696 = vpop.f32.mrf.mxu0
  %v697 = vadd.f32 0.0, %v696
  %v698 = vpop.f32.mrf.mxu0
  %v699 = vpop.f32.mrf.mxu0
  %v700 = vadd.f32 0.0, %v699
  %v701 = vpop.f32.mrf.mxu0
  %702 = vmatprep.mubr.bf16.mxu0 0
  %703 = vmatmul.mubr.bf16.gmra.mxu0 %v359
  %v704 = vpop.f32.mrf.mxu0
  %v705 = vadd.f32 0.0, %v704
  %v706 = vpop.f32.mrf.mxu0
  %v707 = vpop.f32.mrf.mxu0
  %v708 = vadd.f32 0.0, %v707
  %v709 = vpop.f32.mrf.mxu0
  %710 = vmatprep.mubr.bf16.mxu0 0
  %711 = vmatmul.mubr.bf16.gmra.mxu0 %v360
  %v712 = vpop.f32.mrf.mxu0
  %v713 = vadd.f32 0.0, %v712
  %v714 = vpop.f32.mrf.mxu0
  %v715 = vpop.f32.mrf.mxu0
  %v716 = vadd.f32 0.0, %v715
  %v717 = vpop.f32.mrf.mxu0
  %718 = vmatprep.mubr.bf16.mxu0 0
  %719 = vmatmul.mubr.bf16.gmra.mxu0 %v361
  %v720 = vpop.f32.mrf.mxu0
  %v721 = vadd.f32 0.0, %v720
  %v722 = vpop.f32.mrf.mxu0
  %v723 = vpop.f32.mrf.mxu0
  %v724 = vadd.f32 0.0, %v723
  %v725 = vpop.f32.mrf.mxu0
  %726 = vmatprep.mubr.bf16.mxu0 0
  %727 = vmatmul.mubr.bf16.gmra.mxu0 %v362
  %v728 = vpop.f32.mrf.mxu0
  %v729 = vadd.f32 0.0, %v728
  %v730 = vpop.f32.mrf.mxu0
  %v731 = vpop.f32.mrf.mxu0
  %v732 = vadd.f32 0.0, %v731
  %v733 = vpop.f32.mrf.mxu0
  %734 = vmatprep.mubr.bf16.mxu0 0
  %735 = vmatmul.mubr.bf16.gmra.mxu0 %v363
  %v736 = vpop.f32.mrf.mxu0
  %v737 = vadd.f32 0.0, %v736
  %v738 = vpop.f32.mrf.mxu0
  %v739 = vpop.f32.mrf.mxu0
  %v740 = vadd.f32 0.0, %v739
  %v741 = vpop.f32.mrf.mxu0
  %742 = vmatprep.mubr.bf16.mxu0 0
  %743 = vmatmul.mubr.bf16.gmra.mxu0 %v364
  %v744 = vpop.f32.mrf.mxu0
  %v745 = vadd.f32 0.0, %v744
  %v746 = vpop.f32.mrf.mxu0
  %v747 = vpop.f32.mrf.mxu0
  %v748 = vadd.f32 0.0, %v747
  %v749 = vpop.f32.mrf.mxu0
  %750 = vmatprep.mubr.bf16.mxu0 0
  %751 = vmatmul.mubr.bf16.gmra.mxu0 %v365
  %v752 = vpop.f32.mrf.mxu0
  %v753 = vadd.f32 0.0, %v752
  %v754 = vpop.f32.mrf.mxu0
  %v755 = vpop.f32.mrf.mxu0
  %v756 = vadd.f32 0.0, %v755
  %v757 = vpop.f32.mrf.mxu0
  %758 = vmatprep.mubr.bf16.mxu0 0
  %759 = vmatmul.mubr.bf16.gmra.mxu0 %v462
  %v760 = vpop.f32.mrf.mxu0
  %v761 = vadd.f32 0.0, %v760
  %v762 = vpop.f32.mrf.mxu0
  %v763 = vpop.f32.mrf.mxu0
  %v764 = vadd.f32 0.0, %v763
  %v765 = vpop.f32.mrf.mxu0
  %766 = vmatprep.mubr.bf16.mxu0 0
  %767 = vmatmul.mubr.bf16.gmra.mxu0 %v463
  %v768 = vpop.f32.mrf.mxu0
  %v769 = vadd.f32 0.0, %v768
  %v770 = vpop.f32.mrf.mxu0
  %v771 = vpop.f32.mrf.mxu0
  %v772 = vadd.f32 0.0, %v771
  %v773 = vpop.f32.mrf.mxu0
  %774 = vmatprep.mubr.bf16.mxu0 0
  %775 = vmatmul.mubr.bf16.gmra.mxu0 %v464
  %v776 = vpop.f32.mrf.mxu0
  %v777 = vadd.f32 0.0, %v776
  %v778 = vpop.f32.mrf.mxu0
  %v779 = vpop.f32.mrf.mxu0
  %v780 = vadd.f32 0.0, %v779
  %v781 = vpop.f32.mrf.mxu0
  %782 = vmatprep.mubr.bf16.mxu0 0
  %783 = vmatmul.mubr.bf16.gmra.mxu0 %v465
  %v784 = vpop.f32.mrf.mxu0
  %v785 = vadd.f32 0.0, %v784
  %v786 = vpop.f32.mrf.mxu0
  %v787 = vpop.f32.mrf.mxu0
  %v788 = vadd.f32 0.0, %v787
  %v789 = vpop.f32.mrf.mxu0
  %790 = vmatprep.mubr.bf16.mxu0 0
  %791 = vmatmul.mubr.bf16.gmra.mxu0 %v466
  %v792 = vpop.f32.mrf.mxu0
  %v793 = vadd.f32 0.0, %v792
  %v794 = vpop.f32.mrf.mxu0
  %v795 = vpop.f32.mrf.mxu0
  %v796 = vadd.f32 0.0, %v795
  %v797 = vpop.f32.mrf.mxu0
  %798 = vmatprep.mubr.bf16.mxu0 0
  %799 = vmatmul.mubr.bf16.gmra.mxu0 %v467
  %v800 = vpop.f32.mrf.mxu0
  %v801 = vadd.f32 0.0, %v800
  %v802 = vpop.f32.mrf.mxu0
  %v803 = vpop.f32.mrf.mxu0
  %v804 = vadd.f32 0.0, %v803
  %v805 = vpop.f32.mrf.mxu0
  %806 = vmatprep.mubr.bf16.mxu0 0
  %807 = vmatmul.mubr.bf16.gmra.mxu0 %v468
  %v808 = vpop.f32.mrf.mxu0
  %v809 = vadd.f32 0.0, %v808
  %v810 = vpop.f32.mrf.mxu0
  %v811 = vpop.f32.mrf.mxu0
  %v812 = vadd.f32 0.0, %v811
  %v813 = vpop.f32.mrf.mxu0
  %814 = vmatprep.mubr.bf16.mxu0 0
  %815 = vmatmul.mubr.bf16.gmra.mxu0 %v469
  %v816 = vpop.f32.mrf.mxu0
  %v817 = vadd.f32 0.0, %v816
  %v818 = vpop.f32.mrf.mxu0
  %v819 = vpop.f32.mrf.mxu0
  %v820 = vadd.f32 0.0, %v819
  %v821 = vpop.f32.mrf.mxu0
  %822 = vdwg.mxu0
  %p823 = scmp.eq.s32.totalorder 0, 0
  // Predicated region
  $region38: #{_lambda_.2} parent=0 // pred_check
    %p824 = pneg %p823
  $region39: #{_lambda_.2} parent=0 // pred_check_branch
    %826 = sbr.rel (%p824) target = $region41
  $region40: #{_lambda_.2} parent=0 // pred_region
    %827 = vst [vmem:[#allocation2] sm:$0xff] %v569
    %828 = vst [vmem:[#allocation2 + $0x8] sm:$0xff] %v572
    %829 = vst [vmem:[#allocation2 + $0x10] sm:$0xff] %v577
    %830 = vst [vmem:[#allocation2 + $0x18] sm:$0xff] %v580
    %831 = vst [vmem:[#allocation2 + $0x20] sm:$0xff] %v585
    %832 = vst [vmem:[#allocation2 + $0x28] sm:$0xff] %v588
    %833 = vst [vmem:[#allocation2 + $0x30] sm:$0xff] %v593
    %834 = vst [vmem:[#allocation2 + $0x38] sm:$0xff] %v596
    %835 = vst [vmem:[#allocation2 + $0x40] sm:$0xff] %v601
    %836 = vst [vmem:[#allocation2 + $0x48] sm:$0xff] %v604
    %837 = vst [vmem:[#allocation2 + $0x50] sm:$0xff] %v609
    %838 = vst [vmem:[#allocation2 + $0x58] sm:$0xff] %v612
    %839 = vst [vmem:[#allocation2 + $0x60] sm:$0xff] %v617
    %840 = vst [vmem:[#allocation2 + $0x68] sm:$0xff] %v620
    %841 = vst [vmem:[#allocation2 + $0x70] sm:$0xff] %v625
    %842 = vst [vmem:[#allocation2 + $0x78] sm:$0xff] %v628
    %843 = vst [vmem:[#allocation2 + $0x80] sm:$0xff] %v633
    %844 = vst [vmem:[#allocation2 + $0x88] sm:$0xff] %v636
    %845 = vst [vmem:[#allocation2 + $0x90] sm:$0xff] %v641
    %846 = vst [vmem:[#allocation2 + $0x98] sm:$0xff] %v644
    %847 = vst [vmem:[#allocation2 + $0xa0] sm:$0xff] %v649
    %848 = vst [vmem:[#allocation2 + $0xa8] sm:$0xff] %v652
    %849 = vst [vmem:[#allocation2 + $0xb0] sm:$0xff] %v657
    %850 = vst [vmem:[#allocation2 + $0xb8] sm:$0xff] %v660
    %851 = vst [vmem:[#allocation2 + $0xc0] sm:$0xff] %v665
    %852 = vst [vmem:[#allocation2 + $0xc8] sm:$0xff] %v668
    %853 = vst [vmem:[#allocation2 + $0xd0] sm:$0xff] %v673
    %854 = vst [vmem:[#allocation2 + $0xd8] sm:$0xff] %v676
    %855 = vst [vmem:[#allocation2 + $0xe0] sm:$0xff] %v681
    %856 = vst [vmem:[#allocation2 + $0xe8] sm:$0xff] %v684
    %857 = vst [vmem:[#allocation2 + $0xf0] sm:$0xff] %v689
    %858 = vst [vmem:[#allocation2 + $0xf8] sm:$0xff] %v692
    %859 = vst [vmem:[#allocation2 + $0x100] sm:$0xff] %v697
    %860 = vst [vmem:[#allocation2 + $0x108] sm:$0xff] %v700
    %861 = vst [vmem:[#allocation2 + $0x110] sm:$0xff] %v705
    %862 = vst [vmem:[#allocation2 + $0x118] sm:$0xff] %v708
    %863 = vst [vmem:[#allocation2 + $0x120] sm:$0xff] %v713
    %864 = vst [vmem:[#allocation2 + $0x128] sm:$0xff] %v716
    %865 = vst [vmem:[#allocation2 + $0x130] sm:$0xff] %v721
    %866 = vst [vmem:[#allocation2 + $0x138] sm:$0xff] %v724
    %867 = vst [vmem:[#allocation2 + $0x140] sm:$0xff] %v729
    %868 = vst [vmem:[#allocation2 + $0x148] sm:$0xff] %v732
    %869 = vst [vmem:[#allocation2 + $0x150] sm:$0xff] %v737
    %870 = vst [vmem:[#allocation2 + $0x158] sm:$0xff] %v740
    %871 = vst [vmem:[#allocation2 + $0x160] sm:$0xff] %v745
    %872 = vst [vmem:[#allocation2 + $0x168] sm:$0xff] %v748
    %873 = vst [vmem:[#allocation2 + $0x170] sm:$0xff] %v753
    %874 = vst [vmem:[#allocation2 + $0x178] sm:$0xff] %v756
    %875 = vst [vmem:[#allocation2 + $0x180] sm:$0xff] %v761
    %876 = vst [vmem:[#allocation2 + $0x188] sm:$0xff] %v764
    %877 = vst [vmem:[#allocation2 + $0x190] sm:$0xff] %v769
    %878 = vst [vmem:[#allocation2 + $0x198] sm:$0xff] %v772
    %879 = vst [vmem:[#allocation2 + $0x1a0] sm:$0xff] %v777
    %880 = vst [vmem:[#allocation2 + $0x1a8] sm:$0xff] %v780
    %881 = vst [vmem:[#allocation2 + $0x1b0] sm:$0xff] %v785
    %882 = vst [vmem:[#allocation2 + $0x1b8] sm:$0xff] %v788
    %883 = vst [vmem:[#allocation2 + $0x1c0] sm:$0xff] %v793
    %884 = vst [vmem:[#allocation2 + $0x1c8] sm:$0xff] %v796
    %885 = vst [vmem:[#allocation2 + $0x1d0] sm:$0xff] %v801
    %886 = vst [vmem:[#allocation2 + $0x1d8] sm:$0xff] %v804
    %887 = vst [vmem:[#allocation2 + $0x1e0] sm:$0xff] %v809
    %888 = vst [vmem:[#allocation2 + $0x1e8] sm:$0xff] %v812
    %889 = vst [vmem:[#allocation2 + $0x1f0] sm:$0xff] %v817
    %890 = vst [vmem:[#allocation2 + $0x1f8] sm:$0xff] %v820
  $region41: #{_lambda_.2} parent=0 // pred_fallthru
    _
  %p891 = scmp.gt.s32.totalorder 0, 0
  // Predicated region
  $region42: #{_lambda_.2} parent=0 // pred_check
    %p892 = pneg %p891
  $region43: #{_lambda_.2} parent=0 // pred_check_branch
    %894 = sbr.rel (%p892) target = $region45
  $region44: #{_lambda_.2} parent=0 // pred_region
    %v895 = vld [vmem:[#allocation2] sm:$0xff]
    %v896 = vld [vmem:[#allocation2 + $0x8] sm:$0xff]
    %v897 = vld [vmem:[#allocation2 + $0x10] sm:$0xff]
    %v898 = vld [vmem:[#allocation2 + $0x18] sm:$0xff]
    %v899 = vld [vmem:[#allocation2 + $0x20] sm:$0xff]
    %v900 = vld [vmem:[#allocation2 + $0x28] sm:$0xff]
    %v901 = vld [vmem:[#allocation2 + $0x30] sm:$0xff]
    %v902 = vld [vmem:[#allocation2 + $0x38] sm:$0xff]
    %v903 = vld [vmem:[#allocation2 + $0x40] sm:$0xff]
    %v904 = vld [vmem:[#allocation2 + $0x48] sm:$0xff]
    %v905 = vld [vmem:[#allocation2 + $0x50] sm:$0xff]
    %v906 = vld [vmem:[#allocation2 + $0x58] sm:$0xff]
    %v907 = vld [vmem:[#allocation2 + $0x60] sm:$0xff]
    %v908 = vld [vmem:[#allocation2 + $0x68] sm:$0xff]
    %v909 = vld [vmem:[#allocation2 + $0x70] sm:$0xff]
    %v910 = vld [vmem:[#allocation2 + $0x78] sm:$0xff]
    %v911 = vld [vmem:[#allocation2 + $0x80] sm:$0xff]
    %v912 = vld [vmem:[#allocation2 + $0x88] sm:$0xff]
    %v913 = vld [vmem:[#allocation2 + $0x90] sm:$0xff]
    %v914 = vld [vmem:[#allocation2 + $0x98] sm:$0xff]
    %v915 = vld [vmem:[#allocation2 + $0xa0] sm:$0xff]
    %v916 = vld [vmem:[#allocation2 + $0xa8] sm:$0xff]
    %v917 = vld [vmem:[#allocation2 + $0xb0] sm:$0xff]
    %v918 = vld [vmem:[#allocation2 + $0xb8] sm:$0xff]
    %v919 = vld [vmem:[#allocation2 + $0xc0] sm:$0xff]
    %v920 = vld [vmem:[#allocation2 + $0xc8] sm:$0xff]
    %v921 = vld [vmem:[#allocation2 + $0xd0] sm:$0xff]
    %v922 = vld [vmem:[#allocation2 + $0xd8] sm:$0xff]
    %v923 = vld [vmem:[#allocation2 + $0xe0] sm:$0xff]
    %v924 = vld [vmem:[#allocation2 + $0xe8] sm:$0xff]
    %v925 = vld [vmem:[#allocation2 + $0xf0] sm:$0xff]
    %v926 = vld [vmem:[#allocation2 + $0xf8] sm:$0xff]
    %v927 = vld [vmem:[#allocation2 + $0x100] sm:$0xff]
    %v928 = vld [vmem:[#allocation2 + $0x108] sm:$0xff]
    %v929 = vld [vmem:[#allocation2 + $0x110] sm:$0xff]
    %v930 = vld [vmem:[#allocation2 + $0x118] sm:$0xff]
    %v931 = vld [vmem:[#allocation2 + $0x120] sm:$0xff]
    %v932 = vld [vmem:[#allocation2 + $0x128] sm:$0xff]
    %v933 = vld [vmem:[#allocation2 + $0x130] sm:$0xff]
    %v934 = vld [vmem:[#allocation2 + $0x138] sm:$0xff]
    %v935 = vld [vmem:[#allocation2 + $0x140] sm:$0xff]
    %v936 = vld [vmem:[#allocation2 + $0x148] sm:$0xff]
    %v937 = vld [vmem:[#allocation2 + $0x150] sm:$0xff]
    %v938 = vld [vmem:[#allocation2 + $0x158] sm:$0xff]
    %v939 = vld [vmem:[#allocation2 + $0x160] sm:$0xff]
    %v940 = vld [vmem:[#allocation2 + $0x168] sm:$0xff]
    %v941 = vld [vmem:[#allocation2 + $0x170] sm:$0xff]
    %v942 = vld [vmem:[#allocation2 + $0x178] sm:$0xff]
    %v943 = vld [vmem:[#allocation2 + $0x180] sm:$0xff]
    %v944 = vld [vmem:[#allocation2 + $0x188] sm:$0xff]
    %v945 = vld [vmem:[#allocation2 + $0x190] sm:$0xff]
    %v946 = vld [vmem:[#allocation2 + $0x198] sm:$0xff]
    %v947 = vld [vmem:[#allocation2 + $0x1a0] sm:$0xff]
    %v948 = vld [vmem:[#allocation2 + $0x1a8] sm:$0xff]
    %v949 = vld [vmem:[#allocation2 + $0x1b0] sm:$0xff]
    %v950 = vld [vmem:[#allocation2 + $0x1b8] sm:$0xff]
    %v951 = vld [vmem:[#allocation2 + $0x1c0] sm:$0xff]
    %v952 = vld [vmem:[#allocation2 + $0x1c8] sm:$0xff]
    %v953 = vld [vmem:[#allocation2 + $0x1d0] sm:$0xff]
    %v954 = vld [vmem:[#allocation2 + $0x1d8] sm:$0xff]
    %v955 = vld [vmem:[#allocation2 + $0x1e0] sm:$0xff]
    %v956 = vld [vmem:[#allocation2 + $0x1e8] sm:$0xff]
    %v957 = vld [vmem:[#allocation2 + $0x1f0] sm:$0xff]
    %v958 = vld [vmem:[#allocation2 + $0x1f8] sm:$0xff]
    %v959 = vadd.f32 %v895, %v569
    %v960 = vadd.f32 %v896, %v572
    %v961 = vadd.f32 %v897, %v577
    %v962 = vadd.f32 %v898, %v580
    %v963 = vadd.f32 %v899, %v585
    %v964 = vadd.f32 %v900, %v588
    %v965 = vadd.f32 %v901, %v593
    %v966 = vadd.f32 %v902, %v596
    %v967 = vadd.f32 %v903, %v601
    %v968 = vadd.f32 %v904, %v604
    %v969 = vadd.f32 %v905, %v609
    %v970 = vadd.f32 %v906, %v612
    %v971 = vadd.f32 %v907, %v617
    %v972 = vadd.f32 %v908, %v620
    %v973 = vadd.f32 %v909, %v625
    %v974 = vadd.f32 %v910, %v628
    %v975 = vadd.f32 %v911, %v633
    %v976 = vadd.f32 %v912, %v636
    %v977 = vadd.f32 %v913, %v641
    %v978 = vadd.f32 %v914, %v644
    %v979 = vadd.f32 %v915, %v649
    %v980 = vadd.f32 %v916, %v652
    %v981 = vadd.f32 %v917, %v657
    %v982 = vadd.f32 %v918, %v660
    %v983 = vadd.f32 %v919, %v665
    %v984 = vadd.f32 %v920, %v668
    %v985 = vadd.f32 %v921, %v673
    %v986 = vadd.f32 %v922, %v676
    %v987 = vadd.f32 %v923, %v681
    %v988 = vadd.f32 %v924, %v684
    %v989 = vadd.f32 %v925, %v689
    %v990 = vadd.f32 %v926, %v692
    %v991 = vadd.f32 %v927, %v697
    %v992 = vadd.f32 %v928, %v700
    %v993 = vadd.f32 %v929, %v705
    %v994 = vadd.f32 %v930, %v708
    %v995 = vadd.f32 %v931, %v713
    %v996 = vadd.f32 %v932, %v716
    %v997 = vadd.f32 %v933, %v721
    %v998 = vadd.f32 %v934, %v724
    %v999 = vadd.f32 %v935, %v729
    %v1000 = vadd.f32 %v936, %v732
    %v1001 = vadd.f32 %v937, %v737
    %v1002 = vadd.f32 %v938, %v740
    %v1003 = vadd.f32 %v939, %v745
    %v1004 = vadd.f32 %v940, %v748
    %v1005 = vadd.f32 %v941, %v753
    %v1006 = vadd.f32 %v942, %v756
    %v1007 = vadd.f32 %v943, %v761
    %v1008 = vadd.f32 %v944, %v764
    %v1009 = vadd.f32 %v945, %v769
    %v1010 = vadd.f32 %v946, %v772
    %v1011 = vadd.f32 %v947, %v777
    %v1012 = vadd.f32 %v948, %v780
    %v1013 = vadd.f32 %v949, %v785
    %v1014 = vadd.f32 %v950, %v788
    %v1015 = vadd.f32 %v951, %v793
    %v1016 = vadd.f32 %v952, %v796
    %v1017 = vadd.f32 %v953, %v801
    %v1018 = vadd.f32 %v954, %v804
    %v1019 = vadd.f32 %v955, %v809
    %v1020 = vadd.f32 %v956, %v812
    %v1021 = vadd.f32 %v957, %v817
    %v1022 = vadd.f32 %v958, %v820
    %1023 = vst [vmem:[#allocation2] sm:$0xff] %v959
    %1024 = vst [vmem:[#allocation2 + $0x8] sm:$0xff] %v960
    %1025 = vst [vmem:[#allocation2 + $0x10] sm:$0xff] %v961
    %1026 = vst [vmem:[#allocation2 + $0x18] sm:$0xff] %v962
    %1027 = vst [vmem:[#allocation2 + $0x20] sm:$0xff] %v963
    %1028 = vst [vmem:[#allocation2 + $0x28] sm:$0xff] %v964
    %1029 = vst [vmem:[#allocation2 + $0x30] sm:$0xff] %v965
    %1030 = vst [vmem:[#allocation2 + $0x38] sm:$0xff] %v966
    %1031 = vst [vmem:[#allocation2 + $0x40] sm:$0xff] %v967
    %1032 = vst [vmem:[#allocation2 + $0x48] sm:$0xff] %v968
    %1033 = vst [vmem:[#allocation2 + $0x50] sm:$0xff] %v969
    %1034 = vst [vmem:[#allocation2 + $0x58] sm:$0xff] %v970
    %1035 = vst [vmem:[#allocation2 + $0x60] sm:$0xff] %v971
    %1036 = vst [vmem:[#allocation2 + $0x68] sm:$0xff] %v972
    %1037 = vst [vmem:[#allocation2 + $0x70] sm:$0xff] %v973
    %1038 = vst [vmem:[#allocation2 + $0x78] sm:$0xff] %v974
    %1039 = vst [vmem:[#allocation2 + $0x80] sm:$0xff] %v975
    %1040 = vst [vmem:[#allocation2 + $0x88] sm:$0xff] %v976
    %1041 = vst [vmem:[#allocation2 + $0x90] sm:$0xff] %v977
    %1042 = vst [vmem:[#allocation2 + $0x98] sm:$0xff] %v978
    %1043 = vst [vmem:[#allocation2 + $0xa0] sm:$0xff] %v979
    %1044 = vst [vmem:[#allocation2 + $0xa8] sm:$0xff] %v980
    %1045 = vst [vmem:[#allocation2 + $0xb0] sm:$0xff] %v981
    %1046 = vst [vmem:[#allocation2 + $0xb8] sm:$0xff] %v982
    %1047 = vst [vmem:[#allocation2 + $0xc0] sm:$0xff] %v983
    %1048 = vst [vmem:[#allocation2 + $0xc8] sm:$0xff] %v984
    %1049 = vst [vmem:[#allocation2 + $0xd0] sm:$0xff] %v985
    %1050 = vst [vmem:[#allocation2 + $0xd8] sm:$0xff] %v986
    %1051 = vst [vmem:[#allocation2 + $0xe0] sm:$0xff] %v987
    %1052 = vst [vmem:[#allocation2 + $0xe8] sm:$0xff] %v988
    %1053 = vst [vmem:[#allocation2 + $0xf0] sm:$0xff] %v989
    %1054 = vst [vmem:[#allocation2 + $0xf8] sm:$0xff] %v990
    %1055 = vst [vmem:[#allocation2 + $0x100] sm:$0xff] %v991
    %1056 = vst [vmem:[#allocation2 + $0x108] sm:$0xff] %v992
    %1057 = vst [vmem:[#allocation2 + $0x110] sm:$0xff] %v993
    %1058 = vst [vmem:[#allocation2 + $0x118] sm:$0xff] %v994
    %1059 = vst [vmem:[#allocation2 + $0x120] sm:$0xff] %v995
    %1060 = vst [vmem:[#allocation2 + $0x128] sm:$0xff] %v996
    %1061 = vst [vmem:[#allocation2 + $0x130] sm:$0xff] %v997
    %1062 = vst [vmem:[#allocation2 + $0x138] sm:$0xff] %v998
    %1063 = vst [vmem:[#allocation2 + $0x140] sm:$0xff] %v999
    %1064 = vst [vmem:[#allocation2 + $0x148] sm:$0xff] %v1000
    %1065 = vst [vmem:[#allocation2 + $0x150] sm:$0xff] %v1001
    %1066 = vst [vmem:[#allocation2 + $0x158] sm:$0xff] %v1002
    %1067 = vst [vmem:[#allocation2 + $0x160] sm:$0xff] %v1003
    %1068 = vst [vmem:[#allocation2 + $0x168] sm:$0xff] %v1004
    %1069 = vst [vmem:[#allocation2 + $0x170] sm:$0xff] %v1005
    %1070 = vst [vmem:[#allocation2 + $0x178] sm:$0xff] %v1006
    %1071 = vst [vmem:[#allocation2 + $0x180] sm:$0xff] %v1007
    %1072 = vst [vmem:[#allocation2 + $0x188] sm:$0xff] %v1008
    %1073 = vst [vmem:[#allocation2 + $0x190] sm:$0xff] %v1009
    %1074 = vst [vmem:[#allocation2 + $0x198] sm:$0xff] %v1010
    %1075 = vst [vmem:[#allocation2 + $0x1a0] sm:$0xff] %v1011
    %1076 = vst [vmem:[#allocation2 + $0x1a8] sm:$0xff] %v1012
    %1077 = vst [vmem:[#allocation2 + $0x1b0] sm:$0xff] %v1013
    %1078 = vst [vmem:[#allocation2 + $0x1b8] sm:$0xff] %v1014
    %1079 = vst [vmem:[#allocation2 + $0x1c0] sm:$0xff] %v1015
    %1080 = vst [vmem:[#allocation2 + $0x1c8] sm:$0xff] %v1016
    %1081 = vst [vmem:[#allocation2 + $0x1d0] sm:$0xff] %v1017
    %1082 = vst [vmem:[#allocation2 + $0x1d8] sm:$0xff] %v1018
    %1083 = vst [vmem:[#allocation2 + $0x1e0] sm:$0xff] %v1019
    %1084 = vst [vmem:[#allocation2 + $0x1e8] sm:$0xff] %v1020
    %1085 = vst [vmem:[#allocation2 + $0x1f0] sm:$0xff] %v1021
    %1086 = vst [vmem:[#allocation2 + $0x1f8] sm:$0xff] %v1022
  $region45: #{_lambda_.2} parent=0 // pred_fallthru
    _
  // Predicated region
  $region46: #{_lambda_.2} parent=0 // pred_check
    %p1087 = pneg %p823
  $region47: #{_lambda_.2} parent=0 // pred_check_branch
    %1089 = sbr.rel (%p1087) target = $region49
  $region48: #{_lambda_.2} parent=0 // pred_region
    %v1090 = vld [vmem:[%s1] sm:$0xff]
    %v1091 = vld [vmem:[%s1 + $0x8] sm:$0xff]
    %v1092 = vld [vmem:[%s1 + $0x10] sm:$0xff]
    %v1093 = vld [vmem:[%s1 + $0x18] sm:$0xff]
    %v1094 = vld [vmem:[%s1 + $0x20] sm:$0xff]
    %v1095 = vld [vmem:[%s1 + $0x28] sm:$0xff]
    %v1096 = vld [vmem:[%s1 + $0x30] sm:$0xff]
    %v1097 = vld [vmem:[%s1 + $0x38] sm:$0xff]
    %v1098 = vld [vmem:[%s1 + $0x40] sm:$0xff]
    %v1099 = vld [vmem:[%s1 + $0x48] sm:$0xff]
    %v1100 = vld [vmem:[%s1 + $0x50] sm:$0xff]
    %v1101 = vld [vmem:[%s1 + $0x58] sm:$0xff]
    %v1102 = vld [vmem:[%s1 + $0x60] sm:$0xff]
    %v1103 = vld [vmem:[%s1 + $0x68] sm:$0xff]
    %v1104 = vld [vmem:[%s1 + $0x70] sm:$0xff]
    %v1105 = vld [vmem:[%s1 + $0x78] sm:$0xff]
    %v1106 = vld [vmem:[%s3] sm:$0x1]
    %v1107 = vld [vmem:[%s3 + $0x1] sm:$0x1]
    %v1108 = vlaneseq
    %v1109 = vshrl.u32 %v1108, 7
    %v1110 = vsub.s32 0, %v1109
    %v1111 = vrot.slane %v1106, %v1110
    %v1112 = vmul.f32 %v1111, %v1090
    %v1113 = vmul.f32 %v1111, %v1091
    %v1114 = vmul.f32 %v1111, %v1092
    %v1115 = vmul.f32 %v1111, %v1093
    %v1116 = vmul.f32 %v1111, %v1094
    %v1117 = vmul.f32 %v1111, %v1095
    %v1118 = vmul.f32 %v1111, %v1096
    %v1119 = vmul.f32 %v1111, %v1097
    %v1120 = vmul.f32 %v1111, %v1098
    %v1121 = vmul.f32 %v1111, %v1099
    %v1122 = vmul.f32 %v1111, %v1100
    %v1123 = vmul.f32 %v1111, %v1101
    %v1124 = vmul.f32 %v1111, %v1102
    %v1125 = vmul.f32 %v1111, %v1103
    %v1126 = vmul.f32 %v1111, %v1104
    %v1127 = vmul.f32 %v1111, %v1105
    %v1128 = vld [vmem:[#allocation2] sm:$0xff]
    %v1129 = vld [vmem:[#allocation2 + $0x8] sm:$0xff]
    %v1130 = vld [vmem:[#allocation2 + $0x10] sm:$0xff]
    %v1131 = vld [vmem:[#allocation2 + $0x18] sm:$0xff]
    %v1132 = vld [vmem:[#allocation2 + $0x20] sm:$0xff]
    %v1133 = vld [vmem:[#allocation2 + $0x28] sm:$0xff]
    %v1134 = vld [vmem:[#allocation2 + $0x30] sm:$0xff]
    %v1135 = vld [vmem:[#allocation2 + $0x38] sm:$0xff]
    %v1136 = vld [vmem:[#allocation2 + $0x40] sm:$0xff]
    %v1137 = vld [vmem:[#allocation2 + $0x48] sm:$0xff]
    %v1138 = vld [vmem:[#allocation2 + $0x50] sm:$0xff]
    %v1139 = vld [vmem:[#allocation2 + $0x58] sm:$0xff]
    %v1140 = vld [vmem:[#allocation2 + $0x60] sm:$0xff]
    %v1141 = vld [vmem:[#allocation2 + $0x68] sm:$0xff]
    %v1142 = vld [vmem:[#allocation2 + $0x70] sm:$0xff]
    %v1143 = vld [vmem:[#allocation2 + $0x78] sm:$0xff]
    %v1144 = vlaneseq
    %v1145 = vshrl.u32 %v1144, 7
    %v1146 = vsub.s32 0, %v1145
    %v1147 = vrot.slane %v1107, %v1146
    %v1148 = vmul.f32 %v1147, %v1128
    %v1149 = vmul.f32 %v1147, %v1129
    %v1150 = vmul.f32 %v1147, %v1130
    %v1151 = vmul.f32 %v1147, %v1131
    %v1152 = vmul.f32 %v1147, %v1132
    %v1153 = vmul.f32 %v1147, %v1133
    %v1154 = vmul.f32 %v1147, %v1134
    %v1155 = vmul.f32 %v1147, %v1135
    %v1156 = vmul.f32 %v1147, %v1136
    %v1157 = vmul.f32 %v1147, %v1137
    %v1158 = vmul.f32 %v1147, %v1138
    %v1159 = vmul.f32 %v1147, %v1139
    %v1160 = vmul.f32 %v1147, %v1140
    %v1161 = vmul.f32 %v1147, %v1141
    %v1162 = vmul.f32 %v1147, %v1142
    %v1163 = vmul.f32 %v1147, %v1143
    %v1164 = vadd.f32 %v1112, %v1148
    %v1165 = vadd.f32 %v1113, %v1149
    %v1166 = vadd.f32 %v1114, %v1150
    %v1167 = vadd.f32 %v1115, %v1151
    %v1168 = vadd.f32 %v1116, %v1152
    %v1169 = vadd.f32 %v1117, %v1153
    %v1170 = vadd.f32 %v1118, %v1154
    %v1171 = vadd.f32 %v1119, %v1155
    %v1172 = vadd.f32 %v1120, %v1156
    %v1173 = vadd.f32 %v1121, %v1157
    %v1174 = vadd.f32 %v1122, %v1158
    %v1175 = vadd.f32 %v1123, %v1159
    %v1176 = vadd.f32 %v1124, %v1160
    %v1177 = vadd.f32 %v1125, %v1161
    %v1178 = vadd.f32 %v1126, %v1162
    %v1179 = vadd.f32 %v1127, %v1163
    %vm1180 = vcmp.gt.f32.partialorder %v1164, 0.0
    %vm1181 = vcmp.gt.f32.partialorder %v1165, 0.0
    %vm1182 = vcmp.gt.f32.partialorder %v1166, 0.0
    %vm1183 = vcmp.gt.f32.partialorder %v1167, 0.0
    %vm1184 = vcmp.gt.f32.partialorder %v1168, 0.0
    %vm1185 = vcmp.gt.f32.partialorder %v1169, 0.0
    %vm1186 = vcmp.gt.f32.partialorder %v1170, 0.0
    %vm1187 = vcmp.gt.f32.partialorder %v1171, 0.0
    %vm1188 = vcmp.gt.f32.partialorder %v1172, 0.0
    %vm1189 = vcmp.gt.f32.partialorder %v1173, 0.0
    %vm1190 = vcmp.gt.f32.partialorder %v1174, 0.0
    %vm1191 = vcmp.gt.f32.partialorder %v1175, 0.0
    %vm1192 = vcmp.gt.f32.partialorder %v1176, 0.0
    %vm1193 = vcmp.gt.f32.partialorder %v1177, 0.0
    %vm1194 = vcmp.gt.f32.partialorder %v1178, 0.0
    %vm1195 = vcmp.gt.f32.partialorder %v1179, 0.0
    %v1196 = vmul.f32 %v1164, 0.01
    %v1197 = vmul.f32 %v1165, 0.01
    %v1198 = vmul.f32 %v1166, 0.01
    %v1199 = vmul.f32 %v1167, 0.01
    %v1200 = vmul.f32 %v1168, 0.01
    %v1201 = vmul.f32 %v1169, 0.01
    %v1202 = vmul.f32 %v1170, 0.01
    %v1203 = vmul.f32 %v1171, 0.01
    %v1204 = vmul.f32 %v1172, 0.01
    %v1205 = vmul.f32 %v1173, 0.01
    %v1206 = vmul.f32 %v1174, 0.01
    %v1207 = vmul.f32 %v1175, 0.01
    %v1208 = vmul.f32 %v1176, 0.01
    %v1209 = vmul.f32 %v1177, 0.01
    %v1210 = vmul.f32 %v1178, 0.01
    %v1211 = vmul.f32 %v1179, 0.01
    %v1212 = vsel %vm1180, %v1164, %v1196
    %v1213 = vsel %vm1181, %v1165, %v1197
    %v1214 = vsel %vm1182, %v1166, %v1198
    %v1215 = vsel %vm1183, %v1167, %v1199
    %v1216 = vsel %vm1184, %v1168, %v1200
    %v1217 = vsel %vm1185, %v1169, %v1201
    %v1218 = vsel %vm1186, %v1170, %v1202
    %v1219 = vsel %vm1187, %v1171, %v1203
    %v1220 = vsel %vm1188, %v1172, %v1204
    %v1221 = vsel %vm1189, %v1173, %v1205
    %v1222 = vsel %vm1190, %v1174, %v1206
    %v1223 = vsel %vm1191, %v1175, %v1207
    %v1224 = vsel %vm1192, %v1176, %v1208
    %v1225 = vsel %vm1193, %v1177, %v1209
    %v1226 = vsel %vm1194, %v1178, %v1210
    %v1227 = vsel %vm1195, %v1179, %v1211
    %v1228 = vld [vmem:[#allocation2 + $0x80] sm:$0xff]
    %v1229 = vld [vmem:[#allocation2 + $0x88] sm:$0xff]
    %v1230 = vld [vmem:[#allocation2 + $0x90] sm:$0xff]
    %v1231 = vld [vmem:[#allocation2 + $0x98] sm:$0xff]
    %v1232 = vld [vmem:[#allocation2 + $0xa0] sm:$0xff]
    %v1233 = vld [vmem:[#allocation2 + $0xa8] sm:$0xff]
    %v1234 = vld [vmem:[#allocation2 + $0xb0] sm:$0xff]
    %v1235 = vld [vmem:[#allocation2 + $0xb8] sm:$0xff]
    %v1236 = vld [vmem:[#allocation2 + $0xc0] sm:$0xff]
    %v1237 = vld [vmem:[#allocation2 + $0xc8] sm:$0xff]
    %v1238 = vld [vmem:[#allocation2 + $0xd0] sm:$0xff]
    %v1239 = vld [vmem:[#allocation2 + $0xd8] sm:$0xff]
    %v1240 = vld [vmem:[#allocation2 + $0xe0] sm:$0xff]
    %v1241 = vld [vmem:[#allocation2 + $0xe8] sm:$0xff]
    %v1242 = vld [vmem:[#allocation2 + $0xf0] sm:$0xff]
    %v1243 = vld [vmem:[#allocation2 + $0xf8] sm:$0xff]
    %v1244 = vmul.f32 %v1147, %v1228
    %v1245 = vmul.f32 %v1147, %v1229
    %v1246 = vmul.f32 %v1147, %v1230
    %v1247 = vmul.f32 %v1147, %v1231
    %v1248 = vmul.f32 %v1147, %v1232
    %v1249 = vmul.f32 %v1147, %v1233
    %v1250 = vmul.f32 %v1147, %v1234
    %v1251 = vmul.f32 %v1147, %v1235
    %v1252 = vmul.f32 %v1147, %v1236
    %v1253 = vmul.f32 %v1147, %v1237
    %v1254 = vmul.f32 %v1147, %v1238
    %v1255 = vmul.f32 %v1147, %v1239
    %v1256 = vmul.f32 %v1147, %v1240
    %v1257 = vmul.f32 %v1147, %v1241
    %v1258 = vmul.f32 %v1147, %v1242
    %v1259 = vmul.f32 %v1147, %v1243
    %v1260 = vadd.f32 %v1112, %v1244
    %v1261 = vadd.f32 %v1113, %v1245
    %v1262 = vadd.f32 %v1114, %v1246
    %v1263 = vadd.f32 %v1115, %v1247
    %v1264 = vadd.f32 %v1116, %v1248
    %v1265 = vadd.f32 %v1117, %v1249
    %v1266 = vadd.f32 %v1118, %v1250
    %v1267 = vadd.f32 %v1119, %v1251
    %v1268 = vadd.f32 %v1120, %v1252
    %v1269 = vadd.f32 %v1121, %v1253
    %v1270 = vadd.f32 %v1122, %v1254
    %v1271 = vadd.f32 %v1123, %v1255
    %v1272 = vadd.f32 %v1124, %v1256
    %v1273 = vadd.f32 %v1125, %v1257
    %v1274 = vadd.f32 %v1126, %v1258
    %v1275 = vadd.f32 %v1127, %v1259
    %vm1276 = vcmp.gt.f32.partialorder %v1260, 0.0
    %vm1277 = vcmp.gt.f32.partialorder %v1261, 0.0
    %vm1278 = vcmp.gt.f32.partialorder %v1262, 0.0
    %vm1279 = vcmp.gt.f32.partialorder %v1263, 0.0
    %vm1280 = vcmp.gt.f32.partialorder %v1264, 0.0
    %vm1281 = vcmp.gt.f32.partialorder %v1265, 0.0
    %vm1282 = vcmp.gt.f32.partialorder %v1266, 0.0
    %vm1283 = vcmp.gt.f32.partialorder %v1267, 0.0
    %vm1284 = vcmp.gt.f32.partialorder %v1268, 0.0
    %vm1285 = vcmp.gt.f32.partialorder %v1269, 0.0
    %vm1286 = vcmp.gt.f32.partialorder %v1270, 0.0
    %vm1287 = vcmp.gt.f32.partialorder %v1271, 0.0
    %vm1288 = vcmp.gt.f32.partialorder %v1272, 0.0
    %vm1289 = vcmp.gt.f32.partialorder %v1273, 0.0
    %vm1290 = vcmp.gt.f32.partialorder %v1274, 0.0
    %vm1291 = vcmp.gt.f32.partialorder %v1275, 0.0
    %v1292 = vmul.f32 %v1260, 0.01
    %v1293 = vmul.f32 %v1261, 0.01
    %v1294 = vmul.f32 %v1262, 0.01
    %v1295 = vmul.f32 %v1263, 0.01
    %v1296 = vmul.f32 %v1264, 0.01
    %v1297 = vmul.f32 %v1265, 0.01
    %v1298 = vmul.f32 %v1266, 0.01
    %v1299 = vmul.f32 %v1267, 0.01
    %v1300 = vmul.f32 %v1268, 0.01
    %v1301 = vmul.f32 %v1269, 0.01
    %v1302 = vmul.f32 %v1270, 0.01
    %v1303 = vmul.f32 %v1271, 0.01
    %v1304 = vmul.f32 %v1272, 0.01
    %v1305 = vmul.f32 %v1273, 0.01
    %v1306 = vmul.f32 %v1274, 0.01
    %v1307 = vmul.f32 %v1275, 0.01
    %v1308 = vsel %vm1276, %v1260, %v1292
    %v1309 = vsel %vm1277, %v1261, %v1293
    %v1310 = vsel %vm1278, %v1262, %v1294
    %v1311 = vsel %vm1279, %v1263, %v1295
    %v1312 = vsel %vm1280, %v1264, %v1296
    %v1313 = vsel %vm1281, %v1265, %v1297
    %v1314 = vsel %vm1282, %v1266, %v1298
    %v1315 = vsel %vm1283, %v1267, %v1299
    %v1316 = vsel %vm1284, %v1268, %v1300
    %v1317 = vsel %vm1285, %v1269, %v1301
    %v1318 = vsel %vm1286, %v1270, %v1302
    %v1319 = vsel %vm1287, %v1271, %v1303
    %v1320 = vsel %vm1288, %v1272, %v1304
    %v1321 = vsel %vm1289, %v1273, %v1305
    %v1322 = vsel %vm1290, %v1274, %v1306
    %v1323 = vsel %vm1291, %v1275, %v1307
    %v1324 = vmax.f32 %v1212, %v1308
    %v1325 = vmax.f32 %v1213, %v1309
    %v1326 = vmax.f32 %v1214, %v1310
    %v1327 = vmax.f32 %v1215, %v1311
    %v1328 = vmax.f32 %v1216, %v1312
    %v1329 = vmax.f32 %v1217, %v1313
    %v1330 = vmax.f32 %v1218, %v1314
    %v1331 = vmax.f32 %v1219, %v1315
    %v1332 = vmax.f32 %v1220, %v1316
    %v1333 = vmax.f32 %v1221, %v1317
    %v1334 = vmax.f32 %v1222, %v1318
    %v1335 = vmax.f32 %v1223, %v1319
    %v1336 = vmax.f32 %v1224, %v1320
    %v1337 = vmax.f32 %v1225, %v1321
    %v1338 = vmax.f32 %v1226, %v1322
    %v1339 = vmax.f32 %v1227, %v1323
    %v1340 = vsub.f32 %v1212, %v1324
    %v1341 = vsub.f32 %v1213, %v1325
    %v1342 = vsub.f32 %v1214, %v1326
    %v1343 = vsub.f32 %v1215, %v1327
    %v1344 = vsub.f32 %v1216, %v1328
    %v1345 = vsub.f32 %v1217, %v1329
    %v1346 = vsub.f32 %v1218, %v1330
    %v1347 = vsub.f32 %v1219, %v1331
    %v1348 = vsub.f32 %v1220, %v1332
    %v1349 = vsub.f32 %v1221, %v1333
    %v1350 = vsub.f32 %v1222, %v1334
    %v1351 = vsub.f32 %v1223, %v1335
    %v1352 = vsub.f32 %v1224, %v1336
    %v1353 = vsub.f32 %v1225, %v1337
    %v1354 = vsub.f32 %v1226, %v1338
    %v1355 = vsub.f32 %v1227, %v1339
    %v1356 = vmul.f32 %v1340, 1.442695
    %v1357 = vpow.pop %v1356
    %v1358 = vmul.f32 %v1341, 1.442695
    %v1359 = vpow.pop %v1358
    %v1360 = vmul.f32 %v1342, 1.442695
    %v1361 = vpow.pop %v1360
    %v1362 = vmul.f32 %v1343, 1.442695
    %v1363 = vpow.pop %v1362
    %v1364 = vmul.f32 %v1344, 1.442695
    %v1365 = vpow.pop %v1364
    %v1366 = vmul.f32 %v1345, 1.442695
    %v1367 = vpow.pop %v1366
    %v1368 = vmul.f32 %v1346, 1.442695
    %v1369 = vpow.pop %v1368
    %v1370 = vmul.f32 %v1347, 1.442695
    %v1371 = vpow.pop %v1370
    %v1372 = vmul.f32 %v1348, 1.442695
    %v1373 = vpow.pop %v1372
    %v1374 = vmul.f32 %v1349, 1.442695
    %v1375 = vpow.pop %v1374
    %v1376 = vmul.f32 %v1350, 1.442695
    %v1377 = vpow.pop %v1376
    %v1378 = vmul.f32 %v1351, 1.442695
    %v1379 = vpow.pop %v1378
    %v1380 = vmul.f32 %v1352, 1.442695
    %v1381 = vpow.pop %v1380
    %v1382 = vmul.f32 %v1353, 1.442695
    %v1383 = vpow.pop %v1382
    %v1384 = vmul.f32 %v1354, 1.442695
    %v1385 = vpow.pop %v1384
    %v1386 = vmul.f32 %v1355, 1.442695
    %v1387 = vpow.pop %v1386
    %v1388 = vsub.f32 %v1308, %v1324
    %v1389 = vsub.f32 %v1309, %v1325
    %v1390 = vsub.f32 %v1310, %v1326
    %v1391 = vsub.f32 %v1311, %v1327
    %v1392 = vsub.f32 %v1312, %v1328
    %v1393 = vsub.f32 %v1313, %v1329
    %v1394 = vsub.f32 %v1314, %v1330
    %v1395 = vsub.f32 %v1315, %v1331
    %v1396 = vsub.f32 %v1316, %v1332
    %v1397 = vsub.f32 %v1317, %v1333
    %v1398 = vsub.f32 %v1318, %v1334
    %v1399 = vsub.f32 %v1319, %v1335
    %v1400 = vsub.f32 %v1320, %v1336
    %v1401 = vsub.f32 %v1321, %v1337
    %v1402 = vsub.f32 %v1322, %v1338
    %v1403 = vsub.f32 %v1323, %v1339
    %v1404 = vmul.f32 %v1388, 1.442695
    %v1405 = vpow.pop %v1404
    %v1406 = vmul.f32 %v1389, 1.442695
    %v1407 = vpow.pop %v1406
    %v1408 = vmul.f32 %v1390, 1.442695
    %v1409 = vpow.pop %v1408
    %v1410 = vmul.f32 %v1391, 1.442695
    %v1411 = vpow.pop %v1410
    %v1412 = vmul.f32 %v1392, 1.442695
    %v1413 = vpow.pop %v1412
    %v1414 = vmul.f32 %v1393, 1.442695
    %v1415 = vpow.pop %v1414
    %v1416 = vmul.f32 %v1394, 1.442695
    %v1417 = vpow.pop %v1416
    %v1418 = vmul.f32 %v1395, 1.442695
    %v1419 = vpow.pop %v1418
    %v1420 = vmul.f32 %v1396, 1.442695
    %v1421 = vpow.pop %v1420
    %v1422 = vmul.f32 %v1397, 1.442695
    %v1423 = vpow.pop %v1422
    %v1424 = vmul.f32 %v1398, 1.442695
    %v1425 = vpow.pop %v1424
    %v1426 = vmul.f32 %v1399, 1.442695
    %v1427 = vpow.pop %v1426
    %v1428 = vmul.f32 %v1400, 1.442695
    %v1429 = vpow.pop %v1428
    %v1430 = vmul.f32 %v1401, 1.442695
    %v1431 = vpow.pop %v1430
    %v1432 = vmul.f32 %v1402, 1.442695
    %v1433 = vpow.pop %v1432
    %v1434 = vmul.f32 %v1403, 1.442695
    %v1435 = vpow.pop %v1434
    %v1436 = vadd.f32 %v1357, %v1405
    %v1437 = vadd.f32 %v1359, %v1407
    %v1438 = vadd.f32 %v1361, %v1409
    %v1439 = vadd.f32 %v1363, %v1411
    %v1440 = vadd.f32 %v1365, %v1413
    %v1441 = vadd.f32 %v1367, %v1415
    %v1442 = vadd.f32 %v1369, %v1417
    %v1443 = vadd.f32 %v1371, %v1419
    %v1444 = vadd.f32 %v1373, %v1421
    %v1445 = vadd.f32 %v1375, %v1423
    %v1446 = vadd.f32 %v1377, %v1425
    %v1447 = vadd.f32 %v1379, %v1427
    %v1448 = vadd.f32 %v1381, %v1429
    %v1449 = vadd.f32 %v1383, %v1431
    %v1450 = vadd.f32 %v1385, %v1433
    %v1451 = vadd.f32 %v1387, %v1435
    %v1452 = vmul.f32 %v1357, %v1128
    %v1453 = vmul.f32 %v1359, %v1129
    %v1454 = vmul.f32 %v1361, %v1130
    %v1455 = vmul.f32 %v1363, %v1131
    %v1456 = vmul.f32 %v1365, %v1132
    %v1457 = vmul.f32 %v1367, %v1133
    %v1458 = vmul.f32 %v1369, %v1134
    %v1459 = vmul.f32 %v1371, %v1135
    %v1460 = vmul.f32 %v1373, %v1136
    %v1461 = vmul.f32 %v1375, %v1137
    %v1462 = vmul.f32 %v1377, %v1138
    %v1463 = vmul.f32 %v1379, %v1139
    %v1464 = vmul.f32 %v1381, %v1140
    %v1465 = vmul.f32 %v1383, %v1141
    %v1466 = vmul.f32 %v1385, %v1142
    %v1467 = vmul.f32 %v1387, %v1143
    %v1468 = vmul.f32 %v1405, %v1228
    %v1469 = vmul.f32 %v1407, %v1229
    %v1470 = vmul.f32 %v1409, %v1230
    %v1471 = vmul.f32 %v1411, %v1231
    %v1472 = vmul.f32 %v1413, %v1232
    %v1473 = vmul.f32 %v1415, %v1233
    %v1474 = vmul.f32 %v1417, %v1234
    %v1475 = vmul.f32 %v1419, %v1235
    %v1476 = vmul.f32 %v1421, %v1236
    %v1477 = vmul.f32 %v1423, %v1237
    %v1478 = vmul.f32 %v1425, %v1238
    %v1479 = vmul.f32 %v1427, %v1239
    %v1480 = vmul.f32 %v1429, %v1240
    %v1481 = vmul.f32 %v1431, %v1241
    %v1482 = vmul.f32 %v1433, %v1242
    %v1483 = vmul.f32 %v1435, %v1243
    %v1484 = vadd.f32 %v1452, %v1468
    %v1485 = vadd.f32 %v1453, %v1469
    %v1486 = vadd.f32 %v1454, %v1470
    %v1487 = vadd.f32 %v1455, %v1471
    %v1488 = vadd.f32 %v1456, %v1472
    %v1489 = vadd.f32 %v1457, %v1473
    %v1490 = vadd.f32 %v1458, %v1474
    %v1491 = vadd.f32 %v1459, %v1475
    %v1492 = vadd.f32 %v1460, %v1476
    %v1493 = vadd.f32 %v1461, %v1477
    %v1494 = vadd.f32 %v1462, %v1478
    %v1495 = vadd.f32 %v1463, %v1479
    %v1496 = vadd.f32 %v1464, %v1480
    %v1497 = vadd.f32 %v1465, %v1481
    %v1498 = vadd.f32 %v1466, %v1482
    %v1499 = vadd.f32 %v1467, %v1483
    %v1500 = vld [vmem:[#allocation2 + $0x100] sm:$0xff]
    %v1501 = vld [vmem:[#allocation2 + $0x108] sm:$0xff]
    %v1502 = vld [vmem:[#allocation2 + $0x110] sm:$0xff]
    %v1503 = vld [vmem:[#allocation2 + $0x118] sm:$0xff]
    %v1504 = vld [vmem:[#allocation2 + $0x120] sm:$0xff]
    %v1505 = vld [vmem:[#allocation2 + $0x128] sm:$0xff]
    %v1506 = vld [vmem:[#allocation2 + $0x130] sm:$0xff]
    %v1507 = vld [vmem:[#allocation2 + $0x138] sm:$0xff]
    %v1508 = vld [vmem:[#allocation2 + $0x140] sm:$0xff]
    %v1509 = vld [vmem:[#allocation2 + $0x148] sm:$0xff]
    %v1510 = vld [vmem:[#allocation2 + $0x150] sm:$0xff]
    %v1511 = vld [vmem:[#allocation2 + $0x158] sm:$0xff]
    %v1512 = vld [vmem:[#allocation2 + $0x160] sm:$0xff]
    %v1513 = vld [vmem:[#allocation2 + $0x168] sm:$0xff]
    %v1514 = vld [vmem:[#allocation2 + $0x170] sm:$0xff]
    %v1515 = vld [vmem:[#allocation2 + $0x178] sm:$0xff]
    %v1516 = vmul.f32 %v1147, %v1500
    %v1517 = vmul.f32 %v1147, %v1501
    %v1518 = vmul.f32 %v1147, %v1502
    %v1519 = vmul.f32 %v1147, %v1503
    %v1520 = vmul.f32 %v1147, %v1504
    %v1521 = vmul.f32 %v1147, %v1505
    %v1522 = vmul.f32 %v1147, %v1506
    %v1523 = vmul.f32 %v1147, %v1507
    %v1524 = vmul.f32 %v1147, %v1508
    %v1525 = vmul.f32 %v1147, %v1509
    %v1526 = vmul.f32 %v1147, %v1510
    %v1527 = vmul.f32 %v1147, %v1511
    %v1528 = vmul.f32 %v1147, %v1512
    %v1529 = vmul.f32 %v1147, %v1513
    %v1530 = vmul.f32 %v1147, %v1514
    %v1531 = vmul.f32 %v1147, %v1515
    %v1532 = vadd.f32 %v1112, %v1516
    %v1533 = vadd.f32 %v1113, %v1517
    %v1534 = vadd.f32 %v1114, %v1518
    %v1535 = vadd.f32 %v1115, %v1519
    %v1536 = vadd.f32 %v1116, %v1520
    %v1537 = vadd.f32 %v1117, %v1521
    %v1538 = vadd.f32 %v1118, %v1522
    %v1539 = vadd.f32 %v1119, %v1523
    %v1540 = vadd.f32 %v1120, %v1524
    %v1541 = vadd.f32 %v1121, %v1525
    %v1542 = vadd.f32 %v1122, %v1526
    %v1543 = vadd.f32 %v1123, %v1527
    %v1544 = vadd.f32 %v1124, %v1528
    %v1545 = vadd.f32 %v1125, %v1529
    %v1546 = vadd.f32 %v1126, %v1530
    %v1547 = vadd.f32 %v1127, %v1531
    %vm1548 = vcmp.gt.f32.partialorder %v1532, 0.0
    %vm1549 = vcmp.gt.f32.partialorder %v1533, 0.0
    %vm1550 = vcmp.gt.f32.partialorder %v1534, 0.0
    %vm1551 = vcmp.gt.f32.partialorder %v1535, 0.0
    %vm1552 = vcmp.gt.f32.partialorder %v1536, 0.0
    %vm1553 = vcmp.gt.f32.partialorder %v1537, 0.0
    %vm1554 = vcmp.gt.f32.partialorder %v1538, 0.0
    %vm1555 = vcmp.gt.f32.partialorder %v1539, 0.0
    %vm1556 = vcmp.gt.f32.partialorder %v1540, 0.0
    %vm1557 = vcmp.gt.f32.partialorder %v1541, 0.0
    %vm1558 = vcmp.gt.f32.partialorder %v1542, 0.0
    %vm1559 = vcmp.gt.f32.partialorder %v1543, 0.0
    %vm1560 = vcmp.gt.f32.partialorder %v1544, 0.0
    %vm1561 = vcmp.gt.f32.partialorder %v1545, 0.0
    %vm1562 = vcmp.gt.f32.partialorder %v1546, 0.0
    %vm1563 = vcmp.gt.f32.partialorder %v1547, 0.0
    %v1564 = vmul.f32 %v1532, 0.01
    %v1565 = vmul.f32 %v1533, 0.01
    %v1566 = vmul.f32 %v1534, 0.01
    %v1567 = vmul.f32 %v1535, 0.01
    %v1568 = vmul.f32 %v1536, 0.01
    %v1569 = vmul.f32 %v1537, 0.01
    %v1570 = vmul.f32 %v1538, 0.01
    %v1571 = vmul.f32 %v1539, 0.01
    %v1572 = vmul.f32 %v1540, 0.01
    %v1573 = vmul.f32 %v1541, 0.01
    %v1574 = vmul.f32 %v1542, 0.01
    %v1575 = vmul.f32 %v1543, 0.01
    %v1576 = vmul.f32 %v1544, 0.01
    %v1577 = vmul.f32 %v1545, 0.01
    %v1578 = vmul.f32 %v1546, 0.01
    %v1579 = vmul.f32 %v1547, 0.01
    %v1580 = vsel %vm1548, %v1532, %v1564
    %v1581 = vsel %vm1549, %v1533, %v1565
    %v1582 = vsel %vm1550, %v1534, %v1566
    %v1583 = vsel %vm1551, %v1535, %v1567
    %v1584 = vsel %vm1552, %v1536, %v1568
    %v1585 = vsel %vm1553, %v1537, %v1569
    %v1586 = vsel %vm1554, %v1538, %v1570
    %v1587 = vsel %vm1555, %v1539, %v1571
    %v1588 = vsel %vm1556, %v1540, %v1572
    %v1589 = vsel %vm1557, %v1541, %v1573
    %v1590 = vsel %vm1558, %v1542, %v1574
    %v1591 = vsel %vm1559, %v1543, %v1575
    %v1592 = vsel %vm1560, %v1544, %v1576
    %v1593 = vsel %vm1561, %v1545, %v1577
    %v1594 = vsel %vm1562, %v1546, %v1578
    %v1595 = vsel %vm1563, %v1547, %v1579
    %v1596 = vmax.f32 %v1324, %v1580
    %v1597 = vmax.f32 %v1325, %v1581
    %v1598 = vmax.f32 %v1326, %v1582
    %v1599 = vmax.f32 %v1327, %v1583
    %v1600 = vmax.f32 %v1328, %v1584
    %v1601 = vmax.f32 %v1329, %v1585
    %v1602 = vmax.f32 %v1330, %v1586
    %v1603 = vmax.f32 %v1331, %v1587
    %v1604 = vmax.f32 %v1332, %v1588
    %v1605 = vmax.f32 %v1333, %v1589
    %v1606 = vmax.f32 %v1334, %v1590
    %v1607 = vmax.f32 %v1335, %v1591
    %v1608 = vmax.f32 %v1336, %v1592
    %v1609 = vmax.f32 %v1337, %v1593
    %v1610 = vmax.f32 %v1338, %v1594
    %v1611 = vmax.f32 %v1339, %v1595
    %v1612 = vsub.f32 %v1324, %v1596
    %v1613 = vsub.f32 %v1325, %v1597
    %v1614 = vsub.f32 %v1326, %v1598
    %v1615 = vsub.f32 %v1327, %v1599
    %v1616 = vsub.f32 %v1328, %v1600
    %v1617 = vsub.f32 %v1329, %v1601
    %v1618 = vsub.f32 %v1330, %v1602
    %v1619 = vsub.f32 %v1331, %v1603
    %v1620 = vsub.f32 %v1332, %v1604
    %v1621 = vsub.f32 %v1333, %v1605
    %v1622 = vsub.f32 %v1334, %v1606
    %v1623 = vsub.f32 %v1335, %v1607
    %v1624 = vsub.f32 %v1336, %v1608
    %v1625 = vsub.f32 %v1337, %v1609
    %v1626 = vsub.f32 %v1338, %v1610
    %v1627 = vsub.f32 %v1339, %v1611
    %v1628 = vmul.f32 %v1612, 1.442695
    %v1629 = vpow.pop %v1628
    %v1630 = vmul.f32 %v1613, 1.442695
    %v1631 = vpow.pop %v1630
    %v1632 = vmul.f32 %v1614, 1.442695
    %v1633 = vpow.pop %v1632
    %v1634 = vmul.f32 %v1615, 1.442695
    %v1635 = vpow.pop %v1634
    %v1636 = vmul.f32 %v1616, 1.442695
    %v1637 = vpow.pop %v1636
    %v1638 = vmul.f32 %v1617, 1.442695
    %v1639 = vpow.pop %v1638
    %v1640 = vmul.f32 %v1618, 1.442695
    %v1641 = vpow.pop %v1640
    %v1642 = vmul.f32 %v1619, 1.442695
    %v1643 = vpow.pop %v1642
    %v1644 = vmul.f32 %v1620, 1.442695
    %v1645 = vpow.pop %v1644
    %v1646 = vmul.f32 %v1621, 1.442695
    %v1647 = vpow.pop %v1646
    %v1648 = vmul.f32 %v1622, 1.442695
    %v1649 = vpow.pop %v1648
    %v1650 = vmul.f32 %v1623, 1.442695
    %v1651 = vpow.pop %v1650
    %v1652 = vmul.f32 %v1624, 1.442695
    %v1653 = vpow.pop %v1652
    %v1654 = vmul.f32 %v1625, 1.442695
    %v1655 = vpow.pop %v1654
    %v1656 = vmul.f32 %v1626, 1.442695
    %v1657 = vpow.pop %v1656
    %v1658 = vmul.f32 %v1627, 1.442695
    %v1659 = vpow.pop %v1658
    %v1660 = vsub.f32 %v1580, %v1596
    %v1661 = vsub.f32 %v1581, %v1597
    %v1662 = vsub.f32 %v1582, %v1598
    %v1663 = vsub.f32 %v1583, %v1599
    %v1664 = vsub.f32 %v1584, %v1600
    %v1665 = vsub.f32 %v1585, %v1601
    %v1666 = vsub.f32 %v1586, %v1602
    %v1667 = vsub.f32 %v1587, %v1603
    %v1668 = vsub.f32 %v1588, %v1604
    %v1669 = vsub.f32 %v1589, %v1605
    %v1670 = vsub.f32 %v1590, %v1606
    %v1671 = vsub.f32 %v1591, %v1607
    %v1672 = vsub.f32 %v1592, %v1608
    %v1673 = vsub.f32 %v1593, %v1609
    %v1674 = vsub.f32 %v1594, %v1610
    %v1675 = vsub.f32 %v1595, %v1611
    %v1676 = vmul.f32 %v1660, 1.442695
    %v1677 = vpow.pop %v1676
    %v1678 = vmul.f32 %v1661, 1.442695
    %v1679 = vpow.pop %v1678
    %v1680 = vmul.f32 %v1662, 1.442695
    %v1681 = vpow.pop %v1680
    %v1682 = vmul.f32 %v1663, 1.442695
    %v1683 = vpow.pop %v1682
    %v1684 = vmul.f32 %v1664, 1.442695
    %v1685 = vpow.pop %v1684
    %v1686 = vmul.f32 %v1665, 1.442695
    %v1687 = vpow.pop %v1686
    %v1688 = vmul.f32 %v1666, 1.442695
    %v1689 = vpow.pop %v1688
    %v1690 = vmul.f32 %v1667, 1.442695
    %v1691 = vpow.pop %v1690
    %v1692 = vmul.f32 %v1668, 1.442695
    %v1693 = vpow.pop %v1692
    %v1694 = vmul.f32 %v1669, 1.442695
    %v1695 = vpow.pop %v1694
    %v1696 = vmul.f32 %v1670, 1.442695
    %v1697 = vpow.pop %v1696
    %v1698 = vmul.f32 %v1671, 1.442695
    %v1699 = vpow.pop %v1698
    %v1700 = vmul.f32 %v1672, 1.442695
    %v1701 = vpow.pop %v1700
    %v1702 = vmul.f32 %v1673, 1.442695
    %v1703 = vpow.pop %v1702
    %v1704 = vmul.f32 %v1674, 1.442695
    %v1705 = vpow.pop %v1704
    %v1706 = vmul.f32 %v1675, 1.442695
    %v1707 = vpow.pop %v1706
    %v1708 = vmul.f32 %v1629, %v1436
    %v1709 = vmul.f32 %v1631, %v1437
    %v1710 = vmul.f32 %v1633, %v1438
    %v1711 = vmul.f32 %v1635, %v1439
    %v1712 = vmul.f32 %v1637, %v1440
    %v1713 = vmul.f32 %v1639, %v1441
    %v1714 = vmul.f32 %v1641, %v1442
    %v1715 = vmul.f32 %v1643, %v1443
    %v1716 = vmul.f32 %v1645, %v1444
    %v1717 = vmul.f32 %v1647, %v1445
    %v1718 = vmul.f32 %v1649, %v1446
    %v1719 = vmul.f32 %v1651, %v1447
    %v1720 = vmul.f32 %v1653, %v1448
    %v1721 = vmul.f32 %v1655, %v1449
    %v1722 = vmul.f32 %v1657, %v1450
    %v1723 = vmul.f32 %v1659, %v1451
    %v1724 = vadd.f32 %v1708, %v1677
    %v1725 = vadd.f32 %v1709, %v1679
    %v1726 = vadd.f32 %v1710, %v1681
    %v1727 = vadd.f32 %v1711, %v1683
    %v1728 = vadd.f32 %v1712, %v1685
    %v1729 = vadd.f32 %v1713, %v1687
    %v1730 = vadd.f32 %v1714, %v1689
    %v1731 = vadd.f32 %v1715, %v1691
    %v1732 = vadd.f32 %v1716, %v1693
    %v1733 = vadd.f32 %v1717, %v1695
    %v1734 = vadd.f32 %v1718, %v1697
    %v1735 = vadd.f32 %v1719, %v1699
    %v1736 = vadd.f32 %v1720, %v1701
    %v1737 = vadd.f32 %v1721, %v1703
    %v1738 = vadd.f32 %v1722, %v1705
    %v1739 = vadd.f32 %v1723, %v1707
    %v1740 = vmul.f32 %v1629, %v1484
    %v1741 = vmul.f32 %v1631, %v1485
    %v1742 = vmul.f32 %v1633, %v1486
    %v1743 = vmul.f32 %v1635, %v1487
    %v1744 = vmul.f32 %v1637, %v1488
    %v1745 = vmul.f32 %v1639, %v1489
    %v1746 = vmul.f32 %v1641, %v1490
    %v1747 = vmul.f32 %v1643, %v1491
    %v1748 = vmul.f32 %v1645, %v1492
    %v1749 = vmul.f32 %v1647, %v1493
    %v1750 = vmul.f32 %v1649, %v1494
    %v1751 = vmul.f32 %v1651, %v1495
    %v1752 = vmul.f32 %v1653, %v1496
    %v1753 = vmul.f32 %v1655, %v1497
    %v1754 = vmul.f32 %v1657, %v1498
    %v1755 = vmul.f32 %v1659, %v1499
    %v1756 = vmul.f32 %v1677, %v1500
    %v1757 = vmul.f32 %v1679, %v1501
    %v1758 = vmul.f32 %v1681, %v1502
    %v1759 = vmul.f32 %v1683, %v1503
    %v1760 = vmul.f32 %v1685, %v1504
    %v1761 = vmul.f32 %v1687, %v1505
    %v1762 = vmul.f32 %v1689, %v1506
    %v1763 = vmul.f32 %v1691, %v1507
    %v1764 = vmul.f32 %v1693, %v1508
    %v1765 = vmul.f32 %v1695, %v1509
    %v1766 = vmul.f32 %v1697, %v1510
    %v1767 = vmul.f32 %v1699, %v1511
    %v1768 = vmul.f32 %v1701, %v1512
    %v1769 = vmul.f32 %v1703, %v1513
    %v1770 = vmul.f32 %v1705, %v1514
    %v1771 = vmul.f32 %v1707, %v1515
    %v1772 = vadd.f32 %v1740, %v1756
    %v1773 = vadd.f32 %v1741, %v1757
    %v1774 = vadd.f32 %v1742, %v1758
    %v1775 = vadd.f32 %v1743, %v1759
    %v1776 = vadd.f32 %v1744, %v1760
    %v1777 = vadd.f32 %v1745, %v1761
    %v1778 = vadd.f32 %v1746, %v1762
    %v1779 = vadd.f32 %v1747, %v1763
    %v1780 = vadd.f32 %v1748, %v1764
    %v1781 = vadd.f32 %v1749, %v1765
    %v1782 = vadd.f32 %v1750, %v1766
    %v1783 = vadd.f32 %v1751, %v1767
    %v1784 = vadd.f32 %v1752, %v1768
    %v1785 = vadd.f32 %v1753, %v1769
    %v1786 = vadd.f32 %v1754, %v1770
    %v1787 = vadd.f32 %v1755, %v1771
    %v1788 = vld [vmem:[#allocation2 + $0x180] sm:$0xff]
    %v1789 = vld [vmem:[#allocation2 + $0x188] sm:$0xff]
    %v1790 = vld [vmem:[#allocation2 + $0x190] sm:$0xff]
    %v1791 = vld [vmem:[#allocation2 + $0x198] sm:$0xff]
    %v1792 = vld [vmem:[#allocation2 + $0x1a0] sm:$0xff]
    %v1793 = vld [vmem:[#allocation2 + $0x1a8] sm:$0xff]
    %v1794 = vld [vmem:[#allocation2 + $0x1b0] sm:$0xff]
    %v1795 = vld [vmem:[#allocation2 + $0x1b8] sm:$0xff]
    %v1796 = vld [vmem:[#allocation2 + $0x1c0] sm:$0xff]
    %v1797 = vld [vmem:[#allocation2 + $0x1c8] sm:$0xff]
    %v1798 = vld [vmem:[#allocation2 + $0x1d0] sm:$0xff]
    %v1799 = vld [vmem:[#allocation2 + $0x1d8] sm:$0xff]
    %v1800 = vld [vmem:[#allocation2 + $0x1e0] sm:$0xff]
    %v1801 = vld [vmem:[#allocation2 + $0x1e8] sm:$0xff]
    %v1802 = vld [vmem:[#allocation2 + $0x1f0] sm:$0xff]
    %v1803 = vld [vmem:[#allocation2 + $0x1f8] sm:$0xff]
    %v1804 = vmul.f32 %v1147, %v1788
    %v1805 = vmul.f32 %v1147, %v1789
    %v1806 = vmul.f32 %v1147, %v1790
    %v1807 = vmul.f32 %v1147, %v1791
    %v1808 = vmul.f32 %v1147, %v1792
    %v1809 = vmul.f32 %v1147, %v1793
    %v1810 = vmul.f32 %v1147, %v1794
    %v1811 = vmul.f32 %v1147, %v1795
    %v1812 = vmul.f32 %v1147, %v1796
    %v1813 = vmul.f32 %v1147, %v1797
    %v1814 = vmul.f32 %v1147, %v1798
    %v1815 = vmul.f32 %v1147, %v1799
    %v1816 = vmul.f32 %v1147, %v1800
    %v1817 = vmul.f32 %v1147, %v1801
    %v1818 = vmul.f32 %v1147, %v1802
    %v1819 = vmul.f32 %v1147, %v1803
    %v1820 = vadd.f32 %v1112, %v1804
    %v1821 = vadd.f32 %v1113, %v1805
    %v1822 = vadd.f32 %v1114, %v1806
    %v1823 = vadd.f32 %v1115, %v1807
    %v1824 = vadd.f32 %v1116, %v1808
    %v1825 = vadd.f32 %v1117, %v1809
    %v1826 = vadd.f32 %v1118, %v1810
    %v1827 = vadd.f32 %v1119, %v1811
    %v1828 = vadd.f32 %v1120, %v1812
    %v1829 = vadd.f32 %v1121, %v1813
    %v1830 = vadd.f32 %v1122, %v1814
    %v1831 = vadd.f32 %v1123, %v1815
    %v1832 = vadd.f32 %v1124, %v1816
    %v1833 = vadd.f32 %v1125, %v1817
    %v1834 = vadd.f32 %v1126, %v1818
    %v1835 = vadd.f32 %v1127, %v1819
    %vm1836 = vcmp.gt.f32.partialorder %v1820, 0.0
    %vm1837 = vcmp.gt.f32.partialorder %v1821, 0.0
    %vm1838 = vcmp.gt.f32.partialorder %v1822, 0.0
    %vm1839 = vcmp.gt.f32.partialorder %v1823, 0.0
    %vm1840 = vcmp.gt.f32.partialorder %v1824, 0.0
    %vm1841 = vcmp.gt.f32.partialorder %v1825, 0.0
    %vm1842 = vcmp.gt.f32.partialorder %v1826, 0.0
    %vm1843 = vcmp.gt.f32.partialorder %v1827, 0.0
    %vm1844 = vcmp.gt.f32.partialorder %v1828, 0.0
    %vm1845 = vcmp.gt.f32.partialorder %v1829, 0.0
    %vm1846 = vcmp.gt.f32.partialorder %v1830, 0.0
    %vm1847 = vcmp.gt.f32.partialorder %v1831, 0.0
    %vm1848 = vcmp.gt.f32.partialorder %v1832, 0.0
    %vm1849 = vcmp.gt.f32.partialorder %v1833, 0.0
    %vm1850 = vcmp.gt.f32.partialorder %v1834, 0.0
    %vm1851 = vcmp.gt.f32.partialorder %v1835, 0.0
    %v1852 = vmul.f32 %v1820, 0.01
    %v1853 = vmul.f32 %v1821, 0.01
    %v1854 = vmul.f32 %v1822, 0.01
    %v1855 = vmul.f32 %v1823, 0.01
    %v1856 = vmul.f32 %v1824, 0.01
    %v1857 = vmul.f32 %v1825, 0.01
    %v1858 = vmul.f32 %v1826, 0.01
    %v1859 = vmul.f32 %v1827, 0.01
    %v1860 = vmul.f32 %v1828, 0.01
    %v1861 = vmul.f32 %v1829, 0.01
    %v1862 = vmul.f32 %v1830, 0.01
    %v1863 = vmul.f32 %v1831, 0.01
    %v1864 = vmul.f32 %v1832, 0.01
    %v1865 = vmul.f32 %v1833, 0.01
    %v1866 = vmul.f32 %v1834, 0.01
    %v1867 = vmul.f32 %v1835, 0.01
    %v1868 = vsel %vm1836, %v1820, %v1852
    %v1869 = vsel %vm1837, %v1821, %v1853
    %v1870 = vsel %vm1838, %v1822, %v1854
    %v1871 = vsel %vm1839, %v1823, %v1855
    %v1872 = vsel %vm1840, %v1824, %v1856
    %v1873 = vsel %vm1841, %v1825, %v1857
    %v1874 = vsel %vm1842, %v1826, %v1858
    %v1875 = vsel %vm1843, %v1827, %v1859
    %v1876 = vsel %vm1844, %v1828, %v1860
    %v1877 = vsel %vm1845, %v1829, %v1861
    %v1878 = vsel %vm1846, %v1830, %v1862
    %v1879 = vsel %vm1847, %v1831, %v1863
    %v1880 = vsel %vm1848, %v1832, %v1864
    %v1881 = vsel %vm1849, %v1833, %v1865
    %v1882 = vsel %vm1850, %v1834, %v1866
    %v1883 = vsel %vm1851, %v1835, %v1867
    %v1884 = vmax.f32 %v1596, %v1868
    %v1885 = vmax.f32 %v1597, %v1869
    %v1886 = vmax.f32 %v1598, %v1870
    %v1887 = vmax.f32 %v1599, %v1871
    %v1888 = vmax.f32 %v1600, %v1872
    %v1889 = vmax.f32 %v1601, %v1873
    %v1890 = vmax.f32 %v1602, %v1874
    %v1891 = vmax.f32 %v1603, %v1875
    %v1892 = vmax.f32 %v1604, %v1876
    %v1893 = vmax.f32 %v1605, %v1877
    %v1894 = vmax.f32 %v1606, %v1878
    %v1895 = vmax.f32 %v1607, %v1879
    %v1896 = vmax.f32 %v1608, %v1880
    %v1897 = vmax.f32 %v1609, %v1881
    %v1898 = vmax.f32 %v1610, %v1882
    %v1899 = vmax.f32 %v1611, %v1883
    %v1900 = vsub.f32 %v1596, %v1884
    %v1901 = vsub.f32 %v1597, %v1885
    %v1902 = vsub.f32 %v1598, %v1886
    %v1903 = vsub.f32 %v1599, %v1887
    %v1904 = vsub.f32 %v1600, %v1888
    %v1905 = vsub.f32 %v1601, %v1889
    %v1906 = vsub.f32 %v1602, %v1890
    %v1907 = vsub.f32 %v1603, %v1891
    %v1908 = vsub.f32 %v1604, %v1892
    %v1909 = vsub.f32 %v1605, %v1893
    %v1910 = vsub.f32 %v1606, %v1894
    %v1911 = vsub.f32 %v1607, %v1895
    %v1912 = vsub.f32 %v1608, %v1896
    %v1913 = vsub.f32 %v1609, %v1897
    %v1914 = vsub.f32 %v1610, %v1898
    %v1915 = vsub.f32 %v1611, %v1899
    %v1916 = vmul.f32 %v1900, 1.442695
    %v1917 = vpow.pop %v1916
    %v1918 = vmul.f32 %v1901, 1.442695
    %v1919 = vpow.pop %v1918
    %v1920 = vmul.f32 %v1902, 1.442695
    %v1921 = vpow.pop %v1920
    %v1922 = vmul.f32 %v1903, 1.442695
    %v1923 = vpow.pop %v1922
    %v1924 = vmul.f32 %v1904, 1.442695
    %v1925 = vpow.pop %v1924
    %v1926 = vmul.f32 %v1905, 1.442695
    %v1927 = vpow.pop %v1926
    %v1928 = vmul.f32 %v1906, 1.442695
    %v1929 = vpow.pop %v1928
    %v1930 = vmul.f32 %v1907, 1.442695
    %v1931 = vpow.pop %v1930
    %v1932 = vmul.f32 %v1908, 1.442695
    %v1933 = vpow.pop %v1932
    %v1934 = vmul.f32 %v1909, 1.442695
    %v1935 = vpow.pop %v1934
    %v1936 = vmul.f32 %v1910, 1.442695
    %v1937 = vpow.pop %v1936
    %v1938 = vmul.f32 %v1911, 1.442695
    %v1939 = vpow.pop %v1938
    %v1940 = vmul.f32 %v1912, 1.442695
    %v1941 = vpow.pop %v1940
    %v1942 = vmul.f32 %v1913, 1.442695
    %v1943 = vpow.pop %v1942
    %v1944 = vmul.f32 %v1914, 1.442695
    %v1945 = vpow.pop %v1944
    %v1946 = vmul.f32 %v1915, 1.442695
    %v1947 = vpow.pop %v1946
    %v1948 = vsub.f32 %v1868, %v1884
    %v1949 = vsub.f32 %v1869, %v1885
    %v1950 = vsub.f32 %v1870, %v1886
    %v1951 = vsub.f32 %v1871, %v1887
    %v1952 = vsub.f32 %v1872, %v1888
    %v1953 = vsub.f32 %v1873, %v1889
    %v1954 = vsub.f32 %v1874, %v1890
    %v1955 = vsub.f32 %v1875, %v1891
    %v1956 = vsub.f32 %v1876, %v1892
    %v1957 = vsub.f32 %v1877, %v1893
    %v1958 = vsub.f32 %v1878, %v1894
    %v1959 = vsub.f32 %v1879, %v1895
    %v1960 = vsub.f32 %v1880, %v1896
    %v1961 = vsub.f32 %v1881, %v1897
    %v1962 = vsub.f32 %v1882, %v1898
    %v1963 = vsub.f32 %v1883, %v1899
    %v1964 = vmul.f32 %v1948, 1.442695
    %v1965 = vpow.pop %v1964
    %v1966 = vmul.f32 %v1949, 1.442695
    %v1967 = vpow.pop %v1966
    %v1968 = vmul.f32 %v1950, 1.442695
    %v1969 = vpow.pop %v1968
    %v1970 = vmul.f32 %v1951, 1.442695
    %v1971 = vpow.pop %v1970
    %v1972 = vmul.f32 %v1952, 1.442695
    %v1973 = vpow.pop %v1972
    %v1974 = vmul.f32 %v1953, 1.442695
    %v1975 = vpow.pop %v1974
    %v1976 = vmul.f32 %v1954, 1.442695
    %v1977 = vpow.pop %v1976
    %v1978 = vmul.f32 %v1955, 1.442695
    %v1979 = vpow.pop %v1978
    %v1980 = vmul.f32 %v1956, 1.442695
    %v1981 = vpow.pop %v1980
    %v1982 = vmul.f32 %v1957, 1.442695
    %v1983 = vpow.pop %v1982
    %v1984 = vmul.f32 %v1958, 1.442695
    %v1985 = vpow.pop %v1984
    %v1986 = vmul.f32 %v1959, 1.442695
    %v1987 = vpow.pop %v1986
    %v1988 = vmul.f32 %v1960, 1.442695
    %v1989 = vpow.pop %v1988
    %v1990 = vmul.f32 %v1961, 1.442695
    %v1991 = vpow.pop %v1990
    %v1992 = vmul.f32 %v1962, 1.442695
    %v1993 = vpow.pop %v1992
    %v1994 = vmul.f32 %v1963, 1.442695
    %v1995 = vpow.pop %v1994
    %v1996 = vmul.f32 %v1917, %v1724
    %v1997 = vmul.f32 %v1919, %v1725
    %v1998 = vmul.f32 %v1921, %v1726
    %v1999 = vmul.f32 %v1923, %v1727
    %v2000 = vmul.f32 %v1925, %v1728
    %v2001 = vmul.f32 %v1927, %v1729
    %v2002 = vmul.f32 %v1929, %v1730
    %v2003 = vmul.f32 %v1931, %v1731
    %v2004 = vmul.f32 %v1933, %v1732
    %v2005 = vmul.f32 %v1935, %v1733
    %v2006 = vmul.f32 %v1937, %v1734
    %v2007 = vmul.f32 %v1939, %v1735
    %v2008 = vmul.f32 %v1941, %v1736
    %v2009 = vmul.f32 %v1943, %v1737
    %v2010 = vmul.f32 %v1945, %v1738
    %v2011 = vmul.f32 %v1947, %v1739
    %v2012 = vadd.f32 %v1996, %v1965
    %v2013 = vadd.f32 %v1997, %v1967
    %v2014 = vadd.f32 %v1998, %v1969
    %v2015 = vadd.f32 %v1999, %v1971
    %v2016 = vadd.f32 %v2000, %v1973
    %v2017 = vadd.f32 %v2001, %v1975
    %v2018 = vadd.f32 %v2002, %v1977
    %v2019 = vadd.f32 %v2003, %v1979
    %v2020 = vadd.f32 %v2004, %v1981
    %v2021 = vadd.f32 %v2005, %v1983
    %v2022 = vadd.f32 %v2006, %v1985
    %v2023 = vadd.f32 %v2007, %v1987
    %v2024 = vadd.f32 %v2008, %v1989
    %v2025 = vadd.f32 %v2009, %v1991
    %v2026 = vadd.f32 %v2010, %v1993
    %v2027 = vadd.f32 %v2011, %v1995
    %v2028 = vmul.f32 %v1917, %v1772
    %v2029 = vmul.f32 %v1919, %v1773
    %v2030 = vmul.f32 %v1921, %v1774
    %v2031 = vmul.f32 %v1923, %v1775
    %v2032 = vmul.f32 %v1925, %v1776
    %v2033 = vmul.f32 %v1927, %v1777
    %v2034 = vmul.f32 %v1929, %v1778
    %v2035 = vmul.f32 %v1931, %v1779
    %v2036 = vmul.f32 %v1933, %v1780
    %v2037 = vmul.f32 %v1935, %v1781
    %v2038 = vmul.f32 %v1937, %v1782
    %v2039 = vmul.f32 %v1939, %v1783
    %v2040 = vmul.f32 %v1941, %v1784
    %v2041 = vmul.f32 %v1943, %v1785
    %v2042 = vmul.f32 %v1945, %v1786
    %v2043 = vmul.f32 %v1947, %v1787
    %v2044 = vmul.f32 %v1965, %v1788
    %v2045 = vmul.f32 %v1967, %v1789
    %v2046 = vmul.f32 %v1969, %v1790
    %v2047 = vmul.f32 %v1971, %v1791
    %v2048 = vmul.f32 %v1973, %v1792
    %v2049 = vmul.f32 %v1975, %v1793
    %v2050 = vmul.f32 %v1977, %v1794
    %v2051 = vmul.f32 %v1979, %v1795
    %v2052 = vmul.f32 %v1981, %v1796
    %v2053 = vmul.f32 %v1983, %v1797
    %v2054 = vmul.f32 %v1985, %v1798
    %v2055 = vmul.f32 %v1987, %v1799
    %v2056 = vmul.f32 %v1989, %v1800
    %v2057 = vmul.f32 %v1991, %v1801
    %v2058 = vmul.f32 %v1993, %v1802
    %v2059 = vmul.f32 %v1995, %v1803
    %v2060 = vadd.f32 %v2028, %v2044
    %v2061 = vadd.f32 %v2029, %v2045
    %v2062 = vadd.f32 %v2030, %v2046
    %v2063 = vadd.f32 %v2031, %v2047
    %v2064 = vadd.f32 %v2032, %v2048
    %v2065 = vadd.f32 %v2033, %v2049
    %v2066 = vadd.f32 %v2034, %v2050
    %v2067 = vadd.f32 %v2035, %v2051
    %v2068 = vadd.f32 %v2036, %v2052
    %v2069 = vadd.f32 %v2037, %v2053
    %v2070 = vadd.f32 %v2038, %v2054
    %v2071 = vadd.f32 %v2039, %v2055
    %v2072 = vadd.f32 %v2040, %v2056
    %v2073 = vadd.f32 %v2041, %v2057
    %v2074 = vadd.f32 %v2042, %v2058
    %v2075 = vadd.f32 %v2043, %v2059
    %v2076 = vmul.f32 %v1090, %v2060
    %v2077 = vmul.f32 %v1091, %v2061
    %v2078 = vmul.f32 %v1092, %v2062
    %v2079 = vmul.f32 %v1093, %v2063
    %v2080 = vmul.f32 %v1094, %v2064
    %v2081 = vmul.f32 %v1095, %v2065
    %v2082 = vmul.f32 %v1096, %v2066
    %v2083 = vmul.f32 %v1097, %v2067
    %v2084 = vmul.f32 %v1098, %v2068
    %v2085 = vmul.f32 %v1099, %v2069
    %v2086 = vmul.f32 %v1100, %v2070
    %v2087 = vmul.f32 %v1101, %v2071
    %v2088 = vmul.f32 %v1102, %v2072
    %v2089 = vmul.f32 %v1103, %v2073
    %v2090 = vmul.f32 %v1104, %v2074
    %v2091 = vmul.f32 %v1105, %v2075
    %v2092 = vrcp.pop %v2012
    %v2093 = vrcp.pop %v2013
    %v2094 = vrcp.pop %v2014
    %v2095 = vrcp.pop %v2015
    %v2096 = vrcp.pop %v2016
    %v2097 = vrcp.pop %v2017
    %v2098 = vrcp.pop %v2018
    %v2099 = vrcp.pop %v2019
    %v2100 = vrcp.pop %v2020
    %v2101 = vrcp.pop %v2021
    %v2102 = vrcp.pop %v2022
    %v2103 = vrcp.pop %v2023
    %v2104 = vrcp.pop %v2024
    %v2105 = vrcp.pop %v2025
    %v2106 = vrcp.pop %v2026
    %v2107 = vrcp.pop %v2027
    %v2108 = vmul.f32 %v2076, %v2092
    %v2109 = vmul.f32 %v2077, %v2093
    %v2110 = vmul.f32 %v2078, %v2094
    %v2111 = vmul.f32 %v2079, %v2095
    %v2112 = vmul.f32 %v2080, %v2096
    %v2113 = vmul.f32 %v2081, %v2097
    %v2114 = vmul.f32 %v2082, %v2098
    %v2115 = vmul.f32 %v2083, %v2099
    %v2116 = vmul.f32 %v2084, %v2100
    %v2117 = vmul.f32 %v2085, %v2101
    %v2118 = vmul.f32 %v2086, %v2102
    %v2119 = vmul.f32 %v2087, %v2103
    %v2120 = vmul.f32 %v2088, %v2104
    %v2121 = vmul.f32 %v2089, %v2105
    %v2122 = vmul.f32 %v2090, %v2106
    %v2123 = vmul.f32 %v2091, %v2107
    %v2124 = vld [vmem:[%s4] sm:$0xff]
    %v2125 = vld [vmem:[%s4 + $0x8] sm:$0xff]
    %v2126 = vld [vmem:[%s4 + $0x10] sm:$0xff]
    %v2127 = vld [vmem:[%s4 + $0x18] sm:$0xff]
    %v2128 = vld [vmem:[%s4 + $0x20] sm:$0xff]
    %v2129 = vld [vmem:[%s4 + $0x28] sm:$0xff]
    %v2130 = vld [vmem:[%s4 + $0x30] sm:$0xff]
    %v2131 = vld [vmem:[%s4 + $0x38] sm:$0xff]
    %v2132 = vld [vmem:[%s4 + $0x40] sm:$0xff]
    %v2133 = vld [vmem:[%s4 + $0x48] sm:$0xff]
    %v2134 = vld [vmem:[%s4 + $0x50] sm:$0xff]
    %v2135 = vld [vmem:[%s4 + $0x58] sm:$0xff]
    %v2136 = vld [vmem:[%s4 + $0x60] sm:$0xff]
    %v2137 = vld [vmem:[%s4 + $0x68] sm:$0xff]
    %v2138 = vld [vmem:[%s4 + $0x70] sm:$0xff]
    %v2139 = vld [vmem:[%s4 + $0x78] sm:$0xff]
    %2140 = vmatprep.subr.mxu0 0.0
    %2141 = vmatpush1.msra.mxu0 %v2139
    %2142 = vmatprep.subr.mxu0 0.0
    %2143 = vmatpush1.msra.mxu0 %v2138
    %2144 = vmatprep.subr.mxu0 0.0
    %2145 = vmatpush1.msra.mxu0 %v2137
    %2146 = vmatprep.subr.mxu0 0.0
    %2147 = vmatpush1.msra.mxu0 %v2136
    %2148 = vmatprep.subr.mxu0 0.0
    %2149 = vmatpush1.msra.mxu0 %v2135
    %2150 = vmatprep.subr.mxu0 0.0
    %2151 = vmatpush1.msra.mxu0 %v2134
    %2152 = vmatprep.subr.mxu0 0.0
    %2153 = vmatpush1.msra.mxu0 %v2133
    %2154 = vmatprep.subr.mxu0 0.0
    %2155 = vmatpush1.msra.mxu0 %v2132
    %2156 = vmatprep.subr.mxu0 0.0
    %2157 = vmatpush1.msra.mxu0 %v2131
    %2158 = vmatprep.subr.mxu0 0.0
    %2159 = vmatpush1.msra.mxu0 %v2130
    %2160 = vmatprep.subr.mxu0 0.0
    %2161 = vmatpush1.msra.mxu0 %v2129
    %2162 = vmatprep.subr.mxu0 0.0
    %2163 = vmatpush1.msra.mxu0 %v2128
    %2164 = vmatprep.subr.mxu0 0.0
    %2165 = vmatpush1.msra.mxu0 %v2127
    %2166 = vmatprep.subr.mxu0 0.0
    %2167 = vmatpush1.msra.mxu0 %v2126
    %2168 = vmatprep.subr.mxu0 0.0
    %2169 = vmatpush1.msra.mxu0 %v2125
    %2170 = vmatprep.subr.mxu0 0.0
    %2171 = vmatpush1.msra.mxu0 %v2124
    %2172 = vmatprep.subr.mxu0 0.0
    %2173 = vmatpush2.msra.mxu0 0.0
    %2174 = vmatprep.subr.mxu0 0.0
    %2175 = vmatpush2.msra.mxu0 0.0
    %2176 = vmatprep.subr.mxu0 0.0
    %2177 = vmatpush2.msra.mxu0 0.0
    %2178 = vmatprep.subr.mxu0 0.0
    %2179 = vmatpush2.msra.mxu0 0.0
    %2180 = vmatprep.subr.mxu0 0.0
    %2181 = vmatpush2.msra.mxu0 0.0
    %2182 = vmatprep.subr.mxu0 0.0
    %2183 = vmatpush2.msra.mxu0 0.0
    %2184 = vmatprep.subr.mxu0 0.0
    %2185 = vmatpush2.msra.mxu0 0.0
    %2186 = vmatprep.subr.mxu0 0.0
    %2187 = vmatpush2.msra.mxu0 0.0
    %2188 = vmatprep.subr.mxu0 0.0
    %2189 = vmatpush2.msra.mxu0 0.0
    %2190 = vmatprep.subr.mxu0 0.0
    %2191 = vmatpush2.msra.mxu0 0.0
    %2192 = vmatprep.subr.mxu0 0.0
    %2193 = vmatpush2.msra.mxu0 0.0
    %2194 = vmatprep.subr.mxu0 0.0
    %2195 = vmatpush2.msra.mxu0 0.0
    %2196 = vmatprep.subr.mxu0 0.0
    %2197 = vmatpush2.msra.mxu0 0.0
    %2198 = vmatprep.subr.mxu0 0.0
    %2199 = vmatpush2.msra.mxu0 0.0
    %2200 = vmatprep.subr.mxu0 0.0
    %2201 = vmatpush2.msra.mxu0 0.0
    %2202 = vmatprep.subr.mxu0 0.0
    %2203 = vmatpush2.msra.mxu0 0.0
    %2204 = vmatprep.mubr.f32.mxu0 0.0
    %2205 = vmatmul.mubr.f32.gmra.mxu0 %v2108
    %v2206 = vpop.f32.mrf.mxu0
    %v2207 = vadd.f32 0.0, %v2206
    %v2208 = vpop.f32.mrf.mxu0
    %2209 = vmatprep.mubr.f32.mxu0 0.0
    %2210 = vmatmul.mubr.f32.gmra.mxu0 %v2109
    %v2211 = vpop.f32.mrf.mxu0
    %v2212 = vadd.f32 0.0, %v2211
    %v2213 = vpop.f32.mrf.mxu0
    %2214 = vmatprep.mubr.f32.mxu0 0.0
    %2215 = vmatmul.mubr.f32.gmra.mxu0 %v2110
    %v2216 = vpop.f32.mrf.mxu0
    %v2217 = vadd.f32 0.0, %v2216
    %v2218 = vpop.f32.mrf.mxu0
    %2219 = vmatprep.mubr.f32.mxu0 0.0
    %2220 = vmatmul.mubr.f32.gmra.mxu0 %v2111
    %v2221 = vpop.f32.mrf.mxu0
    %v2222 = vadd.f32 0.0, %v2221
    %v2223 = vpop.f32.mrf.mxu0
    %2224 = vmatprep.mubr.f32.mxu0 0.0
    %2225 = vmatmul.mubr.f32.gmra.mxu0 %v2112
    %v2226 = vpop.f32.mrf.mxu0
    %v2227 = vadd.f32 0.0, %v2226
    %v2228 = vpop.f32.mrf.mxu0
    %2229 = vmatprep.mubr.f32.mxu0 0.0
    %2230 = vmatmul.mubr.f32.gmra.mxu0 %v2113
    %v2231 = vpop.f32.mrf.mxu0
    %v2232 = vadd.f32 0.0, %v2231
    %v2233 = vpop.f32.mrf.mxu0
    %2234 = vmatprep.mubr.f32.mxu0 0.0
    %2235 = vmatmul.mubr.f32.gmra.mxu0 %v2114
    %v2236 = vpop.f32.mrf.mxu0
    %v2237 = vadd.f32 0.0, %v2236
    %v2238 = vpop.f32.mrf.mxu0
    %2239 = vmatprep.mubr.f32.mxu0 0.0
    %2240 = vmatmul.mubr.f32.gmra.mxu0 %v2115
    %v2241 = vpop.f32.mrf.mxu0
    %v2242 = vadd.f32 0.0, %v2241
    %v2243 = vpop.f32.mrf.mxu0
    %2244 = vmatprep.mubr.f32.mxu0 0.0
    %2245 = vmatmul.mubr.f32.gmra.mxu0 %v2116
    %v2246 = vpop.f32.mrf.mxu0
    %v2247 = vadd.f32 0.0, %v2246
    %v2248 = vpop.f32.mrf.mxu0
    %2249 = vmatprep.mubr.f32.mxu0 0.0
    %2250 = vmatmul.mubr.f32.gmra.mxu0 %v2117
    %v2251 = vpop.f32.mrf.mxu0
    %v2252 = vadd.f32 0.0, %v2251
    %v2253 = vpop.f32.mrf.mxu0
    %2254 = vmatprep.mubr.f32.mxu0 0.0
    %2255 = vmatmul.mubr.f32.gmra.mxu0 %v2118
    %v2256 = vpop.f32.mrf.mxu0
    %v2257 = vadd.f32 0.0, %v2256
    %v2258 = vpop.f32.mrf.mxu0
    %2259 = vmatprep.mubr.f32.mxu0 0.0
    %2260 = vmatmul.mubr.f32.gmra.mxu0 %v2119
    %v2261 = vpop.f32.mrf.mxu0
    %v2262 = vadd.f32 0.0, %v2261
    %v2263 = vpop.f32.mrf.mxu0
    %2264 = vmatprep.mubr.f32.mxu0 0.0
    %2265 = vmatmul.mubr.f32.gmra.mxu0 %v2120
    %v2266 = vpop.f32.mrf.mxu0
    %v2267 = vadd.f32 0.0, %v2266
    %v2268 = vpop.f32.mrf.mxu0
    %2269 = vmatprep.mubr.f32.mxu0 0.0
    %2270 = vmatmul.mubr.f32.gmra.mxu0 %v2121
    %v2271 = vpop.f32.mrf.mxu0
    %v2272 = vadd.f32 0.0, %v2271
    %v2273 = vpop.f32.mrf.mxu0
    %2274 = vmatprep.mubr.f32.mxu0 0.0
    %2275 = vmatmul.mubr.f32.gmra.mxu0 %v2122
    %v2276 = vpop.f32.mrf.mxu0
    %v2277 = vadd.f32 0.0, %v2276
    %v2278 = vpop.f32.mrf.mxu0
    %2279 = vmatprep.mubr.f32.mxu0 0.0
    %2280 = vmatmul.mubr.f32.gmra.mxu0 %v2123
    %v2281 = vpop.f32.mrf.mxu0
    %v2282 = vadd.f32 0.0, %v2281
    %v2283 = vpop.f32.mrf.mxu0
    %2284 = vdwg.mxu0
    %v2285 = vld [vmem:[%s5] sm:$0xff]
    %v2286 = vld [vmem:[%s5 + $0x8] sm:$0xff]
    %v2287 = vld [vmem:[%s5 + $0x10] sm:$0xff]
    %v2288 = vld [vmem:[%s5 + $0x18] sm:$0xff]
    %v2289 = vld [vmem:[%s5 + $0x20] sm:$0xff]
    %v2290 = vld [vmem:[%s5 + $0x28] sm:$0xff]
    %v2291 = vld [vmem:[%s5 + $0x30] sm:$0xff]
    %v2292 = vld [vmem:[%s5 + $0x38] sm:$0xff]
    %v2293 = vld [vmem:[%s5 + $0x40] sm:$0xff]
    %v2294 = vld [vmem:[%s5 + $0x48] sm:$0xff]
    %v2295 = vld [vmem:[%s5 + $0x50] sm:$0xff]
    %v2296 = vld [vmem:[%s5 + $0x58] sm:$0xff]
    %v2297 = vld [vmem:[%s5 + $0x60] sm:$0xff]
    %v2298 = vld [vmem:[%s5 + $0x68] sm:$0xff]
    %v2299 = vld [vmem:[%s5 + $0x70] sm:$0xff]
    %v2300 = vld [vmem:[%s5 + $0x78] sm:$0xff]
    %v2301 = vld [vmem:[%s6] sm:$0x1]
    %v2303 = vlaneseq
    %v2304 = vshrl.u32 %v2303, 7
    %v2305 = vsub.s32 0, %v2304
    %v2306 = vrot.slane %v2301, %v2305
    %2308 = vmatprep.subr.mxu0 0.0
    %2309 = vmatpush1.msra.mxu0 %v2300
    %2310 = vmatprep.subr.mxu0 0.0
    %2311 = vmatpush1.msra.mxu0 %v2299
    %2312 = vmatprep.subr.mxu0 0.0
    %2313 = vmatpush1.msra.mxu0 %v2298
    %2314 = vmatprep.subr.mxu0 0.0
    %2315 = vmatpush1.msra.mxu0 %v2297
    %2316 = vmatprep.subr.mxu0 0.0
    %2317 = vmatpush1.msra.mxu0 %v2296
    %2318 = vmatprep.subr.mxu0 0.0
    %2319 = vmatpush1.msra.mxu0 %v2295
    %2320 = vmatprep.subr.mxu0 0.0
    %2321 = vmatpush1.msra.mxu0 %v2294
    %2322 = vmatprep.subr.mxu0 0.0
    %2323 = vmatpush1.msra.mxu0 %v2293
    %2324 = vmatprep.subr.mxu0 0.0
    %2325 = vmatpush1.msra.mxu0 %v2292
    %2326 = vmatprep.subr.mxu0 0.0
    %2327 = vmatpush1.msra.mxu0 %v2291
    %2328 = vmatprep.subr.mxu0 0.0
    %2329 = vmatpush1.msra.mxu0 %v2290
    %2330 = vmatprep.subr.mxu0 0.0
    %2331 = vmatpush1.msra.mxu0 %v2289
    %2332 = vmatprep.subr.mxu0 0.0
    %2333 = vmatpush1.msra.mxu0 %v2288
    %2334 = vmatprep.subr.mxu0 0.0
    %2335 = vmatpush1.msra.mxu0 %v2287
    %2336 = vmatprep.subr.mxu0 0.0
    %2337 = vmatpush1.msra.mxu0 %v2286
    %2338 = vmatprep.subr.mxu0 0.0
    %2339 = vmatpush1.msra.mxu0 %v2285
    %2340 = vmatprep.subr.mxu0 0.0
    %2341 = vmatpush2.msra.mxu0 0.0
    %2342 = vmatprep.subr.mxu0 0.0
    %2343 = vmatpush2.msra.mxu0 0.0
    %2344 = vmatprep.subr.mxu0 0.0
    %2345 = vmatpush2.msra.mxu0 0.0
    %2346 = vmatprep.subr.mxu0 0.0
    %2347 = vmatpush2.msra.mxu0 0.0
    %2348 = vmatprep.subr.mxu0 0.0
    %2349 = vmatpush2.msra.mxu0 0.0
    %2350 = vmatprep.subr.mxu0 0.0
    %2351 = vmatpush2.msra.mxu0 0.0
    %2352 = vmatprep.subr.mxu0 0.0
    %2353 = vmatpush2.msra.mxu0 0.0
    %2354 = vmatprep.subr.mxu0 0.0
    %2355 = vmatpush2.msra.mxu0 0.0
    %2356 = vmatprep.subr.mxu0 0.0
    %2357 = vmatpush2.msra.mxu0 0.0
    %2358 = vmatprep.subr.mxu0 0.0
    %2359 = vmatpush2.msra.mxu0 0.0
    %2360 = vmatprep.subr.mxu0 0.0
    %2361 = vmatpush2.msra.mxu0 0.0
    %2362 = vmatprep.subr.mxu0 0.0
    %2363 = vmatpush2.msra.mxu0 0.0
    %2364 = vmatprep.subr.mxu0 0.0
    %2365 = vmatpush2.msra.mxu0 0.0
    %2366 = vmatprep.subr.mxu0 0.0
    %2367 = vmatpush2.msra.mxu0 0.0
    %2368 = vmatprep.subr.mxu0 0.0
    %2369 = vmatpush2.msra.mxu0 0.0
    %2370 = vmatprep.subr.mxu0 0.0
    %2371 = vmatpush2.msra.mxu0 0.0
    %2372 = vmatprep.mubr.f32.mxu0 0.0
    %2373 = vmatmul.mubr.f32.gmra.mxu0 %v2207
    %v2374 = vpop.f32.mrf.mxu0
    %v2375 = vadd.f32 %v2306, %v2374
    %v2376 = vpop.f32.mrf.mxu0
    %2377 = vmatprep.mubr.f32.mxu0 0.0
    %2378 = vmatmul.mubr.f32.gmra.mxu0 %v2212
    %v2379 = vpop.f32.mrf.mxu0
    %v2380 = vadd.f32 %v2306, %v2379
    %v2381 = vpop.f32.mrf.mxu0
    %2382 = vmatprep.mubr.f32.mxu0 0.0
    %2383 = vmatmul.mubr.f32.gmra.mxu0 %v2217
    %v2384 = vpop.f32.mrf.mxu0
    %v2385 = vadd.f32 %v2306, %v2384
    %v2386 = vpop.f32.mrf.mxu0
    %2387 = vmatprep.mubr.f32.mxu0 0.0
    %2388 = vmatmul.mubr.f32.gmra.mxu0 %v2222
    %v2389 = vpop.f32.mrf.mxu0
    %v2390 = vadd.f32 %v2306, %v2389
    %v2391 = vpop.f32.mrf.mxu0
    %2392 = vmatprep.mubr.f32.mxu0 0.0
    %2393 = vmatmul.mubr.f32.gmra.mxu0 %v2227
    %v2394 = vpop.f32.mrf.mxu0
    %v2395 = vadd.f32 %v2306, %v2394
    %v2396 = vpop.f32.mrf.mxu0
    %2397 = vmatprep.mubr.f32.mxu0 0.0
    %2398 = vmatmul.mubr.f32.gmra.mxu0 %v2232
    %v2399 = vpop.f32.mrf.mxu0
    %v2400 = vadd.f32 %v2306, %v2399
    %v2401 = vpop.f32.mrf.mxu0
    %2402 = vmatprep.mubr.f32.mxu0 0.0
    %2403 = vmatmul.mubr.f32.gmra.mxu0 %v2237
    %v2404 = vpop.f32.mrf.mxu0
    %v2405 = vadd.f32 %v2306, %v2404
    %v2406 = vpop.f32.mrf.mxu0
    %2407 = vmatprep.mubr.f32.mxu0 0.0
    %2408 = vmatmul.mubr.f32.gmra.mxu0 %v2242
    %v2409 = vpop.f32.mrf.mxu0
    %v2410 = vadd.f32 %v2306, %v2409
    %v2411 = vpop.f32.mrf.mxu0
    %2412 = vmatprep.mubr.f32.mxu0 0.0
    %2413 = vmatmul.mubr.f32.gmra.mxu0 %v2247
    %v2414 = vpop.f32.mrf.mxu0
    %v2415 = vadd.f32 %v2306, %v2414
    %v2416 = vpop.f32.mrf.mxu0
    %2417 = vmatprep.mubr.f32.mxu0 0.0
    %2418 = vmatmul.mubr.f32.gmra.mxu0 %v2252
    %v2419 = vpop.f32.mrf.mxu0
    %v2420 = vadd.f32 %v2306, %v2419
    %v2421 = vpop.f32.mrf.mxu0
    %2422 = vmatprep.mubr.f32.mxu0 0.0
    %2423 = vmatmul.mubr.f32.gmra.mxu0 %v2257
    %v2424 = vpop.f32.mrf.mxu0
    %v2425 = vadd.f32 %v2306, %v2424
    %v2426 = vpop.f32.mrf.mxu0
    %2427 = vmatprep.mubr.f32.mxu0 0.0
    %2428 = vmatmul.mubr.f32.gmra.mxu0 %v2262
    %v2429 = vpop.f32.mrf.mxu0
    %v2430 = vadd.f32 %v2306, %v2429
    %v2431 = vpop.f32.mrf.mxu0
    %2432 = vmatprep.mubr.f32.mxu0 0.0
    %2433 = vmatmul.mubr.f32.gmra.mxu0 %v2267
    %v2434 = vpop.f32.mrf.mxu0
    %v2435 = vadd.f32 %v2306, %v2434
    %v2436 = vpop.f32.mrf.mxu0
    %2437 = vmatprep.mubr.f32.mxu0 0.0
    %2438 = vmatmul.mubr.f32.gmra.mxu0 %v2272
    %v2439 = vpop.f32.mrf.mxu0
    %v2440 = vadd.f32 %v2306, %v2439
    %v2441 = vpop.f32.mrf.mxu0
    %2442 = vmatprep.mubr.f32.mxu0 0.0
    %2443 = vmatmul.mubr.f32.gmra.mxu0 %v2277
    %v2444 = vpop.f32.mrf.mxu0
    %v2445 = vadd.f32 %v2306, %v2444
    %v2446 = vpop.f32.mrf.mxu0
    %2447 = vmatprep.mubr.f32.mxu0 0.0
    %2448 = vmatmul.mubr.f32.gmra.mxu0 %v2282
    %v2449 = vpop.f32.mrf.mxu0
    %v2450 = vadd.f32 %v2306, %v2449
    %v2451 = vpop.f32.mrf.mxu0
    %2452 = vdwg.mxu0
    %vm2453 = vcmp.gt.f32.partialorder %v2375, 0.0
    %vm2454 = vcmp.gt.f32.partialorder %v2380, 0.0
    %vm2455 = vcmp.gt.f32.partialorder %v2385, 0.0
    %vm2456 = vcmp.gt.f32.partialorder %v2390, 0.0
    %vm2457 = vcmp.gt.f32.partialorder %v2395, 0.0
    %vm2458 = vcmp.gt.f32.partialorder %v2400, 0.0
    %vm2459 = vcmp.gt.f32.partialorder %v2405, 0.0
    %vm2460 = vcmp.gt.f32.partialorder %v2410, 0.0
    %vm2461 = vcmp.gt.f32.partialorder %v2415, 0.0
    %vm2462 = vcmp.gt.f32.partialorder %v2420, 0.0
    %vm2463 = vcmp.gt.f32.partialorder %v2425, 0.0
    %vm2464 = vcmp.gt.f32.partialorder %v2430, 0.0
    %vm2465 = vcmp.gt.f32.partialorder %v2435, 0.0
    %vm2466 = vcmp.gt.f32.partialorder %v2440, 0.0
    %vm2467 = vcmp.gt.f32.partialorder %v2445, 0.0
    %vm2468 = vcmp.gt.f32.partialorder %v2450, 0.0
    %v2469 = vmin.f32 %v2375, 0.0
    %v2470 = vmin.f32 %v2380, 0.0
    %v2471 = vmin.f32 %v2385, 0.0
    %v2472 = vmin.f32 %v2390, 0.0
    %v2473 = vmin.f32 %v2395, 0.0
    %v2474 = vmin.f32 %v2400, 0.0
    %v2475 = vmin.f32 %v2405, 0.0
    %v2476 = vmin.f32 %v2410, 0.0
    %v2477 = vmin.f32 %v2415, 0.0
    %v2478 = vmin.f32 %v2420, 0.0
    %v2479 = vmin.f32 %v2425, 0.0
    %v2480 = vmin.f32 %v2430, 0.0
    %v2481 = vmin.f32 %v2435, 0.0
    %v2482 = vmin.f32 %v2440, 0.0
    %v2483 = vmin.f32 %v2445, 0.0
    %v2484 = vmin.f32 %v2450, 0.0
    %v2485 = vmul.f32 %v2469, 1.442695
    %v2486 = vpow.pop %v2485
    %v2487 = vmul.f32 %v2470, 1.442695
    %v2488 = vpow.pop %v2487
    %v2489 = vmul.f32 %v2471, 1.442695
    %v2490 = vpow.pop %v2489
    %v2491 = vmul.f32 %v2472, 1.442695
    %v2492 = vpow.pop %v2491
    %v2493 = vmul.f32 %v2473, 1.442695
    %v2494 = vpow.pop %v2493
    %v2495 = vmul.f32 %v2474, 1.442695
    %v2496 = vpow.pop %v2495
    %v2497 = vmul.f32 %v2475, 1.442695
    %v2498 = vpow.pop %v2497
    %v2499 = vmul.f32 %v2476, 1.442695
    %v2500 = vpow.pop %v2499
    %v2501 = vmul.f32 %v2477, 1.442695
    %v2502 = vpow.pop %v2501
    %v2503 = vmul.f32 %v2478, 1.442695
    %v2504 = vpow.pop %v2503
    %v2505 = vmul.f32 %v2479, 1.442695
    %v2506 = vpow.pop %v2505
    %v2507 = vmul.f32 %v2480, 1.442695
    %v2508 = vpow.pop %v2507
    %v2509 = vmul.f32 %v2481, 1.442695
    %v2510 = vpow.pop %v2509
    %v2511 = vmul.f32 %v2482, 1.442695
    %v2512 = vpow.pop %v2511
    %v2513 = vmul.f32 %v2483, 1.442695
    %v2514 = vpow.pop %v2513
    %v2515 = vmul.f32 %v2484, 1.442695
    %v2516 = vpow.pop %v2515
    %v2517 = vsub.f32 %v2486, 1.0
    %v2518 = vsub.f32 %v2488, 1.0
    %v2519 = vsub.f32 %v2490, 1.0
    %v2520 = vsub.f32 %v2492, 1.0
    %v2521 = vsub.f32 %v2494, 1.0
    %v2522 = vsub.f32 %v2496, 1.0
    %v2523 = vsub.f32 %v2498, 1.0
    %v2524 = vsub.f32 %v2500, 1.0
    %v2525 = vsub.f32 %v2502, 1.0
    %v2526 = vsub.f32 %v2504, 1.0
    %v2527 = vsub.f32 %v2506, 1.0
    %v2528 = vsub.f32 %v2508, 1.0
    %v2529 = vsub.f32 %v2510, 1.0
    %v2530 = vsub.f32 %v2512, 1.0
    %v2531 = vsub.f32 %v2514, 1.0
    %v2532 = vsub.f32 %v2516, 1.0
    %v2533 = vsel %vm2453, %v2375, %v2517
    %v2534 = vsel %vm2454, %v2380, %v2518
    %v2535 = vsel %vm2455, %v2385, %v2519
    %v2536 = vsel %vm2456, %v2390, %v2520
    %v2537 = vsel %vm2457, %v2395, %v2521
    %v2538 = vsel %vm2458, %v2400, %v2522
    %v2539 = vsel %vm2459, %v2405, %v2523
    %v2540 = vsel %vm2460, %v2410, %v2524
    %v2541 = vsel %vm2461, %v2415, %v2525
    %v2542 = vsel %vm2462, %v2420, %v2526
    %v2543 = vsel %vm2463, %v2425, %v2527
    %v2544 = vsel %vm2464, %v2430, %v2528
    %v2545 = vsel %vm2465, %v2435, %v2529
    %v2546 = vsel %vm2466, %v2440, %v2530
    %v2547 = vsel %vm2467, %v2445, %v2531
    %v2548 = vsel %vm2468, %v2450, %v2532
    %v2549 = vld [vmem:[%s7] sm:$0xff]
    %v2550 = vld [vmem:[%s7 + $0x8] sm:$0xff]
    %v2551 = vld [vmem:[%s7 + $0x10] sm:$0xff]
    %v2552 = vld [vmem:[%s7 + $0x18] sm:$0xff]
    %v2553 = vld [vmem:[%s7 + $0x20] sm:$0xff]
    %v2554 = vld [vmem:[%s7 + $0x28] sm:$0xff]
    %v2555 = vld [vmem:[%s7 + $0x30] sm:$0xff]
    %v2556 = vld [vmem:[%s7 + $0x38] sm:$0xff]
    %v2557 = vld [vmem:[%s7 + $0x40] sm:$0xff]
    %v2558 = vld [vmem:[%s7 + $0x48] sm:$0xff]
    %v2559 = vld [vmem:[%s7 + $0x50] sm:$0xff]
    %v2560 = vld [vmem:[%s7 + $0x58] sm:$0xff]
    %v2561 = vld [vmem:[%s7 + $0x60] sm:$0xff]
    %v2562 = vld [vmem:[%s7 + $0x68] sm:$0xff]
    %v2563 = vld [vmem:[%s7 + $0x70] sm:$0xff]
    %v2564 = vld [vmem:[%s7 + $0x78] sm:$0xff]
    %v2565 = vld [vmem:[%s8] sm:$0x1]
    %v2567 = vlaneseq
    %v2568 = vshrl.u32 %v2567, 7
    %v2569 = vsub.s32 0, %v2568
    %v2570 = vrot.slane %v2565, %v2569
    %2572 = vmatprep.subr.mxu0 0.0
    %2573 = vmatpush1.msra.mxu0 %v2564
    %2574 = vmatprep.subr.mxu0 0.0
    %2575 = vmatpush1.msra.mxu0 %v2563
    %2576 = vmatprep.subr.mxu0 0.0
    %2577 = vmatpush1.msra.mxu0 %v2562
    %2578 = vmatprep.subr.mxu0 0.0
    %2579 = vmatpush1.msra.mxu0 %v2561
    %2580 = vmatprep.subr.mxu0 0.0
    %2581 = vmatpush1.msra.mxu0 %v2560
    %2582 = vmatprep.subr.mxu0 0.0
    %2583 = vmatpush1.msra.mxu0 %v2559
    %2584 = vmatprep.subr.mxu0 0.0
    %2585 = vmatpush1.msra.mxu0 %v2558
    %2586 = vmatprep.subr.mxu0 0.0
    %2587 = vmatpush1.msra.mxu0 %v2557
    %2588 = vmatprep.subr.mxu0 0.0
    %2589 = vmatpush1.msra.mxu0 %v2556
    %2590 = vmatprep.subr.mxu0 0.0
    %2591 = vmatpush1.msra.mxu0 %v2555
    %2592 = vmatprep.subr.mxu0 0.0
    %2593 = vmatpush1.msra.mxu0 %v2554
    %2594 = vmatprep.subr.mxu0 0.0
    %2595 = vmatpush1.msra.mxu0 %v2553
    %2596 = vmatprep.subr.mxu0 0.0
    %2597 = vmatpush1.msra.mxu0 %v2552
    %2598 = vmatprep.subr.mxu0 0.0
    %2599 = vmatpush1.msra.mxu0 %v2551
    %2600 = vmatprep.subr.mxu0 0.0
    %2601 = vmatpush1.msra.mxu0 %v2550
    %2602 = vmatprep.subr.mxu0 0.0
    %2603 = vmatpush1.msra.mxu0 %v2549
    %2604 = vmatprep.subr.mxu0 0.0
    %2605 = vmatpush2.msra.mxu0 0.0
    %2606 = vmatprep.subr.mxu0 0.0
    %2607 = vmatpush2.msra.mxu0 0.0
    %2608 = vmatprep.subr.mxu0 0.0
    %2609 = vmatpush2.msra.mxu0 0.0
    %2610 = vmatprep.subr.mxu0 0.0
    %2611 = vmatpush2.msra.mxu0 0.0
    %2612 = vmatprep.subr.mxu0 0.0
    %2613 = vmatpush2.msra.mxu0 0.0
    %2614 = vmatprep.subr.mxu0 0.0
    %2615 = vmatpush2.msra.mxu0 0.0
    %2616 = vmatprep.subr.mxu0 0.0
    %2617 = vmatpush2.msra.mxu0 0.0
    %2618 = vmatprep.subr.mxu0 0.0
    %2619 = vmatpush2.msra.mxu0 0.0
    %2620 = vmatprep.subr.mxu0 0.0
    %2621 = vmatpush2.msra.mxu0 0.0
    %2622 = vmatprep.subr.mxu0 0.0
    %2623 = vmatpush2.msra.mxu0 0.0
    %2624 = vmatprep.subr.mxu0 0.0
    %2625 = vmatpush2.msra.mxu0 0.0
    %2626 = vmatprep.subr.mxu0 0.0
    %2627 = vmatpush2.msra.mxu0 0.0
    %2628 = vmatprep.subr.mxu0 0.0
    %2629 = vmatpush2.msra.mxu0 0.0
    %2630 = vmatprep.subr.mxu0 0.0
    %2631 = vmatpush2.msra.mxu0 0.0
    %2632 = vmatprep.subr.mxu0 0.0
    %2633 = vmatpush2.msra.mxu0 0.0
    %2634 = vmatprep.subr.mxu0 0.0
    %2635 = vmatpush2.msra.mxu0 0.0
    %2636 = vmatprep.mubr.f32.mxu0 0.0
    %2637 = vmatmul.mubr.f32.gmra.mxu0 %v2533
    %v2638 = vpop.f32.mrf.mxu0
    %v2639 = vadd.f32 %v2570, %v2638
    %v2640 = vpop.f32.mrf.mxu0
    %2641 = vmatprep.mubr.f32.mxu0 0.0
    %2642 = vmatmul.mubr.f32.gmra.mxu0 %v2534
    %v2643 = vpop.f32.mrf.mxu0
    %v2644 = vadd.f32 %v2570, %v2643
    %v2645 = vpop.f32.mrf.mxu0
    %2646 = vmatprep.mubr.f32.mxu0 0.0
    %2647 = vmatmul.mubr.f32.gmra.mxu0 %v2535
    %v2648 = vpop.f32.mrf.mxu0
    %v2649 = vadd.f32 %v2570, %v2648
    %v2650 = vpop.f32.mrf.mxu0
    %2651 = vmatprep.mubr.f32.mxu0 0.0
    %2652 = vmatmul.mubr.f32.gmra.mxu0 %v2536
    %v2653 = vpop.f32.mrf.mxu0
    %v2654 = vadd.f32 %v2570, %v2653
    %v2655 = vpop.f32.mrf.mxu0
    %2656 = vmatprep.mubr.f32.mxu0 0.0
    %2657 = vmatmul.mubr.f32.gmra.mxu0 %v2537
    %v2658 = vpop.f32.mrf.mxu0
    %v2659 = vadd.f32 %v2570, %v2658
    %v2660 = vpop.f32.mrf.mxu0
    %2661 = vmatprep.mubr.f32.mxu0 0.0
    %2662 = vmatmul.mubr.f32.gmra.mxu0 %v2538
    %v2663 = vpop.f32.mrf.mxu0
    %v2664 = vadd.f32 %v2570, %v2663
    %v2665 = vpop.f32.mrf.mxu0
    %2666 = vmatprep.mubr.f32.mxu0 0.0
    %2667 = vmatmul.mubr.f32.gmra.mxu0 %v2539
    %v2668 = vpop.f32.mrf.mxu0
    %v2669 = vadd.f32 %v2570, %v2668
    %v2670 = vpop.f32.mrf.mxu0
    %2671 = vmatprep.mubr.f32.mxu0 0.0
    %2672 = vmatmul.mubr.f32.gmra.mxu0 %v2540
    %v2673 = vpop.f32.mrf.mxu0
    %v2674 = vadd.f32 %v2570, %v2673
    %v2675 = vpop.f32.mrf.mxu0
    %2676 = vmatprep.mubr.f32.mxu0 0.0
    %2677 = vmatmul.mubr.f32.gmra.mxu0 %v2541
    %v2678 = vpop.f32.mrf.mxu0
    %v2679 = vadd.f32 %v2570, %v2678
    %v2680 = vpop.f32.mrf.mxu0
    %2681 = vmatprep.mubr.f32.mxu0 0.0
    %2682 = vmatmul.mubr.f32.gmra.mxu0 %v2542
    %v2683 = vpop.f32.mrf.mxu0
    %v2684 = vadd.f32 %v2570, %v2683
    %v2685 = vpop.f32.mrf.mxu0
    %2686 = vmatprep.mubr.f32.mxu0 0.0
    %2687 = vmatmul.mubr.f32.gmra.mxu0 %v2543
    %v2688 = vpop.f32.mrf.mxu0
    %v2689 = vadd.f32 %v2570, %v2688
    %v2690 = vpop.f32.mrf.mxu0
    %2691 = vmatprep.mubr.f32.mxu0 0.0
    %2692 = vmatmul.mubr.f32.gmra.mxu0 %v2544
    %v2693 = vpop.f32.mrf.mxu0
    %v2694 = vadd.f32 %v2570, %v2693
    %v2695 = vpop.f32.mrf.mxu0
    %2696 = vmatprep.mubr.f32.mxu0 0.0
    %2697 = vmatmul.mubr.f32.gmra.mxu0 %v2545
    %v2698 = vpop.f32.mrf.mxu0
    %v2699 = vadd.f32 %v2570, %v2698
    %v2700 = vpop.f32.mrf.mxu0
    %2701 = vmatprep.mubr.f32.mxu0 0.0
    %2702 = vmatmul.mubr.f32.gmra.mxu0 %v2546
    %v2703 = vpop.f32.mrf.mxu0
    %v2704 = vadd.f32 %v2570, %v2703
    %v2705 = vpop.f32.mrf.mxu0
    %2706 = vmatprep.mubr.f32.mxu0 0.0
    %2707 = vmatmul.mubr.f32.gmra.mxu0 %v2547
    %v2708 = vpop.f32.mrf.mxu0
    %v2709 = vadd.f32 %v2570, %v2708
    %v2710 = vpop.f32.mrf.mxu0
    %2711 = vmatprep.mubr.f32.mxu0 0.0
    %2712 = vmatmul.mubr.f32.gmra.mxu0 %v2548
    %v2713 = vpop.f32.mrf.mxu0
    %v2714 = vadd.f32 %v2570, %v2713
    %v2715 = vpop.f32.mrf.mxu0
    %2716 = vdwg.mxu0
    %v2717 = vmul.f32 %v2639, %v2639
    %v2718 = vmul.f32 %v2644, %v2644
    %v2719 = vmul.f32 %v2649, %v2649
    %v2720 = vmul.f32 %v2654, %v2654
    %v2721 = vmul.f32 %v2659, %v2659
    %v2722 = vmul.f32 %v2664, %v2664
    %v2723 = vmul.f32 %v2669, %v2669
    %v2724 = vmul.f32 %v2674, %v2674
    %v2725 = vmul.f32 %v2679, %v2679
    %v2726 = vmul.f32 %v2684, %v2684
    %v2727 = vmul.f32 %v2689, %v2689
    %v2728 = vmul.f32 %v2694, %v2694
    %v2729 = vmul.f32 %v2699, %v2699
    %v2730 = vmul.f32 %v2704, %v2704
    %v2731 = vmul.f32 %v2709, %v2709
    %v2732 = vmul.f32 %v2714, %v2714
    %2733 = vadd.xlane.f32.xlu0 %v2717
    %v2734 = vpop.xlane.xlu0 %2733
    %2735 = vadd.xlane.f32.xlu0 %v2718
    %v2736 = vpop.xlane.xlu0 %2735
    %2737 = vadd.xlane.f32.xlu0 %v2719
    %v2738 = vpop.xlane.xlu0 %2737
    %2739 = vadd.xlane.f32.xlu0 %v2720
    %v2740 = vpop.xlane.xlu0 %2739
    %2741 = vadd.xlane.f32.xlu0 %v2721
    %v2742 = vpop.xlane.xlu0 %2741
    %2743 = vadd.xlane.f32.xlu0 %v2722
    %v2744 = vpop.xlane.xlu0 %2743
    %2745 = vadd.xlane.f32.xlu0 %v2723
    %v2746 = vpop.xlane.xlu0 %2745
    %2747 = vadd.xlane.f32.xlu0 %v2724
    %v2748 = vpop.xlane.xlu0 %2747
    %2749 = vadd.xlane.f32.xlu0 %v2725
    %v2750 = vpop.xlane.xlu0 %2749
    %2751 = vadd.xlane.f32.xlu0 %v2726
    %v2752 = vpop.xlane.xlu0 %2751
    %2753 = vadd.xlane.f32.xlu0 %v2727
    %v2754 = vpop.xlane.xlu0 %2753
    %2755 = vadd.xlane.f32.xlu0 %v2728
    %v2756 = vpop.xlane.xlu0 %2755
    %2757 = vadd.xlane.f32.xlu0 %v2729
    %v2758 = vpop.xlane.xlu0 %2757
    %2759 = vadd.xlane.f32.xlu0 %v2730
    %v2760 = vpop.xlane.xlu0 %2759
    %2761 = vadd.xlane.f32.xlu0 %v2731
    %v2762 = vpop.xlane.xlu0 %2761
    %2763 = vadd.xlane.f32.xlu0 %v2732
    %v2764 = vpop.xlane.xlu0 %2763
    %v2765 = vadd.f32 %v2734, 1e-12
    %v2766 = vadd.f32 %v2736, 1e-12
    %v2767 = vadd.f32 %v2738, 1e-12
    %v2768 = vadd.f32 %v2740, 1e-12
    %v2769 = vadd.f32 %v2742, 1e-12
    %v2770 = vadd.f32 %v2744, 1e-12
    %v2771 = vadd.f32 %v2746, 1e-12
    %v2772 = vadd.f32 %v2748, 1e-12
    %v2773 = vadd.f32 %v2750, 1e-12
    %v2774 = vadd.f32 %v2752, 1e-12
    %v2775 = vadd.f32 %v2754, 1e-12
    %v2776 = vadd.f32 %v2756, 1e-12
    %v2777 = vadd.f32 %v2758, 1e-12
    %v2778 = vadd.f32 %v2760, 1e-12
    %v2779 = vadd.f32 %v2762, 1e-12
    %v2780 = vadd.f32 %v2764, 1e-12
    %v2781 = vrsqrt.pop %v2765
    %v2782 = vrsqrt.pop %v2766
    %v2783 = vrsqrt.pop %v2767
    %v2784 = vrsqrt.pop %v2768
    %v2785 = vrsqrt.pop %v2769
    %v2786 = vrsqrt.pop %v2770
    %v2787 = vrsqrt.pop %v2771
    %v2788 = vrsqrt.pop %v2772
    %v2789 = vrsqrt.pop %v2773
    %v2790 = vrsqrt.pop %v2774
    %v2791 = vrsqrt.pop %v2775
    %v2792 = vrsqrt.pop %v2776
    %v2793 = vrsqrt.pop %v2777
    %v2794 = vrsqrt.pop %v2778
    %v2795 = vrsqrt.pop %v2779
    %v2796 = vrsqrt.pop %v2780
    %v2797 = vmul.f32 %v2781, 1.4142135
    %v2798 = vmul.f32 %v2782, 1.4142135
    %v2799 = vmul.f32 %v2783, 1.4142135
    %v2800 = vmul.f32 %v2784, 1.4142135
    %v2801 = vmul.f32 %v2785, 1.4142135
    %v2802 = vmul.f32 %v2786, 1.4142135
    %v2803 = vmul.f32 %v2787, 1.4142135
    %v2804 = vmul.f32 %v2788, 1.4142135
    %v2805 = vmul.f32 %v2789, 1.4142135
    %v2806 = vmul.f32 %v2790, 1.4142135
    %v2807 = vmul.f32 %v2791, 1.4142135
    %v2808 = vmul.f32 %v2792, 1.4142135
    %v2809 = vmul.f32 %v2793, 1.4142135
    %v2810 = vmul.f32 %v2794, 1.4142135
    %v2811 = vmul.f32 %v2795, 1.4142135
    %v2812 = vmul.f32 %v2796, 1.4142135
    %v2813 = vmul.f32 %v2639, %v2797
    %v2814 = vmul.f32 %v2644, %v2798
    %v2815 = vmul.f32 %v2649, %v2799
    %v2816 = vmul.f32 %v2654, %v2800
    %v2817 = vmul.f32 %v2659, %v2801
    %v2818 = vmul.f32 %v2664, %v2802
    %v2819 = vmul.f32 %v2669, %v2803
    %v2820 = vmul.f32 %v2674, %v2804
    %v2821 = vmul.f32 %v2679, %v2805
    %v2822 = vmul.f32 %v2684, %v2806
    %v2823 = vmul.f32 %v2689, %v2807
    %v2824 = vmul.f32 %v2694, %v2808
    %v2825 = vmul.f32 %v2699, %v2809
    %v2826 = vmul.f32 %v2704, %v2810
    %v2827 = vmul.f32 %v2709, %v2811
    %v2828 = vmul.f32 %v2714, %v2812
    %v2829 = vpack.c.bf16 %v2814, %v2813
    %v2830 = vpack.c.bf16 %v2816, %v2815
    %v2831 = vpack.c.bf16 %v2818, %v2817
    %v2832 = vpack.c.bf16 %v2820, %v2819
    %v2833 = vpack.c.bf16 %v2822, %v2821
    %v2834 = vpack.c.bf16 %v2824, %v2823
    %v2835 = vpack.c.bf16 %v2826, %v2825
    %v2836 = vpack.c.bf16 %v2828, %v2827
    %v2845 = vunpack.c.l.b16 %v2829
    %v2846 = vunpack.c.h.b16 %v2829
    %v2847 = vunpack.c.l.b16 %v2830
    %v2848 = vunpack.c.h.b16 %v2830
    %v2849 = vunpack.c.l.b16 %v2831
    %v2850 = vunpack.c.h.b16 %v2831
    %v2851 = vunpack.c.l.b16 %v2832
    %v2852 = vunpack.c.h.b16 %v2832
    %v2853 = vunpack.c.l.b16 %v2833
    %v2854 = vunpack.c.h.b16 %v2833
    %v2855 = vunpack.c.l.b16 %v2834
    %v2856 = vunpack.c.h.b16 %v2834
    %v2857 = vunpack.c.l.b16 %v2835
    %v2858 = vunpack.c.h.b16 %v2835
    %v2859 = vunpack.c.l.b16 %v2836
    %v2860 = vunpack.c.h.b16 %v2836
    %v2861 = vpack.c.b16 %v2845, %v2845
    %v2862 = vpack.c.b16 %v2846, %v2846
    %v2863 = vpack.c.b16 %v2847, %v2847
    %v2864 = vpack.c.b16 %v2848, %v2848
    %v2865 = vpack.c.b16 %v2849, %v2849
    %v2866 = vpack.c.b16 %v2850, %v2850
    %v2867 = vpack.c.b16 %v2851, %v2851
    %v2868 = vpack.c.b16 %v2852, %v2852
    %v2869 = vpack.c.b16 %v2853, %v2853
    %v2870 = vpack.c.b16 %v2854, %v2854
    %v2871 = vpack.c.b16 %v2855, %v2855
    %v2872 = vpack.c.b16 %v2856, %v2856
    %v2873 = vpack.c.b16 %v2857, %v2857
    %v2874 = vpack.c.b16 %v2858, %v2858
    %v2875 = vpack.c.b16 %v2859, %v2859
    %v2876 = vpack.c.b16 %v2860, %v2860
    %2893 = vst [vmem:[%s9] sm:$0xf] %v2861
    %2894 = vst [vmem:[%s9 + $0x4] sm:$0xf] %v2862
    %2895 = vst [vmem:[%s9 + $0x8] sm:$0xf] %v2863
    %2896 = vst [vmem:[%s9 + $0xc] sm:$0xf] %v2864
    %2897 = vst [vmem:[%s9 + $0x10] sm:$0xf] %v2865
    %2898 = vst [vmem:[%s9 + $0x14] sm:$0xf] %v2866
    %2899 = vst [vmem:[%s9 + $0x18] sm:$0xf] %v2867
    %2900 = vst [vmem:[%s9 + $0x1c] sm:$0xf] %v2868
    %2901 = vst [vmem:[%s9 + $0x20] sm:$0xf] %v2869
    %2902 = vst [vmem:[%s9 + $0x24] sm:$0xf] %v2870
    %2903 = vst [vmem:[%s9 + $0x28] sm:$0xf] %v2871
    %2904 = vst [vmem:[%s9 + $0x2c] sm:$0xf] %v2872
    %2905 = vst [vmem:[%s9 + $0x30] sm:$0xf] %v2873
    %2906 = vst [vmem:[%s9 + $0x34] sm:$0xf] %v2874
    %2907 = vst [vmem:[%s9 + $0x38] sm:$0xf] %v2875
    %2908 = vst [vmem:[%s9 + $0x3c] sm:$0xf] %v2876
  $region49: #{_lambda_.2} parent=0 // pred_fallthru
    _
  // Predicated region
  $region50: #{_lambda_.2} parent=0 // pred_check
    _
  $region51: #{_lambda_.2} parent=0 // pred_check_branch
    %2910 = sbr.rel (0) target = $region53
  $region52: #{_lambda_.2} parent=0 // pred_region
    _
  $region53: #{_lambda_.2} parent=0 // pred_fallthru
    _
  // Predicated region
  $region54: #{_lambda_.2} parent=0 // pred_check
    _
  $region55: #{_lambda_.2} parent=0 // pred_check_branch
    %2912 = sbr.rel (0) target = $region57
  $region56: #{_lambda_.2} parent=0 // pred_region
    _
  $region57: #{_lambda_.2} parent=0 // pred_fallthru
    _

</llo_original>
